<compile_context>
chip_gen: v6e
topology: v6e:2x2x1
jax: 0.10.0
libtpu: 0.0.40
codegen_flags: <defaults>
</compile_context>

<pallas_src>
import functools

import jax
import jax.numpy as jnp
from jax.experimental import pallas as pl
from jax.experimental.pallas import tpu as pltpu

LANE = 128
OUT_CLASSES = 10


def _round_up(x, m):
    return (x + m - 1) // m * m


def _pick_chunk(m_rows, cap=128):
    """Largest divisor of m_rows that is <= cap (chunk size for pooled accumulation)."""
    c = min(cap, m_rows)
    while m_rows % c:
        c -= 1
    return c


def net_kernel(xflat_ref, mask_ref, wconv_ref, bconv_ref, wcls_ref, out_ref, *,
               chunk_rows, num_chunks, wp, ksize, f_p):
    """Fused conv3x3(pad=1) + bias + ReLU + global-avg-pool + linear for one image.

    xflat_ref: (1, PADLEN, C)  compute dtype, NHWC-flat spatially-padded image
    mask_ref:  (M_ROWS, 1)     f32, 1.0 on real output pixels, 0.0 on W-pad rows
    wconv_ref: (K*K, C, F_P)   compute dtype, one (C, F_P) matrix per conv tap
    bconv_ref: (1, F_P)        f32, conv bias + constant 1.0 at column F
    wcls_ref:  (F_P, OUT_P)    f32, classifier weight with 1/HW and b_cls folded in
    out_ref:   (1, 1, OUT_P)   f32 logits (columns >= 10 are zero padding)
    """
    # Hoist the 9 weight taps and the bias broadcast out of the chunk loop.
    wtaps = [wconv_ref[t] for t in range(ksize * ksize)]
    bias_b = jnp.broadcast_to(bconv_ref[...], (chunk_rows, f_p))       # f32

    pooled = jnp.zeros((1, f_p), dtype=jnp.float32)
    for c in range(num_chunks):                 # static, short -> unrolled
        r0 = c * chunk_rows
        acc = bias_b                            # conv bias (+ constant-1 col F)
        for t in range(ksize * ksize):
            dy, dx = t // ksize, t % ksize
            off = r0 + dy * wp + dx             # contiguous tap window (flat layout)
            slab = xflat_ref[0, off:off + chunk_rows, :]               # (chunk, C)
            acc = acc + jnp.dot(slab, wtaps[t],
                                preferred_element_type=jnp.float32)    # f32 accum
        acc = jnp.maximum(acc, 0.0)                                    # ReLU
        acc = acc * mask_ref[r0:r0 + chunk_rows, :]                    # drop W-pad rows
        pooled = pooled + jnp.sum(acc, axis=0, keepdims=True)          # (1, F_P)

    # Classifier: 1/HW pool scale and b_cls are folded into wcls (row F holds
    # b_cls/HW; the constant-1 conv channel makes pooled[F] == HW exactly).
    logits = jnp.dot(pooled, wcls_ref[...], preferred_element_type=jnp.float32)
    out_ref[0] = logits                                                # (1, OUT_P)


def net_forward(x, w_conv, b_conv, w_cls, b_cls, k=3, pad=1,
                compute_dtype=jnp.bfloat16):
    """x: (N, C, H, W) float32; returns logits (N, 10) float32."""
    N, C, H, W = x.shape
    F = w_conv.shape[0]
    Hp, Wp = H + 2 * pad, W + 2 * pad
    HW = H * W
    KK = k * k
    M_ROWS = H * Wp                         # conv-output rows incl. the W-pad columns
    CH = _pick_chunk(M_ROWS)
    max_off = (k - 1) * Wp + (k - 1)
    PADLEN = _round_up(M_ROWS + max_off, 8)
    F_P = _round_up(F + 1, LANE)            # +1 feature column carries the b_cls fold
    OUT_P = _round_up(OUT_CLASSES, LANE)

    # NHWC, spatially zero-padded, flattened over (h, w); zero tail rows make every
    # shifted tap window a contiguous, in-bounds slice.
    x_nhwc = jnp.transpose(x, (0, 2, 3, 1))
    x_sp = jnp.pad(x_nhwc, ((0, 0), (pad, pad), (pad, pad), (0, 0)))
    x_flat = x_sp.reshape(N, Hp * Wp, C)
    x_flat = jnp.pad(x_flat, ((0, 0), (0, PADLEN - Hp * Wp), (0, 0)))
    x_flat = x_flat.astype(compute_dtype)

    # Rows whose padded column index >= W are artifacts of the flat layout.
    mask = (jnp.arange(M_ROWS) % Wp < W).astype(jnp.float32).reshape(M_ROWS, 1)

    # 9 conv taps as (C, F_P) matrices, (dy, dx) major; zero feature padding.
    w_taps = jnp.transpose(w_conv, (2, 3, 1, 0)).reshape(KK, C, F)
    w_taps = jnp.pad(w_taps, ((0, 0), (0, 0), (0, F_P - F))).astype(compute_dtype)

    # Conv bias + constant 1.0 at column F (the b_cls carrier channel).
    b_ext = jnp.zeros((1, F_P), jnp.float32)
    b_ext = b_ext.at[0, :F].set(b_conv.astype(jnp.float32))
    b_ext = b_ext.at[0, F].set(1.0)

    # Classifier weight with 1/HW folded in; row F holds b_cls/HW (exact: HW = 2^n).
    w_cls_ext = jnp.zeros((F_P, OUT_P), jnp.float32)
    w_cls_ext = w_cls_ext.at[:F, :OUT_CLASSES].set(w_cls.T.astype(jnp.float32) / HW)
    w_cls_ext = w_cls_ext.at[F, :OUT_CLASSES].set(b_cls.astype(jnp.float32) / HW)

    kernel = functools.partial(net_kernel, chunk_rows=CH, num_chunks=M_ROWS // CH,
                               wp=Wp, ksize=k, f_p=F_P)

    out = pl.pallas_call(
        kernel,
        out_shape=jax.ShapeDtypeStruct((N, 1, OUT_P), jnp.float32),
        grid_spec=pltpu.PrefetchScalarGridSpec(
            num_scalar_prefetch=0,
            # One image per grid step; "parallel" lets v7x shard the batch across
            # both TensorCores.  Weights / mask use constant index maps, so they
            # are DMA'd once and reused across steps.
            grid=(N,),
            in_specs=[
                pl.BlockSpec((1, PADLEN, C), lambda n: (n, 0, 0)),
                pl.BlockSpec((M_ROWS, 1), lambda n: (0, 0)),
                pl.BlockSpec((KK, C, F_P), lambda n: (0, 0, 0)),
                pl.BlockSpec((1, F_P), lambda n: (0, 0)),
                pl.BlockSpec((F_P, OUT_P), lambda n: (0, 0)),
            ],
            out_specs=pl.BlockSpec((1, 1, OUT_P), lambda n: (n, 0, 0)),
        ),
        compiler_params=pltpu.CompilerParams(
            dimension_semantics=("parallel",)),
    )(x_flat, mask, w_taps, b_ext, w_cls_ext)

    return out[:, 0, :OUT_CLASSES]


# ----------------------------------------------------------------------------
# Pure-JAX reference (same math / same operand dtypes), for verification only.
# ----------------------------------------------------------------------------
def im2col_nchw(x, k=3, pad=1):
    """x: (N, C, H, W) -> patches (N, H*W, C*k*k), patch layout (C, ky, kx)."""
    N, C, H, W = x.shape
    xp = jnp.pad(x, ((0, 0), (0, 0), (pad, pad), (pad, pad)))
    slabs = []
    for dy in range(k):
        for dx in range(k):
            slabs.append(xp[:, :, dy:dy + H, dx:dx + W])          # (N, C, H, W)
    p = jnp.stack(slabs, axis=2)                                  # (N, C, k*k, H, W)
    p = p.transpose(0, 3, 4, 1, 2)                                # (N, H, W, C, k*k)
    return p.reshape(N, H * W, C * k * k)


def reference_forward(x, w_conv, b_conv, w_cls, b_cls, k=3, pad=1,
                      compute_dtype=jnp.float32):
    N, C, H, W = x.shape
    F = w_conv.shape[0]
    HW = H * W
    patches = im2col_nchw(x, k=k, pad=pad).reshape(N * HW, -1).astype(compute_dtype)
    w_flat = w_conv.reshape(F, -1).T.astype(compute_dtype)
    conv = jnp.dot(patches, w_flat, preferred_element_type=jnp.float32)
    conv = jnp.maximum(conv + b_conv[None, :], 0.0)
    pooled = conv.reshape(N, HW, F).mean(axis=1)
    return pooled @ w_cls.T + b_cls


if __name__ == "__main__":
    key = jax.random.PRNGKey(0)
    kx, kw, kb, kcw, kcb = jax.random.split(key, 5)

    # Small shapes consistent with the forward: batch=2, channels=4, spatial=16.
    N, C, H, W = 2, 4, 16, 16
    F = 32            # feature width out of the backbone (classifier in_features)
    K, PAD = 3, 1

    x = jax.random.normal(kx, (N, C, H, W), dtype=jnp.float32)
    w_conv = jax.random.normal(kw, (F, C, K, K), dtype=jnp.float32) * 0.1
    b_conv = jax.random.normal(kb, (F,), dtype=jnp.float32) * 0.1
    w_cls = jax.random.normal(kcw, (10, F), dtype=jnp.float32) * 0.1
    b_cls = jax.random.normal(kcb, (10,), dtype=jnp.float32) * 0.1

    fwd_f32 = jax.jit(lambda *a: net_forward(*a, k=K, pad=PAD,
                                             compute_dtype=jnp.float32))
    fwd_bf16 = jax.jit(lambda *a: net_forward(*a, k=K, pad=PAD,
                                              compute_dtype=jnp.bfloat16))

    # f32 path: checked against the pure-JAX reference (same f32 operands).
    out = jax.block_until_ready(fwd_f32(x, w_conv, b_conv, w_cls, b_cls))
    ref = reference_forward(x, w_conv, b_conv, w_cls, b_cls, k=K, pad=PAD)
    assert out.shape == (N, 10), out.shape
    assert jnp.allclose(out, ref, atol=1e-3, rtol=1e-3), (out, ref)

    # bf16 operand path (recommended default on v5e/v6e/v7x): compared against a
    # reference that applies the same bf16 casts with f32 accumulation.
    out_bf = jax.block_until_ready(fwd_bf16(x, w_conv, b_conv, w_cls, b_cls))
    ref_bf = reference_forward(x, w_conv, b_conv, w_cls, b_cls, k=K, pad=PAD,
                               compute_dtype=jnp.bfloat16)
    assert out_bf.shape == (N, 10), out_bf.shape
    assert jnp.allclose(out_bf, ref_bf, atol=2e-2, rtol=2e-2), (out_bf, ref_bf)

    print("KERNEL_OK")
</pallas_src>

<mosaic_0001>
module attributes {stable_mosaic.version = 11 : i64} {
  func.func @net_kernel(%arg0: i32, %arg1: memref<1x328x4xf32, #tpu.memory_space<vmem>>, %arg2: memref<288x1xf32, #tpu.memory_space<vmem>>, %arg3: memref<9x4x128xf32, #tpu.memory_space<vmem>>, %arg4: memref<1x128xf32, #tpu.memory_space<vmem>>, %arg5: memref<128x128xf32, #tpu.memory_space<vmem>>, %arg6: memref<1x1x128xf32, #tpu.memory_space<vmem>>) attributes {dimension_semantics = [#tpu.dimension_semantics<parallel>], iteration_bounds = array<i64: 2>, scalar_prefetch = 0 : i64, scratch_operands = 0 : i64, tpu.core_type = #tpu.core_type<tc>, window_params = [{transform_indices = @transform_0, window_bounds = array<i64: 1, 328, 4>}, {pipeline_mode = #tpu.pipeline_mode<synchronous>, transform_indices = @transform_1, window_bounds = array<i64: 288, 1>}, {pipeline_mode = #tpu.pipeline_mode<synchronous>, transform_indices = @transform_2, window_bounds = array<i64: 9, 4, 128>}, {pipeline_mode = #tpu.pipeline_mode<synchronous>, transform_indices = @transform_3, window_bounds = array<i64: 1, 128>}, {pipeline_mode = #tpu.pipeline_mode<synchronous>, transform_indices = @transform_4, window_bounds = array<i64: 128, 128>}, {transform_indices = @transform_5, window_bounds = array<i64: 1, 1, 128>}]} {
    %c0 = arith.constant 0 : index
    %c0_0 = arith.constant 0 : index
    %c0_1 = arith.constant 0 : index
    %0 = vector.load %arg3[%c0, %c0_0, %c0_1] : memref<9x4x128xf32, #tpu.memory_space<vmem>>, vector<1x4x128xf32>
    %1 = vector.shape_cast %0 : vector<1x4x128xf32> to vector<4x128xf32>
    %c1 = arith.constant 1 : index
    %c0_2 = arith.constant 0 : index
    %c0_3 = arith.constant 0 : index
    %2 = vector.load %arg3[%c1, %c0_2, %c0_3] : memref<9x4x128xf32, #tpu.memory_space<vmem>>, vector<1x4x128xf32>
    %3 = vector.shape_cast %2 : vector<1x4x128xf32> to vector<4x128xf32>
    %c2 = arith.constant 2 : index
    %c0_4 = arith.constant 0 : index
    %c0_5 = arith.constant 0 : index
    %4 = vector.load %arg3[%c2, %c0_4, %c0_5] : memref<9x4x128xf32, #tpu.memory_space<vmem>>, vector<1x4x128xf32>
    %5 = vector.shape_cast %4 : vector<1x4x128xf32> to vector<4x128xf32>
    %c3 = arith.constant 3 : index
    %c0_6 = arith.constant 0 : index
    %c0_7 = arith.constant 0 : index
    %6 = vector.load %arg3[%c3, %c0_6, %c0_7] : memref<9x4x128xf32, #tpu.memory_space<vmem>>, vector<1x4x128xf32>
    %7 = vector.shape_cast %6 : vector<1x4x128xf32> to vector<4x128xf32>
    %c4 = arith.constant 4 : index
    %c0_8 = arith.constant 0 : index
    %c0_9 = arith.constant 0 : index
    %8 = vector.load %arg3[%c4, %c0_8, %c0_9] : memref<9x4x128xf32, #tpu.memory_space<vmem>>, vector<1x4x128xf32>
    %9 = vector.shape_cast %8 : vector<1x4x128xf32> to vector<4x128xf32>
    %c5 = arith.constant 5 : index
    %c0_10 = arith.constant 0 : index
    %c0_11 = arith.constant 0 : index
    %10 = vector.load %arg3[%c5, %c0_10, %c0_11] : memref<9x4x128xf32, #tpu.memory_space<vmem>>, vector<1x4x128xf32>
    %11 = vector.shape_cast %10 : vector<1x4x128xf32> to vector<4x128xf32>
    %c6 = arith.constant 6 : index
    %c0_12 = arith.constant 0 : index
    %c0_13 = arith.constant 0 : index
    %12 = vector.load %arg3[%c6, %c0_12, %c0_13] : memref<9x4x128xf32, #tpu.memory_space<vmem>>, vector<1x4x128xf32>
    %13 = vector.shape_cast %12 : vector<1x4x128xf32> to vector<4x128xf32>
    %c7 = arith.constant 7 : index
    %c0_14 = arith.constant 0 : index
    %c0_15 = arith.constant 0 : index
    %14 = vector.load %arg3[%c7, %c0_14, %c0_15] : memref<9x4x128xf32, #tpu.memory_space<vmem>>, vector<1x4x128xf32>
    %15 = vector.shape_cast %14 : vector<1x4x128xf32> to vector<4x128xf32>
    %c8 = arith.constant 8 : index
    %c0_16 = arith.constant 0 : index
    %c0_17 = arith.constant 0 : index
    %16 = vector.load %arg3[%c8, %c0_16, %c0_17] : memref<9x4x128xf32, #tpu.memory_space<vmem>>, vector<1x4x128xf32>
    %17 = vector.shape_cast %16 : vector<1x4x128xf32> to vector<4x128xf32>
    %c0_18 = arith.constant 0 : index
    %c0_19 = arith.constant 0 : index
    %18 = vector.load %arg4[%c0_18, %c0_19] : memref<1x128xf32, #tpu.memory_space<vmem>>, vector<1x128xf32>
    %19 = vector.shape_cast %18 : vector<1x128xf32> to vector<1x128xf32>
    %20 = vector.broadcast %19 : vector<1x128xf32> to vector<96x128xf32>
    %cst = arith.constant 0.000000e+00 : f32
    %21 = vector.broadcast %cst : f32 to vector<1x128xf32>
    %c0_20 = arith.constant 0 : index
    %c0_21 = arith.constant 0 : index
    %c0_22 = arith.constant 0 : index
    %22 = vector.load %arg1[%c0_20, %c0_21, %c0_22] : memref<1x328x4xf32, #tpu.memory_space<vmem>>, vector<1x96x4xf32>
    %23 = vector.shape_cast %22 : vector<1x96x4xf32> to vector<96x4xf32>
    %cst_23 = arith.constant dense<0.000000e+00> : vector<96x128xf32>
    %24 = tpu.matmul %23, %1, %cst_23 {dimension_numbers = #tpu.dot_dimension_numbers<[1], [0], [0], [1], [0, 0, 1, 1], [], []>} : vector<96x4xf32>, vector<4x128xf32>, vector<96x128xf32> -> vector<96x128xf32>
    %25 = arith.addf %20, %24 : vector<96x128xf32>
    %c0_24 = arith.constant 0 : index
    %c1_25 = arith.constant 1 : index
    %c0_26 = arith.constant 0 : index
    %26 = vector.load %arg1[%c0_24, %c1_25, %c0_26] : memref<1x328x4xf32, #tpu.memory_space<vmem>>, vector<1x96x4xf32>
    %27 = vector.shape_cast %26 : vector<1x96x4xf32> to vector<96x4xf32>
    %cst_27 = arith.constant dense<0.000000e+00> : vector<96x128xf32>
    %28 = tpu.matmul %27, %3, %cst_27 {dimension_numbers = #tpu.dot_dimension_numbers<[1], [0], [0], [1], [0, 0, 1, 1], [], []>} : vector<96x4xf32>, vector<4x128xf32>, vector<96x128xf32> -> vector<96x128xf32>
    %29 = arith.addf %25, %28 : vector<96x128xf32>
    %c0_28 = arith.constant 0 : index
    %c2_29 = arith.constant 2 : index
    %c0_30 = arith.constant 0 : index
    %30 = vector.load %arg1[%c0_28, %c2_29, %c0_30] : memref<1x328x4xf32, #tpu.memory_space<vmem>>, vector<1x96x4xf32>
    %31 = vector.shape_cast %30 : vector<1x96x4xf32> to vector<96x4xf32>
    %cst_31 = arith.constant dense<0.000000e+00> : vector<96x128xf32>
    %32 = tpu.matmul %31, %5, %cst_31 {dimension_numbers = #tpu.dot_dimension_numbers<[1], [0], [0], [1], [0, 0, 1, 1], [], []>} : vector<96x4xf32>, vector<4x128xf32>, vector<96x128xf32> -> vector<96x128xf32>
    %33 = arith.addf %29, %32 : vector<96x128xf32>
    %c0_32 = arith.constant 0 : index
    %c18 = arith.constant 18 : index
    %c0_33 = arith.constant 0 : index
    %34 = vector.load %arg1[%c0_32, %c18, %c0_33] : memref<1x328x4xf32, #tpu.memory_space<vmem>>, vector<1x96x4xf32>
    %35 = vector.shape_cast %34 : vector<1x96x4xf32> to vector<96x4xf32>
    %cst_34 = arith.constant dense<0.000000e+00> : vector<96x128xf32>
    %36 = tpu.matmul %35, %7, %cst_34 {dimension_numbers = #tpu.dot_dimension_numbers<[1], [0], [0], [1], [0, 0, 1, 1], [], []>} : vector<96x4xf32>, vector<4x128xf32>, vector<96x128xf32> -> vector<96x128xf32>
    %37 = arith.addf %33, %36 : vector<96x128xf32>
    %c0_35 = arith.constant 0 : index
    %c19 = arith.constant 19 : index
    %c0_36 = arith.constant 0 : index
    %38 = vector.load %arg1[%c0_35, %c19, %c0_36] : memref<1x328x4xf32, #tpu.memory_space<vmem>>, vector<1x96x4xf32>
    %39 = vector.shape_cast %38 : vector<1x96x4xf32> to vector<96x4xf32>
    %cst_37 = arith.constant dense<0.000000e+00> : vector<96x128xf32>
    %40 = tpu.matmul %39, %9, %cst_37 {dimension_numbers = #tpu.dot_dimension_numbers<[1], [0], [0], [1], [0, 0, 1, 1], [], []>} : vector<96x4xf32>, vector<4x128xf32>, vector<96x128xf32> -> vector<96x128xf32>
    %41 = arith.addf %37, %40 : vector<96x128xf32>
    %c0_38 = arith.constant 0 : index
    %c20 = arith.constant 20 : index
    %c0_39 = arith.constant 0 : index
    %42 = vector.load %arg1[%c0_38, %c20, %c0_39] : memref<1x328x4xf32, #tpu.memory_space<vmem>>, vector<1x96x4xf32>
    %43 = vector.shape_cast %42 : vector<1x96x4xf32> to vector<96x4xf32>
    %cst_40 = arith.constant dense<0.000000e+00> : vector<96x128xf32>
    %44 = tpu.matmul %43, %11, %cst_40 {dimension_numbers = #tpu.dot_dimension_numbers<[1], [0], [0], [1], [0, 0, 1, 1], [], []>} : vector<96x4xf32>, vector<4x128xf32>, vector<96x128xf32> -> vector<96x128xf32>
    %45 = arith.addf %41, %44 : vector<96x128xf32>
    %c0_41 = arith.constant 0 : index
    %c36 = arith.constant 36 : index
    %c0_42 = arith.constant 0 : index
    %46 = vector.load %arg1[%c0_41, %c36, %c0_42] : memref<1x328x4xf32, #tpu.memory_space<vmem>>, vector<1x96x4xf32>
    %47 = vector.shape_cast %46 : vector<1x96x4xf32> to vector<96x4xf32>
    %cst_43 = arith.constant dense<0.000000e+00> : vector<96x128xf32>
    %48 = tpu.matmul %47, %13, %cst_43 {dimension_numbers = #tpu.dot_dimension_numbers<[1], [0], [0], [1], [0, 0, 1, 1], [], []>} : vector<96x4xf32>, vector<4x128xf32>, vector<96x128xf32> -> vector<96x128xf32>
    %49 = arith.addf %45, %48 : vector<96x128xf32>
    %c0_44 = arith.constant 0 : index
    %c37 = arith.constant 37 : index
    %c0_45 = arith.constant 0 : index
    %50 = vector.load %arg1[%c0_44, %c37, %c0_45] : memref<1x328x4xf32, #tpu.memory_space<vmem>>, vector<1x96x4xf32>
    %51 = vector.shape_cast %50 : vector<1x96x4xf32> to vector<96x4xf32>
    %cst_46 = arith.constant dense<0.000000e+00> : vector<96x128xf32>
    %52 = tpu.matmul %51, %15, %cst_46 {dimension_numbers = #tpu.dot_dimension_numbers<[1], [0], [0], [1], [0, 0, 1, 1], [], []>} : vector<96x4xf32>, vector<4x128xf32>, vector<96x128xf32> -> vector<96x128xf32>
    %53 = arith.addf %49, %52 : vector<96x128xf32>
    %c0_47 = arith.constant 0 : index
    %c38 = arith.constant 38 : index
    %c0_48 = arith.constant 0 : index
    %54 = vector.load %arg1[%c0_47, %c38, %c0_48] : memref<1x328x4xf32, #tpu.memory_space<vmem>>, vector<1x96x4xf32>
    %55 = vector.shape_cast %54 : vector<1x96x4xf32> to vector<96x4xf32>
    %cst_49 = arith.constant dense<0.000000e+00> : vector<96x128xf32>
    %56 = tpu.matmul %55, %17, %cst_49 {dimension_numbers = #tpu.dot_dimension_numbers<[1], [0], [0], [1], [0, 0, 1, 1], [], []>} : vector<96x4xf32>, vector<4x128xf32>, vector<96x128xf32> -> vector<96x128xf32>
    %57 = arith.addf %53, %56 : vector<96x128xf32>
    %cst_50 = arith.constant 0.000000e+00 : f32
    %58 = vector.broadcast %cst_50 : f32 to vector<96x128xf32>
    %59 = arith.maximumf %57, %58 : vector<96x128xf32>
    %c0_51 = arith.constant 0 : index
    %c0_52 = arith.constant 0 : index
    %60 = vector.load %arg2[%c0_51, %c0_52] : memref<288x1xf32, #tpu.memory_space<vmem>>, vector<96x1xf32>
    %61 = vector.broadcast %60 : vector<96x1xf32> to vector<96x128xf32>
    %62 = arith.mulf %59, %61 : vector<96x128xf32>
    %cst_53 = arith.constant dense<0.000000e+00> : vector<128xf32>
    %63 = vector.multi_reduction <add>, %62, %cst_53 [0] : vector<96x128xf32> to vector<128xf32>
    %64 = vector.shape_cast %63 : vector<128xf32> to vector<1x128xf32>
    %65 = arith.addf %21, %64 : vector<1x128xf32>
    %c0_54 = arith.constant 0 : index
    %c96 = arith.constant 96 : index
    %c0_55 = arith.constant 0 : index
    %66 = vector.load %arg1[%c0_54, %c96, %c0_55] : memref<1x328x4xf32, #tpu.memory_space<vmem>>, vector<1x96x4xf32>
    %67 = vector.shape_cast %66 : vector<1x96x4xf32> to vector<96x4xf32>
    %cst_56 = arith.constant dense<0.000000e+00> : vector<96x128xf32>
    %68 = tpu.matmul %67, %1, %cst_56 {dimension_numbers = #tpu.dot_dimension_numbers<[1], [0], [0], [1], [0, 0, 1, 1], [], []>} : vector<96x4xf32>, vector<4x128xf32>, vector<96x128xf32> -> vector<96x128xf32>
    %69 = arith.addf %20, %68 : vector<96x128xf32>
    %c0_57 = arith.constant 0 : index
    %c97 = arith.constant 97 : index
    %c0_58 = arith.constant 0 : index
    %70 = vector.load %arg1[%c0_57, %c97, %c0_58] : memref<1x328x4xf32, #tpu.memory_space<vmem>>, vector<1x96x4xf32>
    %71 = vector.shape_cast %70 : vector<1x96x4xf32> to vector<96x4xf32>
    %cst_59 = arith.constant dense<0.000000e+00> : vector<96x128xf32>
    %72 = tpu.matmul %71, %3, %cst_59 {dimension_numbers = #tpu.dot_dimension_numbers<[1], [0], [0], [1], [0, 0, 1, 1], [], []>} : vector<96x4xf32>, vector<4x128xf32>, vector<96x128xf32> -> vector<96x128xf32>
    %73 = arith.addf %69, %72 : vector<96x128xf32>
    %c0_60 = arith.constant 0 : index
    %c98 = arith.constant 98 : index
    %c0_61 = arith.constant 0 : index
    %74 = vector.load %arg1[%c0_60, %c98, %c0_61] : memref<1x328x4xf32, #tpu.memory_space<vmem>>, vector<1x96x4xf32>
    %75 = vector.shape_cast %74 : vector<1x96x4xf32> to vector<96x4xf32>
    %cst_62 = arith.constant dense<0.000000e+00> : vector<96x128xf32>
    %76 = tpu.matmul %75, %5, %cst_62 {dimension_numbers = #tpu.dot_dimension_numbers<[1], [0], [0], [1], [0, 0, 1, 1], [], []>} : vector<96x4xf32>, vector<4x128xf32>, vector<96x128xf32> -> vector<96x128xf32>
    %77 = arith.addf %73, %76 : vector<96x128xf32>
    %c0_63 = arith.constant 0 : index
    %c114 = arith.constant 114 : index
    %c0_64 = arith.constant 0 : index
    %78 = vector.load %arg1[%c0_63, %c114, %c0_64] : memref<1x328x4xf32, #tpu.memory_space<vmem>>, vector<1x96x4xf32>
    %79 = vector.shape_cast %78 : vector<1x96x4xf32> to vector<96x4xf32>
    %cst_65 = arith.constant dense<0.000000e+00> : vector<96x128xf32>
    %80 = tpu.matmul %79, %7, %cst_65 {dimension_numbers = #tpu.dot_dimension_numbers<[1], [0], [0], [1], [0, 0, 1, 1], [], []>} : vector<96x4xf32>, vector<4x128xf32>, vector<96x128xf32> -> vector<96x128xf32>
    %81 = arith.addf %77, %80 : vector<96x128xf32>
    %c0_66 = arith.constant 0 : index
    %c115 = arith.constant 115 : index
    %c0_67 = arith.constant 0 : index
    %82 = vector.load %arg1[%c0_66, %c115, %c0_67] : memref<1x328x4xf32, #tpu.memory_space<vmem>>, vector<1x96x4xf32>
    %83 = vector.shape_cast %82 : vector<1x96x4xf32> to vector<96x4xf32>
    %cst_68 = arith.constant dense<0.000000e+00> : vector<96x128xf32>
    %84 = tpu.matmul %83, %9, %cst_68 {dimension_numbers = #tpu.dot_dimension_numbers<[1], [0], [0], [1], [0, 0, 1, 1], [], []>} : vector<96x4xf32>, vector<4x128xf32>, vector<96x128xf32> -> vector<96x128xf32>
    %85 = arith.addf %81, %84 : vector<96x128xf32>
    %c0_69 = arith.constant 0 : index
    %c116 = arith.constant 116 : index
    %c0_70 = arith.constant 0 : index
    %86 = vector.load %arg1[%c0_69, %c116, %c0_70] : memref<1x328x4xf32, #tpu.memory_space<vmem>>, vector<1x96x4xf32>
    %87 = vector.shape_cast %86 : vector<1x96x4xf32> to vector<96x4xf32>
    %cst_71 = arith.constant dense<0.000000e+00> : vector<96x128xf32>
    %88 = tpu.matmul %87, %11, %cst_71 {dimension_numbers = #tpu.dot_dimension_numbers<[1], [0], [0], [1], [0, 0, 1, 1], [], []>} : vector<96x4xf32>, vector<4x128xf32>, vector<96x128xf32> -> vector<96x128xf32>
    %89 = arith.addf %85, %88 : vector<96x128xf32>
    %c0_72 = arith.constant 0 : index
    %c132 = arith.constant 132 : index
    %c0_73 = arith.constant 0 : index
    %90 = vector.load %arg1[%c0_72, %c132, %c0_73] : memref<1x328x4xf32, #tpu.memory_space<vmem>>, vector<1x96x4xf32>
    %91 = vector.shape_cast %90 : vector<1x96x4xf32> to vector<96x4xf32>
    %cst_74 = arith.constant dense<0.000000e+00> : vector<96x128xf32>
    %92 = tpu.matmul %91, %13, %cst_74 {dimension_numbers = #tpu.dot_dimension_numbers<[1], [0], [0], [1], [0, 0, 1, 1], [], []>} : vector<96x4xf32>, vector<4x128xf32>, vector<96x128xf32> -> vector<96x128xf32>
    %93 = arith.addf %89, %92 : vector<96x128xf32>
    %c0_75 = arith.constant 0 : index
    %c133 = arith.constant 133 : index
    %c0_76 = arith.constant 0 : index
    %94 = vector.load %arg1[%c0_75, %c133, %c0_76] : memref<1x328x4xf32, #tpu.memory_space<vmem>>, vector<1x96x4xf32>
    %95 = vector.shape_cast %94 : vector<1x96x4xf32> to vector<96x4xf32>
    %cst_77 = arith.constant dense<0.000000e+00> : vector<96x128xf32>
    %96 = tpu.matmul %95, %15, %cst_77 {dimension_numbers = #tpu.dot_dimension_numbers<[1], [0], [0], [1], [0, 0, 1, 1], [], []>} : vector<96x4xf32>, vector<4x128xf32>, vector<96x128xf32> -> vector<96x128xf32>
    %97 = arith.addf %93, %96 : vector<96x128xf32>
    %c0_78 = arith.constant 0 : index
    %c134 = arith.constant 134 : index
    %c0_79 = arith.constant 0 : index
    %98 = vector.load %arg1[%c0_78, %c134, %c0_79] : memref<1x328x4xf32, #tpu.memory_space<vmem>>, vector<1x96x4xf32>
    %99 = vector.shape_cast %98 : vector<1x96x4xf32> to vector<96x4xf32>
    %cst_80 = arith.constant dense<0.000000e+00> : vector<96x128xf32>
    %100 = tpu.matmul %99, %17, %cst_80 {dimension_numbers = #tpu.dot_dimension_numbers<[1], [0], [0], [1], [0, 0, 1, 1], [], []>} : vector<96x4xf32>, vector<4x128xf32>, vector<96x128xf32> -> vector<96x128xf32>
    %101 = arith.addf %97, %100 : vector<96x128xf32>
    %cst_81 = arith.constant 0.000000e+00 : f32
    %102 = vector.broadcast %cst_81 : f32 to vector<96x128xf32>
    %103 = arith.maximumf %101, %102 : vector<96x128xf32>
    %c96_82 = arith.constant 96 : index
    %c0_83 = arith.constant 0 : index
    %104 = vector.load %arg2[%c96_82, %c0_83] : memref<288x1xf32, #tpu.memory_space<vmem>>, vector<96x1xf32>
    %105 = vector.broadcast %104 : vector<96x1xf32> to vector<96x128xf32>
    %106 = arith.mulf %103, %105 : vector<96x128xf32>
    %cst_84 = arith.constant dense<0.000000e+00> : vector<128xf32>
    %107 = vector.multi_reduction <add>, %106, %cst_84 [0] : vector<96x128xf32> to vector<128xf32>
    %108 = vector.shape_cast %107 : vector<128xf32> to vector<1x128xf32>
    %109 = arith.addf %65, %108 : vector<1x128xf32>
    %c0_85 = arith.constant 0 : index
    %c192 = arith.constant 192 : index
    %c0_86 = arith.constant 0 : index
    %110 = vector.load %arg1[%c0_85, %c192, %c0_86] : memref<1x328x4xf32, #tpu.memory_space<vmem>>, vector<1x96x4xf32>
    %111 = vector.shape_cast %110 : vector<1x96x4xf32> to vector<96x4xf32>
    %cst_87 = arith.constant dense<0.000000e+00> : vector<96x128xf32>
    %112 = tpu.matmul %111, %1, %cst_87 {dimension_numbers = #tpu.dot_dimension_numbers<[1], [0], [0], [1], [0, 0, 1, 1], [], []>} : vector<96x4xf32>, vector<4x128xf32>, vector<96x128xf32> -> vector<96x128xf32>
    %113 = arith.addf %20, %112 : vector<96x128xf32>
    %c0_88 = arith.constant 0 : index
    %c193 = arith.constant 193 : index
    %c0_89 = arith.constant 0 : index
    %114 = vector.load %arg1[%c0_88, %c193, %c0_89] : memref<1x328x4xf32, #tpu.memory_space<vmem>>, vector<1x96x4xf32>
    %115 = vector.shape_cast %114 : vector<1x96x4xf32> to vector<96x4xf32>
    %cst_90 = arith.constant dense<0.000000e+00> : vector<96x128xf32>
    %116 = tpu.matmul %115, %3, %cst_90 {dimension_numbers = #tpu.dot_dimension_numbers<[1], [0], [0], [1], [0, 0, 1, 1], [], []>} : vector<96x4xf32>, vector<4x128xf32>, vector<96x128xf32> -> vector<96x128xf32>
    %117 = arith.addf %113, %116 : vector<96x128xf32>
    %c0_91 = arith.constant 0 : index
    %c194 = arith.constant 194 : index
    %c0_92 = arith.constant 0 : index
    %118 = vector.load %arg1[%c0_91, %c194, %c0_92] : memref<1x328x4xf32, #tpu.memory_space<vmem>>, vector<1x96x4xf32>
    %119 = vector.shape_cast %118 : vector<1x96x4xf32> to vector<96x4xf32>
    %cst_93 = arith.constant dense<0.000000e+00> : vector<96x128xf32>
    %120 = tpu.matmul %119, %5, %cst_93 {dimension_numbers = #tpu.dot_dimension_numbers<[1], [0], [0], [1], [0, 0, 1, 1], [], []>} : vector<96x4xf32>, vector<4x128xf32>, vector<96x128xf32> -> vector<96x128xf32>
    %121 = arith.addf %117, %120 : vector<96x128xf32>
    %c0_94 = arith.constant 0 : index
    %c210 = arith.constant 210 : index
    %c0_95 = arith.constant 0 : index
    %122 = vector.load %arg1[%c0_94, %c210, %c0_95] : memref<1x328x4xf32, #tpu.memory_space<vmem>>, vector<1x96x4xf32>
    %123 = vector.shape_cast %122 : vector<1x96x4xf32> to vector<96x4xf32>
    %cst_96 = arith.constant dense<0.000000e+00> : vector<96x128xf32>
    %124 = tpu.matmul %123, %7, %cst_96 {dimension_numbers = #tpu.dot_dimension_numbers<[1], [0], [0], [1], [0, 0, 1, 1], [], []>} : vector<96x4xf32>, vector<4x128xf32>, vector<96x128xf32> -> vector<96x128xf32>
    %125 = arith.addf %121, %124 : vector<96x128xf32>
    %c0_97 = arith.constant 0 : index
    %c211 = arith.constant 211 : index
    %c0_98 = arith.constant 0 : index
    %126 = vector.load %arg1[%c0_97, %c211, %c0_98] : memref<1x328x4xf32, #tpu.memory_space<vmem>>, vector<1x96x4xf32>
    %127 = vector.shape_cast %126 : vector<1x96x4xf32> to vector<96x4xf32>
    %cst_99 = arith.constant dense<0.000000e+00> : vector<96x128xf32>
    %128 = tpu.matmul %127, %9, %cst_99 {dimension_numbers = #tpu.dot_dimension_numbers<[1], [0], [0], [1], [0, 0, 1, 1], [], []>} : vector<96x4xf32>, vector<4x128xf32>, vector<96x128xf32> -> vector<96x128xf32>
    %129 = arith.addf %125, %128 : vector<96x128xf32>
    %c0_100 = arith.constant 0 : index
    %c212 = arith.constant 212 : index
    %c0_101 = arith.constant 0 : index
    %130 = vector.load %arg1[%c0_100, %c212, %c0_101] : memref<1x328x4xf32, #tpu.memory_space<vmem>>, vector<1x96x4xf32>
    %131 = vector.shape_cast %130 : vector<1x96x4xf32> to vector<96x4xf32>
    %cst_102 = arith.constant dense<0.000000e+00> : vector<96x128xf32>
    %132 = tpu.matmul %131, %11, %cst_102 {dimension_numbers = #tpu.dot_dimension_numbers<[1], [0], [0], [1], [0, 0, 1, 1], [], []>} : vector<96x4xf32>, vector<4x128xf32>, vector<96x128xf32> -> vector<96x128xf32>
    %133 = arith.addf %129, %132 : vector<96x128xf32>
    %c0_103 = arith.constant 0 : index
    %c228 = arith.constant 228 : index
    %c0_104 = arith.constant 0 : index
    %134 = vector.load %arg1[%c0_103, %c228, %c0_104] : memref<1x328x4xf32, #tpu.memory_space<vmem>>, vector<1x96x4xf32>
    %135 = vector.shape_cast %134 : vector<1x96x4xf32> to vector<96x4xf32>
    %cst_105 = arith.constant dense<0.000000e+00> : vector<96x128xf32>
    %136 = tpu.matmul %135, %13, %cst_105 {dimension_numbers = #tpu.dot_dimension_numbers<[1], [0], [0], [1], [0, 0, 1, 1], [], []>} : vector<96x4xf32>, vector<4x128xf32>, vector<96x128xf32> -> vector<96x128xf32>
    %137 = arith.addf %133, %136 : vector<96x128xf32>
    %c0_106 = arith.constant 0 : index
    %c229 = arith.constant 229 : index
    %c0_107 = arith.constant 0 : index
    %138 = vector.load %arg1[%c0_106, %c229, %c0_107] : memref<1x328x4xf32, #tpu.memory_space<vmem>>, vector<1x96x4xf32>
    %139 = vector.shape_cast %138 : vector<1x96x4xf32> to vector<96x4xf32>
    %cst_108 = arith.constant dense<0.000000e+00> : vector<96x128xf32>
    %140 = tpu.matmul %139, %15, %cst_108 {dimension_numbers = #tpu.dot_dimension_numbers<[1], [0], [0], [1], [0, 0, 1, 1], [], []>} : vector<96x4xf32>, vector<4x128xf32>, vector<96x128xf32> -> vector<96x128xf32>
    %141 = arith.addf %137, %140 : vector<96x128xf32>
    %c0_109 = arith.constant 0 : index
    %c230 = arith.constant 230 : index
    %c0_110 = arith.constant 0 : index
    %142 = vector.load %arg1[%c0_109, %c230, %c0_110] : memref<1x328x4xf32, #tpu.memory_space<vmem>>, vector<1x96x4xf32>
    %143 = vector.shape_cast %142 : vector<1x96x4xf32> to vector<96x4xf32>
    %cst_111 = arith.constant dense<0.000000e+00> : vector<96x128xf32>
    %144 = tpu.matmul %143, %17, %cst_111 {dimension_numbers = #tpu.dot_dimension_numbers<[1], [0], [0], [1], [0, 0, 1, 1], [], []>} : vector<96x4xf32>, vector<4x128xf32>, vector<96x128xf32> -> vector<96x128xf32>
    %145 = arith.addf %141, %144 : vector<96x128xf32>
    %cst_112 = arith.constant 0.000000e+00 : f32
    %146 = vector.broadcast %cst_112 : f32 to vector<96x128xf32>
    %147 = arith.maximumf %145, %146 : vector<96x128xf32>
    %c192_113 = arith.constant 192 : index
    %c0_114 = arith.constant 0 : index
    %148 = vector.load %arg2[%c192_113, %c0_114] : memref<288x1xf32, #tpu.memory_space<vmem>>, vector<96x1xf32>
    %149 = vector.broadcast %148 : vector<96x1xf32> to vector<96x128xf32>
    %150 = arith.mulf %147, %149 : vector<96x128xf32>
    %cst_115 = arith.constant dense<0.000000e+00> : vector<128xf32>
    %151 = vector.multi_reduction <add>, %150, %cst_115 [0] : vector<96x128xf32> to vector<128xf32>
    %152 = vector.shape_cast %151 : vector<128xf32> to vector<1x128xf32>
    %153 = arith.addf %109, %152 : vector<1x128xf32>
    %c0_116 = arith.constant 0 : index
    %c0_117 = arith.constant 0 : index
    %154 = vector.load %arg5[%c0_116, %c0_117] : memref<128x128xf32, #tpu.memory_space<vmem>>, vector<128x128xf32>
    %cst_118 = arith.constant dense<0.000000e+00> : vector<1x128xf32>
    %155 = tpu.matmul %153, %154, %cst_118 {dimension_numbers = #tpu.dot_dimension_numbers<[1], [0], [0], [1], [0, 0, 1, 1], [], []>} : vector<1x128xf32>, vector<128x128xf32>, vector<1x128xf32> -> vector<1x128xf32>
    %c0_119 = arith.constant 0 : index
    %c0_120 = arith.constant 0 : index
    %c0_121 = arith.constant 0 : index
    %156 = vector.load %arg6[%c0_119, %c0_120, %c0_121] : memref<1x1x128xf32, #tpu.memory_space<vmem>>, vector<1x1x128xf32>
    %157 = vector.shape_cast %156 : vector<1x1x128xf32> to vector<1x128xf32>
    %158 = vector.shape_cast %155 : vector<1x128xf32> to vector<1x1x128xf32>
    tpu.vector_store %arg6[%c0_119, %c0_120, %c0_121], %158 {strides = array<i32>} : memref<1x1x128xf32, #tpu.memory_space<vmem>>, vector<1x1x128xf32>,
    return
  }
  func.func @transform_0(%arg0: i32) -> (i32, i32, i32) {
    %c0_i32 = arith.constant 0 : i32
    %c0_i32_0 = arith.constant 0 : i32
    %c0_i32_1 = arith.constant 0 : i32
    return %arg0, %c0_i32, %c0_i32_0 : i32, i32, i32
  }
  func.func @transform_1(%arg0: i32) -> (i32, i32) {
    %c0_i32 = arith.constant 0 : i32
    %c0_i32_0 = arith.constant 0 : i32
    %c0_i32_1 = arith.constant 0 : i32
    return %c0_i32, %c0_i32_0 : i32, i32
  }
  func.func @transform_2(%arg0: i32) -> (i32, i32, i32) {
    %c0_i32 = arith.constant 0 : i32
    %c0_i32_0 = arith.constant 0 : i32
    %c0_i32_1 = arith.constant 0 : i32
    %c0_i32_2 = arith.constant 0 : i32
    return %c0_i32, %c0_i32_0, %c0_i32_1 : i32, i32, i32
  }
  func.func @transform_3(%arg0: i32) -> (i32, i32) {
    %c0_i32 = arith.constant 0 : i32
    %c0_i32_0 = arith.constant 0 : i32
    %c0_i32_1 = arith.constant 0 : i32
    return %c0_i32, %c0_i32_0 : i32, i32
  }
  func.func @transform_4(%arg0: i32) -> (i32, i32) {
    %c0_i32 = arith.constant 0 : i32
    %c0_i32_0 = arith.constant 0 : i32
    %c0_i32_1 = arith.constant 0 : i32
    return %c0_i32, %c0_i32_0 : i32, i32
  }
  func.func @transform_5(%arg0: i32) -> (i32, i32, i32) {
    %c0_i32 = arith.constant 0 : i32
    %c0_i32_0 = arith.constant 0 : i32
    %c0_i32_1 = arith.constant 0 : i32
    return %arg0, %c0_i32, %c0_i32_0 : i32, i32, i32
  }
}

</mosaic_0001>

<llo_original>
// kernel: _lambda_.1
$region0: #{_lambda_.1}
  #allocation0 [shape = 'u32[]', space=smem, size = 0x4, offset = 0x4, fixed_abs, tag = 'smem constant byte address 0x4 - core index']
  #allocation1 [shape = 'u32[144,128]{1,0:T(1,128)}', space=vmem, size = 0x12000, scoped, tag = 'internal scratch']
  %s0 = inlined_call_operand.vmem [shape: f32[2,328,4], index: 0, kind: input, shape index: {}]
  %s1 = inlined_call_operand.vmem [shape: f32[288,1], index: 1, kind: input, shape index: {}]
  %s2 = inlined_call_operand.vmem [shape: f32[9,4,128], index: 2, kind: input, shape index: {}]
  %s3 = inlined_call_operand.vmem [shape: f32[1,128], index: 3, kind: input, shape index: {}]
  %s4 = inlined_call_operand.vmem [shape: f32[128,128], index: 4, kind: input, shape index: {}]
  %s5 = inlined_call_operand.hbm [shape: f32[2,1,128], index: 5, kind: output, shape index: {}]
  %s6 = sld [smem:[#allocation0]]
  $region53: #{_lambda_.1} parent=0
    _
  %s8 = ssub.s32 1, %s6
  %s9 = scalar_select 0, %s8, %s6
  $region1: #{_lambda_.1} parent=0
    #allocation2 [shape = 'u8[1024]{0}', space=vmem, size = 0x400, scoped, tag = 'output window, operand 0']
    #allocation3 [shape = 's32[2]{0}', space=sflag, size = 0x8, scoped, tag = 'scoped memory for _lambda_.1']
    %10 = vsyncpa [#allocation3], 0
    %s11 = scalar_lea.sflag [#allocation3], 1
    %12 = vsyncpa %s11, 0
    loop: start=0, step=1, limit=4
    $region2: #{_lambda_.1} parent=1 // loop_pre_header
      _
    $region3: #{_lambda_.1} parent=1 // loop_header
      %s14 = sphi 0, %s18
      %p15 = scmp.ge.s32.totalorder %s14, 4
      %s24 = sphi 0, %s26
      %s27 = sphi 0, %s24
      %s28 = sphi 0, %s27
      %s44 = sphi 0, %s28
      %s48 = sphi 0, %s48
      %s50 = sphi 0, %s48
      %s51 = sphi 0, %s50
      %s65 = sphi 0, %s51
      %s69 = sphi 0, %s69
      %s71 = sphi 0, %s69
      %s72 = sphi 0, %s71
      %s86 = sphi 0, %s72
      %s90 = sphi 0, %s90
      %s92 = sphi 0, %s90
      %s93 = sphi 0, %s92
      %s107 = sphi 0, %s93
      %s111 = sphi 0, %s111
      %s113 = sphi 0, %s111
      %s114 = sphi 0, %s113
      %s128 = sphi 0, %s114
      %s134 = sphi 0, %s136
      %s137 = sphi 0, %s134
      %s138 = sphi 0, %s137
      %s154 = sphi 0, %s138
    $region4: #{_lambda_.1} parent=1 // loop_header_branch
      %17 = sbr.rel (%p15) target = $region8
    $region5: #{_lambda_.1} parent=1 // loop_body
      %s19 = ssub.s32 %s14, 1
      %s20 = ssub.s32 %s14, 2
      %s21 = sadd.s32 %s14, 1
      %s22 = ssub.s32 %s14, %s21
      %p23 = scmp.eq.s32.totalorder %s22, 0
      %s25 = sadd.s32 %s24, 1
      %s26 = scalar_select %p23, %s24, %s25
      %p29 = pneg %p23
      %p30 = scmp.eq.s32.totalorder %s14, 1
      %p31 = por %p29, %p30
      %p32 = scmp.ne.s32.totalorder %s24, %s27
      %p33 = scmp.eq.s32.totalorder %s14, 0
      %p34 = por %p32, %p33
      %p35 = scmp.ne.s32.totalorder %s24, %s27
      %p36 = scmp.eq.s32.totalorder %s19, 1
      %p37 = por %p35, %p36
      %p38 = scmp.ne.s32.totalorder %s27, %s28
      %p39 = scmp.eq.s32.totalorder %s19, 0
      %p40 = por %p38, %p39
      %p41 = scmp.ne.s32.totalorder %s27, %s28
      %p42 = scmp.eq.s32.totalorder %s20, 1
      %p43 = por %p41, %p42
      %p45 = scmp.ne.s32.totalorder %s28, %s44
      %p46 = scmp.eq.s32.totalorder %s20, 0
      %p47 = por %p45, %p46
      %s49 = sadd.s32 %s48, 1
      %p52 = scmp.eq.s32.totalorder %s14, 1
      %p53 = scmp.ne.s32.totalorder %s48, %s50
      %p54 = scmp.eq.s32.totalorder %s14, 0
      %p55 = por %p53, %p54
      %p56 = scmp.ne.s32.totalorder %s48, %s50
      %p57 = scmp.eq.s32.totalorder %s19, 1
      %p58 = por %p56, %p57
      %p59 = scmp.ne.s32.totalorder %s50, %s51
      %p60 = scmp.eq.s32.totalorder %s19, 0
      %p61 = por %p59, %p60
      %p62 = scmp.ne.s32.totalorder %s50, %s51
      %p63 = scmp.eq.s32.totalorder %s20, 1
      %p64 = por %p62, %p63
      %p66 = scmp.ne.s32.totalorder %s51, %s65
      %p67 = scmp.eq.s32.totalorder %s20, 0
      %p68 = por %p66, %p67
      %s70 = sadd.s32 %s69, 1
      %p73 = scmp.eq.s32.totalorder %s14, 1
      %p74 = scmp.ne.s32.totalorder %s69, %s71
      %p75 = scmp.eq.s32.totalorder %s14, 0
      %p76 = por %p74, %p75
      %p77 = scmp.ne.s32.totalorder %s69, %s71
      %p78 = scmp.eq.s32.totalorder %s19, 1
      %p79 = por %p77, %p78
      %p80 = scmp.ne.s32.totalorder %s71, %s72
      %p81 = scmp.eq.s32.totalorder %s19, 0
      %p82 = por %p80, %p81
      %p83 = scmp.ne.s32.totalorder %s71, %s72
      %p84 = scmp.eq.s32.totalorder %s20, 1
      %p85 = por %p83, %p84
      %p87 = scmp.ne.s32.totalorder %s72, %s86
      %p88 = scmp.eq.s32.totalorder %s20, 0
      %p89 = por %p87, %p88
      %s91 = sadd.s32 %s90, 1
      %p94 = scmp.eq.s32.totalorder %s14, 1
      %p95 = scmp.ne.s32.totalorder %s90, %s92
      %p96 = scmp.eq.s32.totalorder %s14, 0
      %p97 = por %p95, %p96
      %p98 = scmp.ne.s32.totalorder %s90, %s92
      %p99 = scmp.eq.s32.totalorder %s19, 1
      %p100 = por %p98, %p99
      %p101 = scmp.ne.s32.totalorder %s92, %s93
      %p102 = scmp.eq.s32.totalorder %s19, 0
      %p103 = por %p101, %p102
      %p104 = scmp.ne.s32.totalorder %s92, %s93
      %p105 = scmp.eq.s32.totalorder %s20, 1
      %p106 = por %p104, %p105
      %p108 = scmp.ne.s32.totalorder %s93, %s107
      %p109 = scmp.eq.s32.totalorder %s20, 0
      %p110 = por %p108, %p109
      %s112 = sadd.s32 %s111, 1
      %p115 = scmp.eq.s32.totalorder %s14, 1
      %p116 = scmp.ne.s32.totalorder %s111, %s113
      %p117 = scmp.eq.s32.totalorder %s14, 0
      %p118 = por %p116, %p117
      %p119 = scmp.ne.s32.totalorder %s111, %s113
      %p120 = scmp.eq.s32.totalorder %s19, 1
      %p121 = por %p119, %p120
      %p122 = scmp.ne.s32.totalorder %s113, %s114
      %p123 = scmp.eq.s32.totalorder %s19, 0
      %p124 = por %p122, %p123
      %p125 = scmp.ne.s32.totalorder %s113, %s114
      %p126 = scmp.eq.s32.totalorder %s20, 1
      %p127 = por %p125, %p126
      %p129 = scmp.ne.s32.totalorder %s114, %s128
      %p130 = scmp.eq.s32.totalorder %s20, 0
      %p131 = por %p129, %p130
      %s132 = ssub.s32 %s14, %s21
      %p133 = scmp.eq.s32.totalorder %s132, 0
      %s135 = sadd.s32 %s134, 1
      %s136 = scalar_select %p133, %s134, %s135
      %p139 = pneg %p133
      %p140 = scmp.eq.s32.totalorder %s14, 1
      %p141 = por %p139, %p140
      %p142 = scmp.ne.s32.totalorder %s134, %s137
      %p143 = scmp.eq.s32.totalorder %s14, 0
      %p144 = por %p142, %p143
      %p145 = scmp.ne.s32.totalorder %s134, %s137
      %p146 = scmp.eq.s32.totalorder %s19, 1
      %p147 = por %p145, %p146
      %p148 = scmp.ne.s32.totalorder %s137, %s138
      %p149 = scmp.eq.s32.totalorder %s19, 0
      %p150 = por %p148, %p149
      %p151 = scmp.ne.s32.totalorder %s137, %s138
      %p152 = scmp.eq.s32.totalorder %s20, 1
      %p153 = por %p151, %p152
      %p155 = scmp.ne.s32.totalorder %s138, %s154
      %p156 = scmp.eq.s32.totalorder %s20, 0
      %p157 = por %p155, %p156
      %p158 = scmp.le.s32.totalorder 1, %s14
      %p159 = scmp.lt.s32.totalorder %s14, 3
      %p160 = pnand %p158, %p159
      %p161 = pneg %p160
      // Predicated region
      $region9: #{_lambda_.1} parent=5 // pred_check
        _
      $region10: #{_lambda_.1} parent=5 // pred_check_branch
        %163 = sbr.rel (%p160) target = $region12
      $region11: #{_lambda_.1} parent=5 // pred_region
        %s164 = ssub.s32 %s14, 1
        // Predicated region
        $region13: #{_lambda_.1} parent=11 // pred_check
          %p165 = pneg %p61
        $region14: #{_lambda_.1} parent=11 // pred_check_branch
          %167 = sbr.rel (%p165) target = $region16
        $region15: #{_lambda_.1} parent=11 // pred_region
          _
        $region16: #{_lambda_.1} parent=11 // pred_fallthru
          _
        // Predicated region
        $region17: #{_lambda_.1} parent=11 // pred_check
          %p168 = pneg %p82
        $region18: #{_lambda_.1} parent=11 // pred_check_branch
          %170 = sbr.rel (%p168) target = $region20
        $region19: #{_lambda_.1} parent=11 // pred_region
          _
        $region20: #{_lambda_.1} parent=11 // pred_fallthru
          _
        // Predicated region
        $region21: #{_lambda_.1} parent=11 // pred_check
          %p171 = pneg %p103
        $region22: #{_lambda_.1} parent=11 // pred_check_branch
          %173 = sbr.rel (%p171) target = $region24
        $region23: #{_lambda_.1} parent=11 // pred_region
          _
        $region24: #{_lambda_.1} parent=11 // pred_fallthru
          _
        // Predicated region
        $region25: #{_lambda_.1} parent=11 // pred_check
          %p174 = pneg %p124
        $region26: #{_lambda_.1} parent=11 // pred_check_branch
          %176 = sbr.rel (%p174) target = $region28
        $region27: #{_lambda_.1} parent=11 // pred_region
          _
        $region28: #{_lambda_.1} parent=11 // pred_fallthru
          _
      $region12: #{_lambda_.1} parent=5 // pred_fallthru
        _
      %p177 = scmp.lt.s32.totalorder %s14, 2
      // Predicated region
      $region29: #{_lambda_.1} parent=5 // pred_check
        %p178 = pneg %p177
      $region30: #{_lambda_.1} parent=5 // pred_check_branch
        %180 = sbr.rel (%p178) target = $region32
      $region31: #{_lambda_.1} parent=5 // pred_region
        // Predicated region
        $region33: #{_lambda_.1} parent=31 // pred_check
          %p181 = pneg %p34
        $region34: #{_lambda_.1} parent=31 // pred_check_branch
          %183 = sbr.rel (%p181) target = $region36
        $region35: #{_lambda_.1} parent=31 // pred_region
          %p184 = scmp.lt.s32.totalorder %s14, 1
          %s185 = scalar_select %p184, %s14, 1
          %s186 = smul.addr %s185, 41
          %s187 = smul.addr %s186, 8
          %s188 = scalar_lea.vmem %s0, %s187
        $region36: #{_lambda_.1} parent=31 // pred_fallthru
          _
      $region32: #{_lambda_.1} parent=5 // pred_fallthru
        _
      %p189 = scmp.le.s32.totalorder 1, %s14
      %p190 = scmp.lt.s32.totalorder %s14, 3
      %p191 = pnand %p189, %p190
      %p192 = pneg %p191
      // Predicated region
      $region37: #{_lambda_.1} parent=5 // pred_check
        _
      $region38: #{_lambda_.1} parent=5 // pred_check_branch
        %194 = sbr.rel (%p191) target = $region40
      $region39: #{_lambda_.1} parent=5 // pred_region
        %s195 = ssub.s32 %s14, 1
        %p196 = scmp.lt.s32.totalorder %s19, 1
        %s197 = scalar_select %p196, %s19, 1
        %s198 = smul.addr %s197, 41
        %s199 = smul.addr %s198, 8
        %s200 = scalar_lea.vmem %s0, %s199
        %p201 = pneg %p40
        %p202 = pneg %p37
        %p203 = pneg %p61
        %p204 = pneg %p58
        %p205 = pneg %p82
        %p206 = pneg %p79
        %p207 = pneg %p103
        %p208 = pneg %p100
        %p209 = pneg %p124
        %p210 = pneg %p121
        %p211 = pneg %p150
        %p212 = pneg %p147
        %s213 = sand.u32 %s137, 1
        %s214 = scalar_lea.sflag [#allocation3], %s213
        %s215 = sand.u32 %s137, 1
        %s216 = scalar_lea.vmem [#allocation2], %s215
        %p217 = scmp.lt.s32.totalorder %s19, 1
        %s218 = scalar_select %p217, %s19, 1
        %s219 = smul.addr %s218, 41
        %s220 = smul.addr %s219, 8
        %s221 = scalar_lea.vmem %s0, %s220
        %v222 = vld [vmem:[%s2] sm:$0xf]
        %s223 = scalar_lea.vmem %s2, 4
        %v224 = vld [vmem:[%s223] sm:$0xf]
        %s225 = scalar_lea.vmem %s2, 8
        %v226 = vld [vmem:[%s225] sm:$0xf]
        %s227 = scalar_lea.vmem %s2, 12
        %v228 = vld [vmem:[%s227] sm:$0xf]
        %s229 = scalar_lea.vmem %s2, 16
        %v230 = vld [vmem:[%s229] sm:$0xf]
        %s231 = scalar_lea.vmem %s2, 20
        %v232 = vld [vmem:[%s231] sm:$0xf]
        %s233 = scalar_lea.vmem %s2, 24
        %v234 = vld [vmem:[%s233] sm:$0xf]
        %s235 = scalar_lea.vmem %s2, 28
        %v236 = vld [vmem:[%s235] sm:$0xf]
        %s237 = scalar_lea.vmem %s2, 32
        %v238 = vld [vmem:[%s237] sm:$0xf]
        %v239 = vld [vmem:[%s3] sm:$0x1]
        %v241 = vlaneseq
        %v242 = vshrl.u32 %v241, 7
        %v243 = vsub.s32 0, %v242
        %v244 = vrot.slane %v239, %v243
        %v246 = vld [vmem:[%s221] sm:$0xff]
        %v247 = vld [vmem:[%s221 + $0x8] sm:$0xff]
        %v248 = vld [vmem:[%s221 + $0x10] sm:$0xff]
        %v249 = vld [vmem:[%s221 + $0x18] sm:$0xff]
        %v250 = vld [vmem:[%s221 + $0x20] sm:$0xff]
        %v251 = vld [vmem:[%s221 + $0x28] sm:$0xff]
        %v252 = vld [vmem:[%s221 + $0x30] sm:$0xff]
        %v253 = vld [vmem:[%s221 + $0x38] sm:$0xff]
        %v254 = vld [vmem:[%s221 + $0x40] sm:$0xff]
        %v255 = vld [vmem:[%s221 + $0x48] sm:$0xff]
        %v256 = vld [vmem:[%s221 + $0x50] sm:$0xff]
        %v257 = vld [vmem:[%s221 + $0x58] sm:$0xff]
        %vm258 = vcmask 31744
        %v260 = vsel %vm258, %v246, 0
        %v263 = vsel %vm258, %v247, 0
        %v266 = vsel %vm258, %v248, 0
        %v269 = vsel %vm258, %v249, 0
        %v272 = vsel %vm258, %v250, 0
        %v275 = vsel %vm258, %v251, 0
        %v278 = vsel %vm258, %v252, 0
        %v281 = vsel %vm258, %v253, 0
        %v284 = vsel %vm258, %v254, 0
        %v287 = vsel %vm258, %v255, 0
        %v290 = vsel %vm258, %v256, 0
        %v293 = vsel %vm258, %v257, 0
        %vm295 = vcmask 1043456
        %v297 = vsel %vm295, %v222, 0
        %299 = vmatprep.subr.mxu0 0.0
        %300 = vmatpush1.msra.mxu0 0.0
        %301 = vmatprep.subr.mxu0 0.0
        %302 = vmatpush1.msra.mxu0 0.0
        %303 = vmatprep.subr.mxu0 0.0
        %304 = vmatpush1.msra.mxu0 0.0
        %305 = vmatprep.subr.mxu0 0.0
        %306 = vmatpush1.msra.mxu0 0.0
        %307 = vmatprep.subr.mxu0 0.0
        %308 = vmatpush1.msra.mxu0 0.0
        %309 = vmatprep.subr.mxu0 0.0
        %310 = vmatpush1.msra.mxu0 0.0
        %311 = vmatprep.subr.mxu0 0.0
        %312 = vmatpush1.msra.mxu0 0.0
        %313 = vmatprep.subr.mxu0 0.0
        %314 = vmatpush1.msra.mxu0 0.0
        %315 = vmatprep.subr.mxu0 0.0
        %316 = vmatpush1.msra.mxu0 0.0
        %317 = vmatprep.subr.mxu0 0.0
        %318 = vmatpush1.msra.mxu0 0.0
        %319 = vmatprep.subr.mxu0 0.0
        %320 = vmatpush1.msra.mxu0 0.0
        %321 = vmatprep.subr.mxu0 0.0
        %322 = vmatpush1.msra.mxu0 0.0
        %323 = vmatprep.subr.mxu0 0.0
        %324 = vmatpush1.msra.mxu0 0.0
        %325 = vmatprep.subr.mxu0 0.0
        %326 = vmatpush1.msra.mxu0 0.0
        %327 = vmatprep.subr.mxu0 0.0
        %328 = vmatpush1.msra.mxu0 0.0
        %329 = vmatprep.subr.mxu0 0.0
        %330 = vmatpush1.msra.mxu0 %v297
        %331 = vmatprep.subr.mxu0 0.0
        %332 = vmatpush2.msra.mxu0 0.0
        %333 = vmatprep.subr.mxu0 0.0
        %334 = vmatpush2.msra.mxu0 0.0
        %335 = vmatprep.subr.mxu0 0.0
        %336 = vmatpush2.msra.mxu0 0.0
        %337 = vmatprep.subr.mxu0 0.0
        %338 = vmatpush2.msra.mxu0 0.0
        %339 = vmatprep.subr.mxu0 0.0
        %340 = vmatpush2.msra.mxu0 0.0
        %341 = vmatprep.subr.mxu0 0.0
        %342 = vmatpush2.msra.mxu0 0.0
        %343 = vmatprep.subr.mxu0 0.0
        %344 = vmatpush2.msra.mxu0 0.0
        %345 = vmatprep.subr.mxu0 0.0
        %346 = vmatpush2.msra.mxu0 0.0
        %347 = vmatprep.subr.mxu0 0.0
        %348 = vmatpush2.msra.mxu0 0.0
        %349 = vmatprep.subr.mxu0 0.0
        %350 = vmatpush2.msra.mxu0 0.0
        %351 = vmatprep.subr.mxu0 0.0
        %352 = vmatpush2.msra.mxu0 0.0
        %353 = vmatprep.subr.mxu0 0.0
        %354 = vmatpush2.msra.mxu0 0.0
        %355 = vmatprep.subr.mxu0 0.0
        %356 = vmatpush2.msra.mxu0 0.0
        %357 = vmatprep.subr.mxu0 0.0
        %358 = vmatpush2.msra.mxu0 0.0
        %359 = vmatprep.subr.mxu0 0.0
        %360 = vmatpush2.msra.mxu0 0.0
        %361 = vmatprep.subr.mxu0 0.0
        %362 = vmatpush2.msra.mxu0 0.0
        %363 = vmatprep.mubr.f32.mxu0 0.0
        %364 = vmatmul.mubr.f32.gmra.mxu0 %v260
        %v365 = vpop.f32.mrf.mxu0
        %v366 = vadd.f32 0.0, %v365
        %v367 = vpop.f32.mrf.mxu0
        %368 = vmatprep.mubr.f32.mxu0 0.0
        %369 = vmatmul.mubr.f32.gmra.mxu0 %v263
        %v370 = vpop.f32.mrf.mxu0
        %v371 = vadd.f32 0.0, %v370
        %v372 = vpop.f32.mrf.mxu0
        %373 = vmatprep.mubr.f32.mxu0 0.0
        %374 = vmatmul.mubr.f32.gmra.mxu0 %v266
        %v375 = vpop.f32.mrf.mxu0
        %v376 = vadd.f32 0.0, %v375
        %v377 = vpop.f32.mrf.mxu0
        %378 = vmatprep.mubr.f32.mxu0 0.0
        %379 = vmatmul.mubr.f32.gmra.mxu0 %v269
        %v380 = vpop.f32.mrf.mxu0
        %v381 = vadd.f32 0.0, %v380
        %v382 = vpop.f32.mrf.mxu0
        %383 = vmatprep.mubr.f32.mxu0 0.0
        %384 = vmatmul.mubr.f32.gmra.mxu0 %v272
        %v385 = vpop.f32.mrf.mxu0
        %v386 = vadd.f32 0.0, %v385
        %v387 = vpop.f32.mrf.mxu0
        %388 = vmatprep.mubr.f32.mxu0 0.0
        %389 = vmatmul.mubr.f32.gmra.mxu0 %v275
        %v390 = vpop.f32.mrf.mxu0
        %v391 = vadd.f32 0.0, %v390
        %v392 = vpop.f32.mrf.mxu0
        %393 = vmatprep.mubr.f32.mxu0 0.0
        %394 = vmatmul.mubr.f32.gmra.mxu0 %v278
        %v395 = vpop.f32.mrf.mxu0
        %v396 = vadd.f32 0.0, %v395
        %v397 = vpop.f32.mrf.mxu0
        %398 = vmatprep.mubr.f32.mxu0 0.0
        %399 = vmatmul.mubr.f32.gmra.mxu0 %v281
        %v400 = vpop.f32.mrf.mxu0
        %v401 = vadd.f32 0.0, %v400
        %v402 = vpop.f32.mrf.mxu0
        %403 = vmatprep.mubr.f32.mxu0 0.0
        %404 = vmatmul.mubr.f32.gmra.mxu0 %v284
        %v405 = vpop.f32.mrf.mxu0
        %v406 = vadd.f32 0.0, %v405
        %v407 = vpop.f32.mrf.mxu0
        %408 = vmatprep.mubr.f32.mxu0 0.0
        %409 = vmatmul.mubr.f32.gmra.mxu0 %v287
        %v410 = vpop.f32.mrf.mxu0
        %v411 = vadd.f32 0.0, %v410
        %v412 = vpop.f32.mrf.mxu0
        %413 = vmatprep.mubr.f32.mxu0 0.0
        %414 = vmatmul.mubr.f32.gmra.mxu0 %v290
        %v415 = vpop.f32.mrf.mxu0
        %v416 = vadd.f32 0.0, %v415
        %v417 = vpop.f32.mrf.mxu0
        %418 = vmatprep.mubr.f32.mxu0 0.0
        %419 = vmatmul.mubr.f32.gmra.mxu0 %v293
        %v420 = vpop.f32.mrf.mxu0
        %v421 = vadd.f32 0.0, %v420
        %v422 = vpop.f32.mrf.mxu0
        %423 = vdwg.mxu0
        %v424 = vadd.f32 %v244, %v366
        %v425 = vadd.f32 %v244, %v371
        %v426 = vadd.f32 %v244, %v376
        %v427 = vadd.f32 %v244, %v381
        %v428 = vadd.f32 %v244, %v386
        %v429 = vadd.f32 %v244, %v391
        %v430 = vadd.f32 %v244, %v396
        %v431 = vadd.f32 %v244, %v401
        %v432 = vadd.f32 %v244, %v406
        %v433 = vadd.f32 %v244, %v411
        %v434 = vadd.f32 %v244, %v416
        %v435 = vadd.f32 %v244, %v421
        %v436 = vld [vmem:[%s221 + $0x1] sm:$0xff]
        %v437 = vld [vmem:[%s221 + $0x9] sm:$0xff]
        %v438 = vld [vmem:[%s221 + $0x11] sm:$0xff]
        %v439 = vld [vmem:[%s221 + $0x19] sm:$0xff]
        %v440 = vld [vmem:[%s221 + $0x21] sm:$0xff]
        %v441 = vld [vmem:[%s221 + $0x29] sm:$0xff]
        %v442 = vld [vmem:[%s221 + $0x31] sm:$0xff]
        %v443 = vld [vmem:[%s221 + $0x39] sm:$0xff]
        %v444 = vld [vmem:[%s221 + $0x41] sm:$0xff]
        %v445 = vld [vmem:[%s221 + $0x49] sm:$0xff]
        %v446 = vld [vmem:[%s221 + $0x51] sm:$0xff]
        %v447 = vld [vmem:[%s221 + $0x59] sm:$0xff]
        %v449 = vsel %vm258, %v436, 0
        %v452 = vsel %vm258, %v437, 0
        %v455 = vsel %vm258, %v438, 0
        %v458 = vsel %vm258, %v439, 0
        %v461 = vsel %vm258, %v440, 0
        %v464 = vsel %vm258, %v441, 0
        %v467 = vsel %vm258, %v442, 0
        %v470 = vsel %vm258, %v443, 0
        %v473 = vsel %vm258, %v444, 0
        %v476 = vsel %vm258, %v445, 0
        %v479 = vsel %vm258, %v446, 0
        %v482 = vsel %vm258, %v447, 0
        %v485 = vsel %vm295, %v224, 0
        %487 = vmatprep.subr.mxu0 0.0
        %488 = vmatpush1.msra.mxu0 0.0
        %489 = vmatprep.subr.mxu0 0.0
        %490 = vmatpush1.msra.mxu0 0.0
        %491 = vmatprep.subr.mxu0 0.0
        %492 = vmatpush1.msra.mxu0 0.0
        %493 = vmatprep.subr.mxu0 0.0
        %494 = vmatpush1.msra.mxu0 0.0
        %495 = vmatprep.subr.mxu0 0.0
        %496 = vmatpush1.msra.mxu0 0.0
        %497 = vmatprep.subr.mxu0 0.0
        %498 = vmatpush1.msra.mxu0 0.0
        %499 = vmatprep.subr.mxu0 0.0
        %500 = vmatpush1.msra.mxu0 0.0
        %501 = vmatprep.subr.mxu0 0.0
        %502 = vmatpush1.msra.mxu0 0.0
        %503 = vmatprep.subr.mxu0 0.0
        %504 = vmatpush1.msra.mxu0 0.0
        %505 = vmatprep.subr.mxu0 0.0
        %506 = vmatpush1.msra.mxu0 0.0
        %507 = vmatprep.subr.mxu0 0.0
        %508 = vmatpush1.msra.mxu0 0.0
        %509 = vmatprep.subr.mxu0 0.0
        %510 = vmatpush1.msra.mxu0 0.0
        %511 = vmatprep.subr.mxu0 0.0
        %512 = vmatpush1.msra.mxu0 0.0
        %513 = vmatprep.subr.mxu0 0.0
        %514 = vmatpush1.msra.mxu0 0.0
        %515 = vmatprep.subr.mxu0 0.0
        %516 = vmatpush1.msra.mxu0 0.0
        %517 = vmatprep.subr.mxu0 0.0
        %518 = vmatpush1.msra.mxu0 %v485
        %519 = vmatprep.subr.mxu0 0.0
        %520 = vmatpush2.msra.mxu0 0.0
        %521 = vmatprep.subr.mxu0 0.0
        %522 = vmatpush2.msra.mxu0 0.0
        %523 = vmatprep.subr.mxu0 0.0
        %524 = vmatpush2.msra.mxu0 0.0
        %525 = vmatprep.subr.mxu0 0.0
        %526 = vmatpush2.msra.mxu0 0.0
        %527 = vmatprep.subr.mxu0 0.0
        %528 = vmatpush2.msra.mxu0 0.0
        %529 = vmatprep.subr.mxu0 0.0
        %530 = vmatpush2.msra.mxu0 0.0
        %531 = vmatprep.subr.mxu0 0.0
        %532 = vmatpush2.msra.mxu0 0.0
        %533 = vmatprep.subr.mxu0 0.0
        %534 = vmatpush2.msra.mxu0 0.0
        %535 = vmatprep.subr.mxu0 0.0
        %536 = vmatpush2.msra.mxu0 0.0
        %537 = vmatprep.subr.mxu0 0.0
        %538 = vmatpush2.msra.mxu0 0.0
        %539 = vmatprep.subr.mxu0 0.0
        %540 = vmatpush2.msra.mxu0 0.0
        %541 = vmatprep.subr.mxu0 0.0
        %542 = vmatpush2.msra.mxu0 0.0
        %543 = vmatprep.subr.mxu0 0.0
        %544 = vmatpush2.msra.mxu0 0.0
        %545 = vmatprep.subr.mxu0 0.0
        %546 = vmatpush2.msra.mxu0 0.0
        %547 = vmatprep.subr.mxu0 0.0
        %548 = vmatpush2.msra.mxu0 0.0
        %549 = vmatprep.subr.mxu0 0.0
        %550 = vmatpush2.msra.mxu0 0.0
        %551 = vmatprep.mubr.f32.mxu0 0.0
        %552 = vmatmul.mubr.f32.gmra.mxu0 %v449
        %v553 = vpop.f32.mrf.mxu0
        %v554 = vadd.f32 0.0, %v553
        %v555 = vpop.f32.mrf.mxu0
        %556 = vmatprep.mubr.f32.mxu0 0.0
        %557 = vmatmul.mubr.f32.gmra.mxu0 %v452
        %v558 = vpop.f32.mrf.mxu0
        %v559 = vadd.f32 0.0, %v558
        %v560 = vpop.f32.mrf.mxu0
        %561 = vmatprep.mubr.f32.mxu0 0.0
        %562 = vmatmul.mubr.f32.gmra.mxu0 %v455
        %v563 = vpop.f32.mrf.mxu0
        %v564 = vadd.f32 0.0, %v563
        %v565 = vpop.f32.mrf.mxu0
        %566 = vmatprep.mubr.f32.mxu0 0.0
        %567 = vmatmul.mubr.f32.gmra.mxu0 %v458
        %v568 = vpop.f32.mrf.mxu0
        %v569 = vadd.f32 0.0, %v568
        %v570 = vpop.f32.mrf.mxu0
        %571 = vmatprep.mubr.f32.mxu0 0.0
        %572 = vmatmul.mubr.f32.gmra.mxu0 %v461
        %v573 = vpop.f32.mrf.mxu0
        %v574 = vadd.f32 0.0, %v573
        %v575 = vpop.f32.mrf.mxu0
        %576 = vmatprep.mubr.f32.mxu0 0.0
        %577 = vmatmul.mubr.f32.gmra.mxu0 %v464
        %v578 = vpop.f32.mrf.mxu0
        %v579 = vadd.f32 0.0, %v578
        %v580 = vpop.f32.mrf.mxu0
        %581 = vmatprep.mubr.f32.mxu0 0.0
        %582 = vmatmul.mubr.f32.gmra.mxu0 %v467
        %v583 = vpop.f32.mrf.mxu0
        %v584 = vadd.f32 0.0, %v583
        %v585 = vpop.f32.mrf.mxu0
        %586 = vmatprep.mubr.f32.mxu0 0.0
        %587 = vmatmul.mubr.f32.gmra.mxu0 %v470
        %v588 = vpop.f32.mrf.mxu0
        %v589 = vadd.f32 0.0, %v588
        %v590 = vpop.f32.mrf.mxu0
        %591 = vmatprep.mubr.f32.mxu0 0.0
        %592 = vmatmul.mubr.f32.gmra.mxu0 %v473
        %v593 = vpop.f32.mrf.mxu0
        %v594 = vadd.f32 0.0, %v593
        %v595 = vpop.f32.mrf.mxu0
        %596 = vmatprep.mubr.f32.mxu0 0.0
        %597 = vmatmul.mubr.f32.gmra.mxu0 %v476
        %v598 = vpop.f32.mrf.mxu0
        %v599 = vadd.f32 0.0, %v598
        %v600 = vpop.f32.mrf.mxu0
        %601 = vmatprep.mubr.f32.mxu0 0.0
        %602 = vmatmul.mubr.f32.gmra.mxu0 %v479
        %v603 = vpop.f32.mrf.mxu0
        %v604 = vadd.f32 0.0, %v603
        %v605 = vpop.f32.mrf.mxu0
        %606 = vmatprep.mubr.f32.mxu0 0.0
        %607 = vmatmul.mubr.f32.gmra.mxu0 %v482
        %v608 = vpop.f32.mrf.mxu0
        %v609 = vadd.f32 0.0, %v608
        %v610 = vpop.f32.mrf.mxu0
        %611 = vdwg.mxu0
        %v612 = vadd.f32 %v424, %v554
        %v613 = vadd.f32 %v425, %v559
        %v614 = vadd.f32 %v426, %v564
        %v615 = vadd.f32 %v427, %v569
        %v616 = vadd.f32 %v428, %v574
        %v617 = vadd.f32 %v429, %v579
        %v618 = vadd.f32 %v430, %v584
        %v619 = vadd.f32 %v431, %v589
        %v620 = vadd.f32 %v432, %v594
        %v621 = vadd.f32 %v433, %v599
        %v622 = vadd.f32 %v434, %v604
        %v623 = vadd.f32 %v435, %v609
        %v624 = vld [vmem:[%s221 + $0x2] sm:$0xff]
        %v625 = vld [vmem:[%s221 + $0xa] sm:$0xff]
        %v626 = vld [vmem:[%s221 + $0x12] sm:$0xff]
        %v627 = vld [vmem:[%s221 + $0x1a] sm:$0xff]
        %v628 = vld [vmem:[%s221 + $0x22] sm:$0xff]
        %v629 = vld [vmem:[%s221 + $0x2a] sm:$0xff]
        %v630 = vld [vmem:[%s221 + $0x32] sm:$0xff]
        %v631 = vld [vmem:[%s221 + $0x3a] sm:$0xff]
        %v632 = vld [vmem:[%s221 + $0x42] sm:$0xff]
        %v633 = vld [vmem:[%s221 + $0x4a] sm:$0xff]
        %v634 = vld [vmem:[%s221 + $0x52] sm:$0xff]
        %v635 = vld [vmem:[%s221 + $0x5a] sm:$0xff]
        %v637 = vsel %vm258, %v624, 0
        %v640 = vsel %vm258, %v625, 0
        %v643 = vsel %vm258, %v626, 0
        %v646 = vsel %vm258, %v627, 0
        %v649 = vsel %vm258, %v628, 0
        %v652 = vsel %vm258, %v629, 0
        %v655 = vsel %vm258, %v630, 0
        %v658 = vsel %vm258, %v631, 0
        %v661 = vsel %vm258, %v632, 0
        %v664 = vsel %vm258, %v633, 0
        %v667 = vsel %vm258, %v634, 0
        %v670 = vsel %vm258, %v635, 0
        %v673 = vsel %vm295, %v226, 0
        %675 = vmatprep.subr.mxu0 0.0
        %676 = vmatpush1.msra.mxu0 0.0
        %677 = vmatprep.subr.mxu0 0.0
        %678 = vmatpush1.msra.mxu0 0.0
        %679 = vmatprep.subr.mxu0 0.0
        %680 = vmatpush1.msra.mxu0 0.0
        %681 = vmatprep.subr.mxu0 0.0
        %682 = vmatpush1.msra.mxu0 0.0
        %683 = vmatprep.subr.mxu0 0.0
        %684 = vmatpush1.msra.mxu0 0.0
        %685 = vmatprep.subr.mxu0 0.0
        %686 = vmatpush1.msra.mxu0 0.0
        %687 = vmatprep.subr.mxu0 0.0
        %688 = vmatpush1.msra.mxu0 0.0
        %689 = vmatprep.subr.mxu0 0.0
        %690 = vmatpush1.msra.mxu0 0.0
        %691 = vmatprep.subr.mxu0 0.0
        %692 = vmatpush1.msra.mxu0 0.0
        %693 = vmatprep.subr.mxu0 0.0
        %694 = vmatpush1.msra.mxu0 0.0
        %695 = vmatprep.subr.mxu0 0.0
        %696 = vmatpush1.msra.mxu0 0.0
        %697 = vmatprep.subr.mxu0 0.0
        %698 = vmatpush1.msra.mxu0 0.0
        %699 = vmatprep.subr.mxu0 0.0
        %700 = vmatpush1.msra.mxu0 0.0
        %701 = vmatprep.subr.mxu0 0.0
        %702 = vmatpush1.msra.mxu0 0.0
        %703 = vmatprep.subr.mxu0 0.0
        %704 = vmatpush1.msra.mxu0 0.0
        %705 = vmatprep.subr.mxu0 0.0
        %706 = vmatpush1.msra.mxu0 %v673
        %707 = vmatprep.subr.mxu0 0.0
        %708 = vmatpush2.msra.mxu0 0.0
        %709 = vmatprep.subr.mxu0 0.0
        %710 = vmatpush2.msra.mxu0 0.0
        %711 = vmatprep.subr.mxu0 0.0
        %712 = vmatpush2.msra.mxu0 0.0
        %713 = vmatprep.subr.mxu0 0.0
        %714 = vmatpush2.msra.mxu0 0.0
        %715 = vmatprep.subr.mxu0 0.0
        %716 = vmatpush2.msra.mxu0 0.0
        %717 = vmatprep.subr.mxu0 0.0
        %718 = vmatpush2.msra.mxu0 0.0
        %719 = vmatprep.subr.mxu0 0.0
        %720 = vmatpush2.msra.mxu0 0.0
        %721 = vmatprep.subr.mxu0 0.0
        %722 = vmatpush2.msra.mxu0 0.0
        %723 = vmatprep.subr.mxu0 0.0
        %724 = vmatpush2.msra.mxu0 0.0
        %725 = vmatprep.subr.mxu0 0.0
        %726 = vmatpush2.msra.mxu0 0.0
        %727 = vmatprep.subr.mxu0 0.0
        %728 = vmatpush2.msra.mxu0 0.0
        %729 = vmatprep.subr.mxu0 0.0
        %730 = vmatpush2.msra.mxu0 0.0
        %731 = vmatprep.subr.mxu0 0.0
        %732 = vmatpush2.msra.mxu0 0.0
        %733 = vmatprep.subr.mxu0 0.0
        %734 = vmatpush2.msra.mxu0 0.0
        %735 = vmatprep.subr.mxu0 0.0
        %736 = vmatpush2.msra.mxu0 0.0
        %737 = vmatprep.subr.mxu0 0.0
        %738 = vmatpush2.msra.mxu0 0.0
        %739 = vmatprep.mubr.f32.mxu0 0.0
        %740 = vmatmul.mubr.f32.gmra.mxu0 %v637
        %v741 = vpop.f32.mrf.mxu0
        %v742 = vadd.f32 0.0, %v741
        %v743 = vpop.f32.mrf.mxu0
        %744 = vmatprep.mubr.f32.mxu0 0.0
        %745 = vmatmul.mubr.f32.gmra.mxu0 %v640
        %v746 = vpop.f32.mrf.mxu0
        %v747 = vadd.f32 0.0, %v746
        %v748 = vpop.f32.mrf.mxu0
        %749 = vmatprep.mubr.f32.mxu0 0.0
        %750 = vmatmul.mubr.f32.gmra.mxu0 %v643
        %v751 = vpop.f32.mrf.mxu0
        %v752 = vadd.f32 0.0, %v751
        %v753 = vpop.f32.mrf.mxu0
        %754 = vmatprep.mubr.f32.mxu0 0.0
        %755 = vmatmul.mubr.f32.gmra.mxu0 %v646
        %v756 = vpop.f32.mrf.mxu0
        %v757 = vadd.f32 0.0, %v756
        %v758 = vpop.f32.mrf.mxu0
        %759 = vmatprep.mubr.f32.mxu0 0.0
        %760 = vmatmul.mubr.f32.gmra.mxu0 %v649
        %v761 = vpop.f32.mrf.mxu0
        %v762 = vadd.f32 0.0, %v761
        %v763 = vpop.f32.mrf.mxu0
        %764 = vmatprep.mubr.f32.mxu0 0.0
        %765 = vmatmul.mubr.f32.gmra.mxu0 %v652
        %v766 = vpop.f32.mrf.mxu0
        %v767 = vadd.f32 0.0, %v766
        %v768 = vpop.f32.mrf.mxu0
        %769 = vmatprep.mubr.f32.mxu0 0.0
        %770 = vmatmul.mubr.f32.gmra.mxu0 %v655
        %v771 = vpop.f32.mrf.mxu0
        %v772 = vadd.f32 0.0, %v771
        %v773 = vpop.f32.mrf.mxu0
        %774 = vmatprep.mubr.f32.mxu0 0.0
        %775 = vmatmul.mubr.f32.gmra.mxu0 %v658
        %v776 = vpop.f32.mrf.mxu0
        %v777 = vadd.f32 0.0, %v776
        %v778 = vpop.f32.mrf.mxu0
        %779 = vmatprep.mubr.f32.mxu0 0.0
        %780 = vmatmul.mubr.f32.gmra.mxu0 %v661
        %v781 = vpop.f32.mrf.mxu0
        %v782 = vadd.f32 0.0, %v781
        %v783 = vpop.f32.mrf.mxu0
        %784 = vmatprep.mubr.f32.mxu0 0.0
        %785 = vmatmul.mubr.f32.gmra.mxu0 %v664
        %v786 = vpop.f32.mrf.mxu0
        %v787 = vadd.f32 0.0, %v786
        %v788 = vpop.f32.mrf.mxu0
        %789 = vmatprep.mubr.f32.mxu0 0.0
        %790 = vmatmul.mubr.f32.gmra.mxu0 %v667
        %v791 = vpop.f32.mrf.mxu0
        %v792 = vadd.f32 0.0, %v791
        %v793 = vpop.f32.mrf.mxu0
        %794 = vmatprep.mubr.f32.mxu0 0.0
        %795 = vmatmul.mubr.f32.gmra.mxu0 %v670
        %v796 = vpop.f32.mrf.mxu0
        %v797 = vadd.f32 0.0, %v796
        %v798 = vpop.f32.mrf.mxu0
        %799 = vdwg.mxu0
        %v800 = vadd.f32 %v612, %v742
        %v801 = vadd.f32 %v613, %v747
        %v802 = vadd.f32 %v614, %v752
        %v803 = vadd.f32 %v615, %v757
        %v804 = vadd.f32 %v616, %v762
        %v805 = vadd.f32 %v617, %v767
        %v806 = vadd.f32 %v618, %v772
        %v807 = vadd.f32 %v619, %v777
        %v808 = vadd.f32 %v620, %v782
        %v809 = vadd.f32 %v621, %v787
        %v810 = vadd.f32 %v622, %v792
        %v811 = vadd.f32 %v623, %v797
        %v812 = vld [vmem:[%s221 + $0x12] sm:$0xff]
        %v813 = vld [vmem:[%s221 + $0x1a] sm:$0xff]
        %v814 = vld [vmem:[%s221 + $0x22] sm:$0xff]
        %v815 = vld [vmem:[%s221 + $0x2a] sm:$0xff]
        %v816 = vld [vmem:[%s221 + $0x32] sm:$0xff]
        %v817 = vld [vmem:[%s221 + $0x3a] sm:$0xff]
        %v818 = vld [vmem:[%s221 + $0x42] sm:$0xff]
        %v819 = vld [vmem:[%s221 + $0x4a] sm:$0xff]
        %v820 = vld [vmem:[%s221 + $0x52] sm:$0xff]
        %v821 = vld [vmem:[%s221 + $0x5a] sm:$0xff]
        %v822 = vld [vmem:[%s221 + $0x62] sm:$0xff]
        %v823 = vld [vmem:[%s221 + $0x6a] sm:$0xff]
        %v825 = vsel %vm258, %v812, 0
        %v828 = vsel %vm258, %v813, 0
        %v831 = vsel %vm258, %v814, 0
        %v834 = vsel %vm258, %v815, 0
        %v837 = vsel %vm258, %v816, 0
        %v840 = vsel %vm258, %v817, 0
        %v843 = vsel %vm258, %v818, 0
        %v846 = vsel %vm258, %v819, 0
        %v849 = vsel %vm258, %v820, 0
        %v852 = vsel %vm258, %v821, 0
        %v855 = vsel %vm258, %v822, 0
        %v858 = vsel %vm258, %v823, 0
        %v861 = vsel %vm295, %v228, 0
        %863 = vmatprep.subr.mxu0 0.0
        %864 = vmatpush1.msra.mxu0 0.0
        %865 = vmatprep.subr.mxu0 0.0
        %866 = vmatpush1.msra.mxu0 0.0
        %867 = vmatprep.subr.mxu0 0.0
        %868 = vmatpush1.msra.mxu0 0.0
        %869 = vmatprep.subr.mxu0 0.0
        %870 = vmatpush1.msra.mxu0 0.0
        %871 = vmatprep.subr.mxu0 0.0
        %872 = vmatpush1.msra.mxu0 0.0
        %873 = vmatprep.subr.mxu0 0.0
        %874 = vmatpush1.msra.mxu0 0.0
        %875 = vmatprep.subr.mxu0 0.0
        %876 = vmatpush1.msra.mxu0 0.0
        %877 = vmatprep.subr.mxu0 0.0
        %878 = vmatpush1.msra.mxu0 0.0
        %879 = vmatprep.subr.mxu0 0.0
        %880 = vmatpush1.msra.mxu0 0.0
        %881 = vmatprep.subr.mxu0 0.0
        %882 = vmatpush1.msra.mxu0 0.0
        %883 = vmatprep.subr.mxu0 0.0
        %884 = vmatpush1.msra.mxu0 0.0
        %885 = vmatprep.subr.mxu0 0.0
        %886 = vmatpush1.msra.mxu0 0.0
        %887 = vmatprep.subr.mxu0 0.0
        %888 = vmatpush1.msra.mxu0 0.0
        %889 = vmatprep.subr.mxu0 0.0
        %890 = vmatpush1.msra.mxu0 0.0
        %891 = vmatprep.subr.mxu0 0.0
        %892 = vmatpush1.msra.mxu0 0.0
        %893 = vmatprep.subr.mxu0 0.0
        %894 = vmatpush1.msra.mxu0 %v861
        %895 = vmatprep.subr.mxu0 0.0
        %896 = vmatpush2.msra.mxu0 0.0
        %897 = vmatprep.subr.mxu0 0.0
        %898 = vmatpush2.msra.mxu0 0.0
        %899 = vmatprep.subr.mxu0 0.0
        %900 = vmatpush2.msra.mxu0 0.0
        %901 = vmatprep.subr.mxu0 0.0
        %902 = vmatpush2.msra.mxu0 0.0
        %903 = vmatprep.subr.mxu0 0.0
        %904 = vmatpush2.msra.mxu0 0.0
        %905 = vmatprep.subr.mxu0 0.0
        %906 = vmatpush2.msra.mxu0 0.0
        %907 = vmatprep.subr.mxu0 0.0
        %908 = vmatpush2.msra.mxu0 0.0
        %909 = vmatprep.subr.mxu0 0.0
        %910 = vmatpush2.msra.mxu0 0.0
        %911 = vmatprep.subr.mxu0 0.0
        %912 = vmatpush2.msra.mxu0 0.0
        %913 = vmatprep.subr.mxu0 0.0
        %914 = vmatpush2.msra.mxu0 0.0
        %915 = vmatprep.subr.mxu0 0.0
        %916 = vmatpush2.msra.mxu0 0.0
        %917 = vmatprep.subr.mxu0 0.0
        %918 = vmatpush2.msra.mxu0 0.0
        %919 = vmatprep.subr.mxu0 0.0
        %920 = vmatpush2.msra.mxu0 0.0
        %921 = vmatprep.subr.mxu0 0.0
        %922 = vmatpush2.msra.mxu0 0.0
        %923 = vmatprep.subr.mxu0 0.0
        %924 = vmatpush2.msra.mxu0 0.0
        %925 = vmatprep.subr.mxu0 0.0
        %926 = vmatpush2.msra.mxu0 0.0
        %927 = vmatprep.mubr.f32.mxu0 0.0
        %928 = vmatmul.mubr.f32.gmra.mxu0 %v825
        %v929 = vpop.f32.mrf.mxu0
        %v930 = vadd.f32 0.0, %v929
        %v931 = vpop.f32.mrf.mxu0
        %932 = vmatprep.mubr.f32.mxu0 0.0
        %933 = vmatmul.mubr.f32.gmra.mxu0 %v828
        %v934 = vpop.f32.mrf.mxu0
        %v935 = vadd.f32 0.0, %v934
        %v936 = vpop.f32.mrf.mxu0
        %937 = vmatprep.mubr.f32.mxu0 0.0
        %938 = vmatmul.mubr.f32.gmra.mxu0 %v831
        %v939 = vpop.f32.mrf.mxu0
        %v940 = vadd.f32 0.0, %v939
        %v941 = vpop.f32.mrf.mxu0
        %942 = vmatprep.mubr.f32.mxu0 0.0
        %943 = vmatmul.mubr.f32.gmra.mxu0 %v834
        %v944 = vpop.f32.mrf.mxu0
        %v945 = vadd.f32 0.0, %v944
        %v946 = vpop.f32.mrf.mxu0
        %947 = vmatprep.mubr.f32.mxu0 0.0
        %948 = vmatmul.mubr.f32.gmra.mxu0 %v837
        %v949 = vpop.f32.mrf.mxu0
        %v950 = vadd.f32 0.0, %v949
        %v951 = vpop.f32.mrf.mxu0
        %952 = vmatprep.mubr.f32.mxu0 0.0
        %953 = vmatmul.mubr.f32.gmra.mxu0 %v840
        %v954 = vpop.f32.mrf.mxu0
        %v955 = vadd.f32 0.0, %v954
        %v956 = vpop.f32.mrf.mxu0
        %957 = vmatprep.mubr.f32.mxu0 0.0
        %958 = vmatmul.mubr.f32.gmra.mxu0 %v843
        %v959 = vpop.f32.mrf.mxu0
        %v960 = vadd.f32 0.0, %v959
        %v961 = vpop.f32.mrf.mxu0
        %962 = vmatprep.mubr.f32.mxu0 0.0
        %963 = vmatmul.mubr.f32.gmra.mxu0 %v846
        %v964 = vpop.f32.mrf.mxu0
        %v965 = vadd.f32 0.0, %v964
        %v966 = vpop.f32.mrf.mxu0
        %967 = vmatprep.mubr.f32.mxu0 0.0
        %968 = vmatmul.mubr.f32.gmra.mxu0 %v849
        %v969 = vpop.f32.mrf.mxu0
        %v970 = vadd.f32 0.0, %v969
        %v971 = vpop.f32.mrf.mxu0
        %972 = vmatprep.mubr.f32.mxu0 0.0
        %973 = vmatmul.mubr.f32.gmra.mxu0 %v852
        %v974 = vpop.f32.mrf.mxu0
        %v975 = vadd.f32 0.0, %v974
        %v976 = vpop.f32.mrf.mxu0
        %977 = vmatprep.mubr.f32.mxu0 0.0
        %978 = vmatmul.mubr.f32.gmra.mxu0 %v855
        %v979 = vpop.f32.mrf.mxu0
        %v980 = vadd.f32 0.0, %v979
        %v981 = vpop.f32.mrf.mxu0
        %982 = vmatprep.mubr.f32.mxu0 0.0
        %983 = vmatmul.mubr.f32.gmra.mxu0 %v858
        %v984 = vpop.f32.mrf.mxu0
        %v985 = vadd.f32 0.0, %v984
        %v986 = vpop.f32.mrf.mxu0
        %987 = vdwg.mxu0
        %v988 = vadd.f32 %v800, %v930
        %v989 = vadd.f32 %v801, %v935
        %v990 = vadd.f32 %v802, %v940
        %v991 = vadd.f32 %v803, %v945
        %v992 = vadd.f32 %v804, %v950
        %v993 = vadd.f32 %v805, %v955
        %v994 = vadd.f32 %v806, %v960
        %v995 = vadd.f32 %v807, %v965
        %v996 = vadd.f32 %v808, %v970
        %v997 = vadd.f32 %v809, %v975
        %v998 = vadd.f32 %v810, %v980
        %v999 = vadd.f32 %v811, %v985
        %v1000 = vld [vmem:[%s221 + $0x13] sm:$0xff]
        %v1001 = vld [vmem:[%s221 + $0x1b] sm:$0xff]
        %v1002 = vld [vmem:[%s221 + $0x23] sm:$0xff]
        %v1003 = vld [vmem:[%s221 + $0x2b] sm:$0xff]
        %v1004 = vld [vmem:[%s221 + $0x33] sm:$0xff]
        %v1005 = vld [vmem:[%s221 + $0x3b] sm:$0xff]
        %v1006 = vld [vmem:[%s221 + $0x43] sm:$0xff]
        %v1007 = vld [vmem:[%s221 + $0x4b] sm:$0xff]
        %v1008 = vld [vmem:[%s221 + $0x53] sm:$0xff]
        %v1009 = vld [vmem:[%s221 + $0x5b] sm:$0xff]
        %v1010 = vld [vmem:[%s221 + $0x63] sm:$0xff]
        %v1011 = vld [vmem:[%s221 + $0x6b] sm:$0xff]
        %v1013 = vsel %vm258, %v1000, 0
        %v1016 = vsel %vm258, %v1001, 0
        %v1019 = vsel %vm258, %v1002, 0
        %v1022 = vsel %vm258, %v1003, 0
        %v1025 = vsel %vm258, %v1004, 0
        %v1028 = vsel %vm258, %v1005, 0
        %v1031 = vsel %vm258, %v1006, 0
        %v1034 = vsel %vm258, %v1007, 0
        %v1037 = vsel %vm258, %v1008, 0
        %v1040 = vsel %vm258, %v1009, 0
        %v1043 = vsel %vm258, %v1010, 0
        %v1046 = vsel %vm258, %v1011, 0
        %v1049 = vsel %vm295, %v230, 0
        %1051 = vmatprep.subr.mxu0 0.0
        %1052 = vmatpush1.msra.mxu0 0.0
        %1053 = vmatprep.subr.mxu0 0.0
        %1054 = vmatpush1.msra.mxu0 0.0
        %1055 = vmatprep.subr.mxu0 0.0
        %1056 = vmatpush1.msra.mxu0 0.0
        %1057 = vmatprep.subr.mxu0 0.0
        %1058 = vmatpush1.msra.mxu0 0.0
        %1059 = vmatprep.subr.mxu0 0.0
        %1060 = vmatpush1.msra.mxu0 0.0
        %1061 = vmatprep.subr.mxu0 0.0
        %1062 = vmatpush1.msra.mxu0 0.0
        %1063 = vmatprep.subr.mxu0 0.0
        %1064 = vmatpush1.msra.mxu0 0.0
        %1065 = vmatprep.subr.mxu0 0.0
        %1066 = vmatpush1.msra.mxu0 0.0
        %1067 = vmatprep.subr.mxu0 0.0
        %1068 = vmatpush1.msra.mxu0 0.0
        %1069 = vmatprep.subr.mxu0 0.0
        %1070 = vmatpush1.msra.mxu0 0.0
        %1071 = vmatprep.subr.mxu0 0.0
        %1072 = vmatpush1.msra.mxu0 0.0
        %1073 = vmatprep.subr.mxu0 0.0
        %1074 = vmatpush1.msra.mxu0 0.0
        %1075 = vmatprep.subr.mxu0 0.0
        %1076 = vmatpush1.msra.mxu0 0.0
        %1077 = vmatprep.subr.mxu0 0.0
        %1078 = vmatpush1.msra.mxu0 0.0
        %1079 = vmatprep.subr.mxu0 0.0
        %1080 = vmatpush1.msra.mxu0 0.0
        %1081 = vmatprep.subr.mxu0 0.0
        %1082 = vmatpush1.msra.mxu0 %v1049
        %1083 = vmatprep.subr.mxu0 0.0
        %1084 = vmatpush2.msra.mxu0 0.0
        %1085 = vmatprep.subr.mxu0 0.0
        %1086 = vmatpush2.msra.mxu0 0.0
        %1087 = vmatprep.subr.mxu0 0.0
        %1088 = vmatpush2.msra.mxu0 0.0
        %1089 = vmatprep.subr.mxu0 0.0
        %1090 = vmatpush2.msra.mxu0 0.0
        %1091 = vmatprep.subr.mxu0 0.0
        %1092 = vmatpush2.msra.mxu0 0.0
        %1093 = vmatprep.subr.mxu0 0.0
        %1094 = vmatpush2.msra.mxu0 0.0
        %1095 = vmatprep.subr.mxu0 0.0
        %1096 = vmatpush2.msra.mxu0 0.0
        %1097 = vmatprep.subr.mxu0 0.0
        %1098 = vmatpush2.msra.mxu0 0.0
        %1099 = vmatprep.subr.mxu0 0.0
        %1100 = vmatpush2.msra.mxu0 0.0
        %1101 = vmatprep.subr.mxu0 0.0
        %1102 = vmatpush2.msra.mxu0 0.0
        %1103 = vmatprep.subr.mxu0 0.0
        %1104 = vmatpush2.msra.mxu0 0.0
        %1105 = vmatprep.subr.mxu0 0.0
        %1106 = vmatpush2.msra.mxu0 0.0
        %1107 = vmatprep.subr.mxu0 0.0
        %1108 = vmatpush2.msra.mxu0 0.0
        %1109 = vmatprep.subr.mxu0 0.0
        %1110 = vmatpush2.msra.mxu0 0.0
        %1111 = vmatprep.subr.mxu0 0.0
        %1112 = vmatpush2.msra.mxu0 0.0
        %1113 = vmatprep.subr.mxu0 0.0
        %1114 = vmatpush2.msra.mxu0 0.0
        %1115 = vmatprep.mubr.f32.mxu0 0.0
        %1116 = vmatmul.mubr.f32.gmra.mxu0 %v1013
        %v1117 = vpop.f32.mrf.mxu0
        %v1118 = vadd.f32 0.0, %v1117
        %v1119 = vpop.f32.mrf.mxu0
        %1120 = vmatprep.mubr.f32.mxu0 0.0
        %1121 = vmatmul.mubr.f32.gmra.mxu0 %v1016
        %v1122 = vpop.f32.mrf.mxu0
        %v1123 = vadd.f32 0.0, %v1122
        %v1124 = vpop.f32.mrf.mxu0
        %1125 = vmatprep.mubr.f32.mxu0 0.0
        %1126 = vmatmul.mubr.f32.gmra.mxu0 %v1019
        %v1127 = vpop.f32.mrf.mxu0
        %v1128 = vadd.f32 0.0, %v1127
        %v1129 = vpop.f32.mrf.mxu0
        %1130 = vmatprep.mubr.f32.mxu0 0.0
        %1131 = vmatmul.mubr.f32.gmra.mxu0 %v1022
        %v1132 = vpop.f32.mrf.mxu0
        %v1133 = vadd.f32 0.0, %v1132
        %v1134 = vpop.f32.mrf.mxu0
        %1135 = vmatprep.mubr.f32.mxu0 0.0
        %1136 = vmatmul.mubr.f32.gmra.mxu0 %v1025
        %v1137 = vpop.f32.mrf.mxu0
        %v1138 = vadd.f32 0.0, %v1137
        %v1139 = vpop.f32.mrf.mxu0
        %1140 = vmatprep.mubr.f32.mxu0 0.0
        %1141 = vmatmul.mubr.f32.gmra.mxu0 %v1028
        %v1142 = vpop.f32.mrf.mxu0
        %v1143 = vadd.f32 0.0, %v1142
        %v1144 = vpop.f32.mrf.mxu0
        %1145 = vmatprep.mubr.f32.mxu0 0.0
        %1146 = vmatmul.mubr.f32.gmra.mxu0 %v1031
        %v1147 = vpop.f32.mrf.mxu0
        %v1148 = vadd.f32 0.0, %v1147
        %v1149 = vpop.f32.mrf.mxu0
        %1150 = vmatprep.mubr.f32.mxu0 0.0
        %1151 = vmatmul.mubr.f32.gmra.mxu0 %v1034
        %v1152 = vpop.f32.mrf.mxu0
        %v1153 = vadd.f32 0.0, %v1152
        %v1154 = vpop.f32.mrf.mxu0
        %1155 = vmatprep.mubr.f32.mxu0 0.0
        %1156 = vmatmul.mubr.f32.gmra.mxu0 %v1037
        %v1157 = vpop.f32.mrf.mxu0
        %v1158 = vadd.f32 0.0, %v1157
        %v1159 = vpop.f32.mrf.mxu0
        %1160 = vmatprep.mubr.f32.mxu0 0.0
        %1161 = vmatmul.mubr.f32.gmra.mxu0 %v1040
        %v1162 = vpop.f32.mrf.mxu0
        %v1163 = vadd.f32 0.0, %v1162
        %v1164 = vpop.f32.mrf.mxu0
        %1165 = vmatprep.mubr.f32.mxu0 0.0
        %1166 = vmatmul.mubr.f32.gmra.mxu0 %v1043
        %v1167 = vpop.f32.mrf.mxu0
        %v1168 = vadd.f32 0.0, %v1167
        %v1169 = vpop.f32.mrf.mxu0
        %1170 = vmatprep.mubr.f32.mxu0 0.0
        %1171 = vmatmul.mubr.f32.gmra.mxu0 %v1046
        %v1172 = vpop.f32.mrf.mxu0
        %v1173 = vadd.f32 0.0, %v1172
        %v1174 = vpop.f32.mrf.mxu0
        %1175 = vdwg.mxu0
        %v1176 = vadd.f32 %v988, %v1118
        %v1177 = vadd.f32 %v989, %v1123
        %v1178 = vadd.f32 %v990, %v1128
        %v1179 = vadd.f32 %v991, %v1133
        %v1180 = vadd.f32 %v992, %v1138
        %v1181 = vadd.f32 %v993, %v1143
        %v1182 = vadd.f32 %v994, %v1148
        %v1183 = vadd.f32 %v995, %v1153
        %v1184 = vadd.f32 %v996, %v1158
        %v1185 = vadd.f32 %v997, %v1163
        %v1186 = vadd.f32 %v998, %v1168
        %v1187 = vadd.f32 %v999, %v1173
        %v1188 = vld [vmem:[%s221 + $0x14] sm:$0xff]
        %v1189 = vld [vmem:[%s221 + $0x1c] sm:$0xff]
        %v1190 = vld [vmem:[%s221 + $0x24] sm:$0xff]
        %v1191 = vld [vmem:[%s221 + $0x2c] sm:$0xff]
        %v1192 = vld [vmem:[%s221 + $0x34] sm:$0xff]
        %v1193 = vld [vmem:[%s221 + $0x3c] sm:$0xff]
        %v1194 = vld [vmem:[%s221 + $0x44] sm:$0xff]
        %v1195 = vld [vmem:[%s221 + $0x4c] sm:$0xff]
        %v1196 = vld [vmem:[%s221 + $0x54] sm:$0xff]
        %v1197 = vld [vmem:[%s221 + $0x5c] sm:$0xff]
        %v1198 = vld [vmem:[%s221 + $0x64] sm:$0xff]
        %v1199 = vld [vmem:[%s221 + $0x6c] sm:$0xff]
        %v1201 = vsel %vm258, %v1188, 0
        %v1204 = vsel %vm258, %v1189, 0
        %v1207 = vsel %vm258, %v1190, 0
        %v1210 = vsel %vm258, %v1191, 0
        %v1213 = vsel %vm258, %v1192, 0
        %v1216 = vsel %vm258, %v1193, 0
        %v1219 = vsel %vm258, %v1194, 0
        %v1222 = vsel %vm258, %v1195, 0
        %v1225 = vsel %vm258, %v1196, 0
        %v1228 = vsel %vm258, %v1197, 0
        %v1231 = vsel %vm258, %v1198, 0
        %v1234 = vsel %vm258, %v1199, 0
        %v1237 = vsel %vm295, %v232, 0
        %1239 = vmatprep.subr.mxu0 0.0
        %1240 = vmatpush1.msra.mxu0 0.0
        %1241 = vmatprep.subr.mxu0 0.0
        %1242 = vmatpush1.msra.mxu0 0.0
        %1243 = vmatprep.subr.mxu0 0.0
        %1244 = vmatpush1.msra.mxu0 0.0
        %1245 = vmatprep.subr.mxu0 0.0
        %1246 = vmatpush1.msra.mxu0 0.0
        %1247 = vmatprep.subr.mxu0 0.0
        %1248 = vmatpush1.msra.mxu0 0.0
        %1249 = vmatprep.subr.mxu0 0.0
        %1250 = vmatpush1.msra.mxu0 0.0
        %1251 = vmatprep.subr.mxu0 0.0
        %1252 = vmatpush1.msra.mxu0 0.0
        %1253 = vmatprep.subr.mxu0 0.0
        %1254 = vmatpush1.msra.mxu0 0.0
        %1255 = vmatprep.subr.mxu0 0.0
        %1256 = vmatpush1.msra.mxu0 0.0
        %1257 = vmatprep.subr.mxu0 0.0
        %1258 = vmatpush1.msra.mxu0 0.0
        %1259 = vmatprep.subr.mxu0 0.0
        %1260 = vmatpush1.msra.mxu0 0.0
        %1261 = vmatprep.subr.mxu0 0.0
        %1262 = vmatpush1.msra.mxu0 0.0
        %1263 = vmatprep.subr.mxu0 0.0
        %1264 = vmatpush1.msra.mxu0 0.0
        %1265 = vmatprep.subr.mxu0 0.0
        %1266 = vmatpush1.msra.mxu0 0.0
        %1267 = vmatprep.subr.mxu0 0.0
        %1268 = vmatpush1.msra.mxu0 0.0
        %1269 = vmatprep.subr.mxu0 0.0
        %1270 = vmatpush1.msra.mxu0 %v1237
        %1271 = vmatprep.subr.mxu0 0.0
        %1272 = vmatpush2.msra.mxu0 0.0
        %1273 = vmatprep.subr.mxu0 0.0
        %1274 = vmatpush2.msra.mxu0 0.0
        %1275 = vmatprep.subr.mxu0 0.0
        %1276 = vmatpush2.msra.mxu0 0.0
        %1277 = vmatprep.subr.mxu0 0.0
        %1278 = vmatpush2.msra.mxu0 0.0
        %1279 = vmatprep.subr.mxu0 0.0
        %1280 = vmatpush2.msra.mxu0 0.0
        %1281 = vmatprep.subr.mxu0 0.0
        %1282 = vmatpush2.msra.mxu0 0.0
        %1283 = vmatprep.subr.mxu0 0.0
        %1284 = vmatpush2.msra.mxu0 0.0
        %1285 = vmatprep.subr.mxu0 0.0
        %1286 = vmatpush2.msra.mxu0 0.0
        %1287 = vmatprep.subr.mxu0 0.0
        %1288 = vmatpush2.msra.mxu0 0.0
        %1289 = vmatprep.subr.mxu0 0.0
        %1290 = vmatpush2.msra.mxu0 0.0
        %1291 = vmatprep.subr.mxu0 0.0
        %1292 = vmatpush2.msra.mxu0 0.0
        %1293 = vmatprep.subr.mxu0 0.0
        %1294 = vmatpush2.msra.mxu0 0.0
        %1295 = vmatprep.subr.mxu0 0.0
        %1296 = vmatpush2.msra.mxu0 0.0
        %1297 = vmatprep.subr.mxu0 0.0
        %1298 = vmatpush2.msra.mxu0 0.0
        %1299 = vmatprep.subr.mxu0 0.0
        %1300 = vmatpush2.msra.mxu0 0.0
        %1301 = vmatprep.subr.mxu0 0.0
        %1302 = vmatpush2.msra.mxu0 0.0
        %1303 = vmatprep.mubr.f32.mxu0 0.0
        %1304 = vmatmul.mubr.f32.gmra.mxu0 %v1201
        %v1305 = vpop.f32.mrf.mxu0
        %v1306 = vadd.f32 0.0, %v1305
        %v1307 = vpop.f32.mrf.mxu0
        %1308 = vmatprep.mubr.f32.mxu0 0.0
        %1309 = vmatmul.mubr.f32.gmra.mxu0 %v1204
        %v1310 = vpop.f32.mrf.mxu0
        %v1311 = vadd.f32 0.0, %v1310
        %v1312 = vpop.f32.mrf.mxu0
        %1313 = vmatprep.mubr.f32.mxu0 0.0
        %1314 = vmatmul.mubr.f32.gmra.mxu0 %v1207
        %v1315 = vpop.f32.mrf.mxu0
        %v1316 = vadd.f32 0.0, %v1315
        %v1317 = vpop.f32.mrf.mxu0
        %1318 = vmatprep.mubr.f32.mxu0 0.0
        %1319 = vmatmul.mubr.f32.gmra.mxu0 %v1210
        %v1320 = vpop.f32.mrf.mxu0
        %v1321 = vadd.f32 0.0, %v1320
        %v1322 = vpop.f32.mrf.mxu0
        %1323 = vmatprep.mubr.f32.mxu0 0.0
        %1324 = vmatmul.mubr.f32.gmra.mxu0 %v1213
        %v1325 = vpop.f32.mrf.mxu0
        %v1326 = vadd.f32 0.0, %v1325
        %v1327 = vpop.f32.mrf.mxu0
        %1328 = vmatprep.mubr.f32.mxu0 0.0
        %1329 = vmatmul.mubr.f32.gmra.mxu0 %v1216
        %v1330 = vpop.f32.mrf.mxu0
        %v1331 = vadd.f32 0.0, %v1330
        %v1332 = vpop.f32.mrf.mxu0
        %1333 = vmatprep.mubr.f32.mxu0 0.0
        %1334 = vmatmul.mubr.f32.gmra.mxu0 %v1219
        %v1335 = vpop.f32.mrf.mxu0
        %v1336 = vadd.f32 0.0, %v1335
        %v1337 = vpop.f32.mrf.mxu0
        %1338 = vmatprep.mubr.f32.mxu0 0.0
        %1339 = vmatmul.mubr.f32.gmra.mxu0 %v1222
        %v1340 = vpop.f32.mrf.mxu0
        %v1341 = vadd.f32 0.0, %v1340
        %v1342 = vpop.f32.mrf.mxu0
        %1343 = vmatprep.mubr.f32.mxu0 0.0
        %1344 = vmatmul.mubr.f32.gmra.mxu0 %v1225
        %v1345 = vpop.f32.mrf.mxu0
        %v1346 = vadd.f32 0.0, %v1345
        %v1347 = vpop.f32.mrf.mxu0
        %1348 = vmatprep.mubr.f32.mxu0 0.0
        %1349 = vmatmul.mubr.f32.gmra.mxu0 %v1228
        %v1350 = vpop.f32.mrf.mxu0
        %v1351 = vadd.f32 0.0, %v1350
        %v1352 = vpop.f32.mrf.mxu0
        %1353 = vmatprep.mubr.f32.mxu0 0.0
        %1354 = vmatmul.mubr.f32.gmra.mxu0 %v1231
        %v1355 = vpop.f32.mrf.mxu0
        %v1356 = vadd.f32 0.0, %v1355
        %v1357 = vpop.f32.mrf.mxu0
        %1358 = vmatprep.mubr.f32.mxu0 0.0
        %1359 = vmatmul.mubr.f32.gmra.mxu0 %v1234
        %v1360 = vpop.f32.mrf.mxu0
        %v1361 = vadd.f32 0.0, %v1360
        %v1362 = vpop.f32.mrf.mxu0
        %1363 = vdwg.mxu0
        %v1364 = vadd.f32 %v1176, %v1306
        %v1365 = vadd.f32 %v1177, %v1311
        %v1366 = vadd.f32 %v1178, %v1316
        %v1367 = vadd.f32 %v1179, %v1321
        %v1368 = vadd.f32 %v1180, %v1326
        %v1369 = vadd.f32 %v1181, %v1331
        %v1370 = vadd.f32 %v1182, %v1336
        %v1371 = vadd.f32 %v1183, %v1341
        %v1372 = vadd.f32 %v1184, %v1346
        %v1373 = vadd.f32 %v1185, %v1351
        %v1374 = vadd.f32 %v1186, %v1356
        %v1375 = vadd.f32 %v1187, %v1361
        %v1376 = vld [vmem:[%s221 + $0x24] sm:$0xff]
        %v1377 = vld [vmem:[%s221 + $0x2c] sm:$0xff]
        %v1378 = vld [vmem:[%s221 + $0x34] sm:$0xff]
        %v1379 = vld [vmem:[%s221 + $0x3c] sm:$0xff]
        %v1380 = vld [vmem:[%s221 + $0x44] sm:$0xff]
        %v1381 = vld [vmem:[%s221 + $0x4c] sm:$0xff]
        %v1382 = vld [vmem:[%s221 + $0x54] sm:$0xff]
        %v1383 = vld [vmem:[%s221 + $0x5c] sm:$0xff]
        %v1384 = vld [vmem:[%s221 + $0x64] sm:$0xff]
        %v1385 = vld [vmem:[%s221 + $0x6c] sm:$0xff]
        %v1386 = vld [vmem:[%s221 + $0x74] sm:$0xff]
        %v1387 = vld [vmem:[%s221 + $0x7c] sm:$0xff]
        %v1389 = vsel %vm258, %v1376, 0
        %v1392 = vsel %vm258, %v1377, 0
        %v1395 = vsel %vm258, %v1378, 0
        %v1398 = vsel %vm258, %v1379, 0
        %v1401 = vsel %vm258, %v1380, 0
        %v1404 = vsel %vm258, %v1381, 0
        %v1407 = vsel %vm258, %v1382, 0
        %v1410 = vsel %vm258, %v1383, 0
        %v1413 = vsel %vm258, %v1384, 0
        %v1416 = vsel %vm258, %v1385, 0
        %v1419 = vsel %vm258, %v1386, 0
        %v1422 = vsel %vm258, %v1387, 0
        %v1425 = vsel %vm295, %v234, 0
        %1427 = vmatprep.subr.mxu0 0.0
        %1428 = vmatpush1.msra.mxu0 0.0
        %1429 = vmatprep.subr.mxu0 0.0
        %1430 = vmatpush1.msra.mxu0 0.0
        %1431 = vmatprep.subr.mxu0 0.0
        %1432 = vmatpush1.msra.mxu0 0.0
        %1433 = vmatprep.subr.mxu0 0.0
        %1434 = vmatpush1.msra.mxu0 0.0
        %1435 = vmatprep.subr.mxu0 0.0
        %1436 = vmatpush1.msra.mxu0 0.0
        %1437 = vmatprep.subr.mxu0 0.0
        %1438 = vmatpush1.msra.mxu0 0.0
        %1439 = vmatprep.subr.mxu0 0.0
        %1440 = vmatpush1.msra.mxu0 0.0
        %1441 = vmatprep.subr.mxu0 0.0
        %1442 = vmatpush1.msra.mxu0 0.0
        %1443 = vmatprep.subr.mxu0 0.0
        %1444 = vmatpush1.msra.mxu0 0.0
        %1445 = vmatprep.subr.mxu0 0.0
        %1446 = vmatpush1.msra.mxu0 0.0
        %1447 = vmatprep.subr.mxu0 0.0
        %1448 = vmatpush1.msra.mxu0 0.0
        %1449 = vmatprep.subr.mxu0 0.0
        %1450 = vmatpush1.msra.mxu0 0.0
        %1451 = vmatprep.subr.mxu0 0.0
        %1452 = vmatpush1.msra.mxu0 0.0
        %1453 = vmatprep.subr.mxu0 0.0
        %1454 = vmatpush1.msra.mxu0 0.0
        %1455 = vmatprep.subr.mxu0 0.0
        %1456 = vmatpush1.msra.mxu0 0.0
        %1457 = vmatprep.subr.mxu0 0.0
        %1458 = vmatpush1.msra.mxu0 %v1425
        %1459 = vmatprep.subr.mxu0 0.0
        %1460 = vmatpush2.msra.mxu0 0.0
        %1461 = vmatprep.subr.mxu0 0.0
        %1462 = vmatpush2.msra.mxu0 0.0
        %1463 = vmatprep.subr.mxu0 0.0
        %1464 = vmatpush2.msra.mxu0 0.0
        %1465 = vmatprep.subr.mxu0 0.0
        %1466 = vmatpush2.msra.mxu0 0.0
        %1467 = vmatprep.subr.mxu0 0.0
        %1468 = vmatpush2.msra.mxu0 0.0
        %1469 = vmatprep.subr.mxu0 0.0
        %1470 = vmatpush2.msra.mxu0 0.0
        %1471 = vmatprep.subr.mxu0 0.0
        %1472 = vmatpush2.msra.mxu0 0.0
        %1473 = vmatprep.subr.mxu0 0.0
        %1474 = vmatpush2.msra.mxu0 0.0
        %1475 = vmatprep.subr.mxu0 0.0
        %1476 = vmatpush2.msra.mxu0 0.0
        %1477 = vmatprep.subr.mxu0 0.0
        %1478 = vmatpush2.msra.mxu0 0.0
        %1479 = vmatprep.subr.mxu0 0.0
        %1480 = vmatpush2.msra.mxu0 0.0
        %1481 = vmatprep.subr.mxu0 0.0
        %1482 = vmatpush2.msra.mxu0 0.0
        %1483 = vmatprep.subr.mxu0 0.0
        %1484 = vmatpush2.msra.mxu0 0.0
        %1485 = vmatprep.subr.mxu0 0.0
        %1486 = vmatpush2.msra.mxu0 0.0
        %1487 = vmatprep.subr.mxu0 0.0
        %1488 = vmatpush2.msra.mxu0 0.0
        %1489 = vmatprep.subr.mxu0 0.0
        %1490 = vmatpush2.msra.mxu0 0.0
        %1491 = vmatprep.mubr.f32.mxu0 0.0
        %1492 = vmatmul.mubr.f32.gmra.mxu0 %v1389
        %v1493 = vpop.f32.mrf.mxu0
        %v1494 = vadd.f32 0.0, %v1493
        %v1495 = vpop.f32.mrf.mxu0
        %1496 = vmatprep.mubr.f32.mxu0 0.0
        %1497 = vmatmul.mubr.f32.gmra.mxu0 %v1392
        %v1498 = vpop.f32.mrf.mxu0
        %v1499 = vadd.f32 0.0, %v1498
        %v1500 = vpop.f32.mrf.mxu0
        %1501 = vmatprep.mubr.f32.mxu0 0.0
        %1502 = vmatmul.mubr.f32.gmra.mxu0 %v1395
        %v1503 = vpop.f32.mrf.mxu0
        %v1504 = vadd.f32 0.0, %v1503
        %v1505 = vpop.f32.mrf.mxu0
        %1506 = vmatprep.mubr.f32.mxu0 0.0
        %1507 = vmatmul.mubr.f32.gmra.mxu0 %v1398
        %v1508 = vpop.f32.mrf.mxu0
        %v1509 = vadd.f32 0.0, %v1508
        %v1510 = vpop.f32.mrf.mxu0
        %1511 = vmatprep.mubr.f32.mxu0 0.0
        %1512 = vmatmul.mubr.f32.gmra.mxu0 %v1401
        %v1513 = vpop.f32.mrf.mxu0
        %v1514 = vadd.f32 0.0, %v1513
        %v1515 = vpop.f32.mrf.mxu0
        %1516 = vmatprep.mubr.f32.mxu0 0.0
        %1517 = vmatmul.mubr.f32.gmra.mxu0 %v1404
        %v1518 = vpop.f32.mrf.mxu0
        %v1519 = vadd.f32 0.0, %v1518
        %v1520 = vpop.f32.mrf.mxu0
        %1521 = vmatprep.mubr.f32.mxu0 0.0
        %1522 = vmatmul.mubr.f32.gmra.mxu0 %v1407
        %v1523 = vpop.f32.mrf.mxu0
        %v1524 = vadd.f32 0.0, %v1523
        %v1525 = vpop.f32.mrf.mxu0
        %1526 = vmatprep.mubr.f32.mxu0 0.0
        %1527 = vmatmul.mubr.f32.gmra.mxu0 %v1410
        %v1528 = vpop.f32.mrf.mxu0
        %v1529 = vadd.f32 0.0, %v1528
        %v1530 = vpop.f32.mrf.mxu0
        %1531 = vmatprep.mubr.f32.mxu0 0.0
        %1532 = vmatmul.mubr.f32.gmra.mxu0 %v1413
        %v1533 = vpop.f32.mrf.mxu0
        %v1534 = vadd.f32 0.0, %v1533
        %v1535 = vpop.f32.mrf.mxu0
        %1536 = vmatprep.mubr.f32.mxu0 0.0
        %1537 = vmatmul.mubr.f32.gmra.mxu0 %v1416
        %v1538 = vpop.f32.mrf.mxu0
        %v1539 = vadd.f32 0.0, %v1538
        %v1540 = vpop.f32.mrf.mxu0
        %1541 = vmatprep.mubr.f32.mxu0 0.0
        %1542 = vmatmul.mubr.f32.gmra.mxu0 %v1419
        %v1543 = vpop.f32.mrf.mxu0
        %v1544 = vadd.f32 0.0, %v1543
        %v1545 = vpop.f32.mrf.mxu0
        %1546 = vmatprep.mubr.f32.mxu0 0.0
        %1547 = vmatmul.mubr.f32.gmra.mxu0 %v1422
        %v1548 = vpop.f32.mrf.mxu0
        %v1549 = vadd.f32 0.0, %v1548
        %v1550 = vpop.f32.mrf.mxu0
        %1551 = vdwg.mxu0
        %v1552 = vadd.f32 %v1364, %v1494
        %v1553 = vadd.f32 %v1365, %v1499
        %v1554 = vadd.f32 %v1366, %v1504
        %v1555 = vadd.f32 %v1367, %v1509
        %v1556 = vadd.f32 %v1368, %v1514
        %v1557 = vadd.f32 %v1369, %v1519
        %v1558 = vadd.f32 %v1370, %v1524
        %v1559 = vadd.f32 %v1371, %v1529
        %v1560 = vadd.f32 %v1372, %v1534
        %v1561 = vadd.f32 %v1373, %v1539
        %v1562 = vadd.f32 %v1374, %v1544
        %v1563 = vadd.f32 %v1375, %v1549
        %v1564 = vld [vmem:[%s221 + $0x25] sm:$0xff]
        %v1565 = vld [vmem:[%s221 + $0x2d] sm:$0xff]
        %v1566 = vld [vmem:[%s221 + $0x35] sm:$0xff]
        %v1567 = vld [vmem:[%s221 + $0x3d] sm:$0xff]
        %v1568 = vld [vmem:[%s221 + $0x45] sm:$0xff]
        %v1569 = vld [vmem:[%s221 + $0x4d] sm:$0xff]
        %v1570 = vld [vmem:[%s221 + $0x55] sm:$0xff]
        %v1571 = vld [vmem:[%s221 + $0x5d] sm:$0xff]
        %v1572 = vld [vmem:[%s221 + $0x65] sm:$0xff]
        %v1573 = vld [vmem:[%s221 + $0x6d] sm:$0xff]
        %v1574 = vld [vmem:[%s221 + $0x75] sm:$0xff]
        %v1575 = vld [vmem:[%s221 + $0x7d] sm:$0xff]
        %v1577 = vsel %vm258, %v1564, 0
        %v1580 = vsel %vm258, %v1565, 0
        %v1583 = vsel %vm258, %v1566, 0
        %v1586 = vsel %vm258, %v1567, 0
        %v1589 = vsel %vm258, %v1568, 0
        %v1592 = vsel %vm258, %v1569, 0
        %v1595 = vsel %vm258, %v1570, 0
        %v1598 = vsel %vm258, %v1571, 0
        %v1601 = vsel %vm258, %v1572, 0
        %v1604 = vsel %vm258, %v1573, 0
        %v1607 = vsel %vm258, %v1574, 0
        %v1610 = vsel %vm258, %v1575, 0
        %v1613 = vsel %vm295, %v236, 0
        %1615 = vmatprep.subr.mxu0 0.0
        %1616 = vmatpush1.msra.mxu0 0.0
        %1617 = vmatprep.subr.mxu0 0.0
        %1618 = vmatpush1.msra.mxu0 0.0
        %1619 = vmatprep.subr.mxu0 0.0
        %1620 = vmatpush1.msra.mxu0 0.0
        %1621 = vmatprep.subr.mxu0 0.0
        %1622 = vmatpush1.msra.mxu0 0.0
        %1623 = vmatprep.subr.mxu0 0.0
        %1624 = vmatpush1.msra.mxu0 0.0
        %1625 = vmatprep.subr.mxu0 0.0
        %1626 = vmatpush1.msra.mxu0 0.0
        %1627 = vmatprep.subr.mxu0 0.0
        %1628 = vmatpush1.msra.mxu0 0.0
        %1629 = vmatprep.subr.mxu0 0.0
        %1630 = vmatpush1.msra.mxu0 0.0
        %1631 = vmatprep.subr.mxu0 0.0
        %1632 = vmatpush1.msra.mxu0 0.0
        %1633 = vmatprep.subr.mxu0 0.0
        %1634 = vmatpush1.msra.mxu0 0.0
        %1635 = vmatprep.subr.mxu0 0.0
        %1636 = vmatpush1.msra.mxu0 0.0
        %1637 = vmatprep.subr.mxu0 0.0
        %1638 = vmatpush1.msra.mxu0 0.0
        %1639 = vmatprep.subr.mxu0 0.0
        %1640 = vmatpush1.msra.mxu0 0.0
        %1641 = vmatprep.subr.mxu0 0.0
        %1642 = vmatpush1.msra.mxu0 0.0
        %1643 = vmatprep.subr.mxu0 0.0
        %1644 = vmatpush1.msra.mxu0 0.0
        %1645 = vmatprep.subr.mxu0 0.0
        %1646 = vmatpush1.msra.mxu0 %v1613
        %1647 = vmatprep.subr.mxu0 0.0
        %1648 = vmatpush2.msra.mxu0 0.0
        %1649 = vmatprep.subr.mxu0 0.0
        %1650 = vmatpush2.msra.mxu0 0.0
        %1651 = vmatprep.subr.mxu0 0.0
        %1652 = vmatpush2.msra.mxu0 0.0
        %1653 = vmatprep.subr.mxu0 0.0
        %1654 = vmatpush2.msra.mxu0 0.0
        %1655 = vmatprep.subr.mxu0 0.0
        %1656 = vmatpush2.msra.mxu0 0.0
        %1657 = vmatprep.subr.mxu0 0.0
        %1658 = vmatpush2.msra.mxu0 0.0
        %1659 = vmatprep.subr.mxu0 0.0
        %1660 = vmatpush2.msra.mxu0 0.0
        %1661 = vmatprep.subr.mxu0 0.0
        %1662 = vmatpush2.msra.mxu0 0.0
        %1663 = vmatprep.subr.mxu0 0.0
        %1664 = vmatpush2.msra.mxu0 0.0
        %1665 = vmatprep.subr.mxu0 0.0
        %1666 = vmatpush2.msra.mxu0 0.0
        %1667 = vmatprep.subr.mxu0 0.0
        %1668 = vmatpush2.msra.mxu0 0.0
        %1669 = vmatprep.subr.mxu0 0.0
        %1670 = vmatpush2.msra.mxu0 0.0
        %1671 = vmatprep.subr.mxu0 0.0
        %1672 = vmatpush2.msra.mxu0 0.0
        %1673 = vmatprep.subr.mxu0 0.0
        %1674 = vmatpush2.msra.mxu0 0.0
        %1675 = vmatprep.subr.mxu0 0.0
        %1676 = vmatpush2.msra.mxu0 0.0
        %1677 = vmatprep.subr.mxu0 0.0
        %1678 = vmatpush2.msra.mxu0 0.0
        %1679 = vmatprep.mubr.f32.mxu0 0.0
        %1680 = vmatmul.mubr.f32.gmra.mxu0 %v1577
        %v1681 = vpop.f32.mrf.mxu0
        %v1682 = vadd.f32 0.0, %v1681
        %v1683 = vpop.f32.mrf.mxu0
        %1684 = vmatprep.mubr.f32.mxu0 0.0
        %1685 = vmatmul.mubr.f32.gmra.mxu0 %v1580
        %v1686 = vpop.f32.mrf.mxu0
        %v1687 = vadd.f32 0.0, %v1686
        %v1688 = vpop.f32.mrf.mxu0
        %1689 = vmatprep.mubr.f32.mxu0 0.0
        %1690 = vmatmul.mubr.f32.gmra.mxu0 %v1583
        %v1691 = vpop.f32.mrf.mxu0
        %v1692 = vadd.f32 0.0, %v1691
        %v1693 = vpop.f32.mrf.mxu0
        %1694 = vmatprep.mubr.f32.mxu0 0.0
        %1695 = vmatmul.mubr.f32.gmra.mxu0 %v1586
        %v1696 = vpop.f32.mrf.mxu0
        %v1697 = vadd.f32 0.0, %v1696
        %v1698 = vpop.f32.mrf.mxu0
        %1699 = vmatprep.mubr.f32.mxu0 0.0
        %1700 = vmatmul.mubr.f32.gmra.mxu0 %v1589
        %v1701 = vpop.f32.mrf.mxu0
        %v1702 = vadd.f32 0.0, %v1701
        %v1703 = vpop.f32.mrf.mxu0
        %1704 = vmatprep.mubr.f32.mxu0 0.0
        %1705 = vmatmul.mubr.f32.gmra.mxu0 %v1592
        %v1706 = vpop.f32.mrf.mxu0
        %v1707 = vadd.f32 0.0, %v1706
        %v1708 = vpop.f32.mrf.mxu0
        %1709 = vmatprep.mubr.f32.mxu0 0.0
        %1710 = vmatmul.mubr.f32.gmra.mxu0 %v1595
        %v1711 = vpop.f32.mrf.mxu0
        %v1712 = vadd.f32 0.0, %v1711
        %v1713 = vpop.f32.mrf.mxu0
        %1714 = vmatprep.mubr.f32.mxu0 0.0
        %1715 = vmatmul.mubr.f32.gmra.mxu0 %v1598
        %v1716 = vpop.f32.mrf.mxu0
        %v1717 = vadd.f32 0.0, %v1716
        %v1718 = vpop.f32.mrf.mxu0
        %1719 = vmatprep.mubr.f32.mxu0 0.0
        %1720 = vmatmul.mubr.f32.gmra.mxu0 %v1601
        %v1721 = vpop.f32.mrf.mxu0
        %v1722 = vadd.f32 0.0, %v1721
        %v1723 = vpop.f32.mrf.mxu0
        %1724 = vmatprep.mubr.f32.mxu0 0.0
        %1725 = vmatmul.mubr.f32.gmra.mxu0 %v1604
        %v1726 = vpop.f32.mrf.mxu0
        %v1727 = vadd.f32 0.0, %v1726
        %v1728 = vpop.f32.mrf.mxu0
        %1729 = vmatprep.mubr.f32.mxu0 0.0
        %1730 = vmatmul.mubr.f32.gmra.mxu0 %v1607
        %v1731 = vpop.f32.mrf.mxu0
        %v1732 = vadd.f32 0.0, %v1731
        %v1733 = vpop.f32.mrf.mxu0
        %1734 = vmatprep.mubr.f32.mxu0 0.0
        %1735 = vmatmul.mubr.f32.gmra.mxu0 %v1610
        %v1736 = vpop.f32.mrf.mxu0
        %v1737 = vadd.f32 0.0, %v1736
        %v1738 = vpop.f32.mrf.mxu0
        %1739 = vdwg.mxu0
        %v1740 = vadd.f32 %v1552, %v1682
        %v1741 = vadd.f32 %v1553, %v1687
        %v1742 = vadd.f32 %v1554, %v1692
        %v1743 = vadd.f32 %v1555, %v1697
        %v1744 = vadd.f32 %v1556, %v1702
        %v1745 = vadd.f32 %v1557, %v1707
        %v1746 = vadd.f32 %v1558, %v1712
        %v1747 = vadd.f32 %v1559, %v1717
        %v1748 = vadd.f32 %v1560, %v1722
        %v1749 = vadd.f32 %v1561, %v1727
        %v1750 = vadd.f32 %v1562, %v1732
        %v1751 = vadd.f32 %v1563, %v1737
        %v1752 = vld [vmem:[%s221 + $0x26] sm:$0xff]
        %v1753 = vld [vmem:[%s221 + $0x2e] sm:$0xff]
        %v1754 = vld [vmem:[%s221 + $0x36] sm:$0xff]
        %v1755 = vld [vmem:[%s221 + $0x3e] sm:$0xff]
        %v1756 = vld [vmem:[%s221 + $0x46] sm:$0xff]
        %v1757 = vld [vmem:[%s221 + $0x4e] sm:$0xff]
        %v1758 = vld [vmem:[%s221 + $0x56] sm:$0xff]
        %v1759 = vld [vmem:[%s221 + $0x5e] sm:$0xff]
        %v1760 = vld [vmem:[%s221 + $0x66] sm:$0xff]
        %v1761 = vld [vmem:[%s221 + $0x6e] sm:$0xff]
        %v1762 = vld [vmem:[%s221 + $0x76] sm:$0xff]
        %v1763 = vld [vmem:[%s221 + $0x7e] sm:$0xff]
        %v1765 = vsel %vm258, %v1752, 0
        %v1768 = vsel %vm258, %v1753, 0
        %v1771 = vsel %vm258, %v1754, 0
        %v1774 = vsel %vm258, %v1755, 0
        %v1777 = vsel %vm258, %v1756, 0
        %v1780 = vsel %vm258, %v1757, 0
        %v1783 = vsel %vm258, %v1758, 0
        %v1786 = vsel %vm258, %v1759, 0
        %v1789 = vsel %vm258, %v1760, 0
        %v1792 = vsel %vm258, %v1761, 0
        %v1795 = vsel %vm258, %v1762, 0
        %v1798 = vsel %vm258, %v1763, 0
        %v1801 = vsel %vm295, %v238, 0
        %1803 = vmatprep.subr.mxu0 0.0
        %1804 = vmatpush1.msra.mxu0 0.0
        %1805 = vmatprep.subr.mxu0 0.0
        %1806 = vmatpush1.msra.mxu0 0.0
        %1807 = vmatprep.subr.mxu0 0.0
        %1808 = vmatpush1.msra.mxu0 0.0
        %1809 = vmatprep.subr.mxu0 0.0
        %1810 = vmatpush1.msra.mxu0 0.0
        %1811 = vmatprep.subr.mxu0 0.0
        %1812 = vmatpush1.msra.mxu0 0.0
        %1813 = vmatprep.subr.mxu0 0.0
        %1814 = vmatpush1.msra.mxu0 0.0
        %1815 = vmatprep.subr.mxu0 0.0
        %1816 = vmatpush1.msra.mxu0 0.0
        %1817 = vmatprep.subr.mxu0 0.0
        %1818 = vmatpush1.msra.mxu0 0.0
        %1819 = vmatprep.subr.mxu0 0.0
        %1820 = vmatpush1.msra.mxu0 0.0
        %1821 = vmatprep.subr.mxu0 0.0
        %1822 = vmatpush1.msra.mxu0 0.0
        %1823 = vmatprep.subr.mxu0 0.0
        %1824 = vmatpush1.msra.mxu0 0.0
        %1825 = vmatprep.subr.mxu0 0.0
        %1826 = vmatpush1.msra.mxu0 0.0
        %1827 = vmatprep.subr.mxu0 0.0
        %1828 = vmatpush1.msra.mxu0 0.0
        %1829 = vmatprep.subr.mxu0 0.0
        %1830 = vmatpush1.msra.mxu0 0.0
        %1831 = vmatprep.subr.mxu0 0.0
        %1832 = vmatpush1.msra.mxu0 0.0
        %1833 = vmatprep.subr.mxu0 0.0
        %1834 = vmatpush1.msra.mxu0 %v1801
        %1835 = vmatprep.subr.mxu0 0.0
        %1836 = vmatpush2.msra.mxu0 0.0
        %1837 = vmatprep.subr.mxu0 0.0
        %1838 = vmatpush2.msra.mxu0 0.0
        %1839 = vmatprep.subr.mxu0 0.0
        %1840 = vmatpush2.msra.mxu0 0.0
        %1841 = vmatprep.subr.mxu0 0.0
        %1842 = vmatpush2.msra.mxu0 0.0
        %1843 = vmatprep.subr.mxu0 0.0
        %1844 = vmatpush2.msra.mxu0 0.0
        %1845 = vmatprep.subr.mxu0 0.0
        %1846 = vmatpush2.msra.mxu0 0.0
        %1847 = vmatprep.subr.mxu0 0.0
        %1848 = vmatpush2.msra.mxu0 0.0
        %1849 = vmatprep.subr.mxu0 0.0
        %1850 = vmatpush2.msra.mxu0 0.0
        %1851 = vmatprep.subr.mxu0 0.0
        %1852 = vmatpush2.msra.mxu0 0.0
        %1853 = vmatprep.subr.mxu0 0.0
        %1854 = vmatpush2.msra.mxu0 0.0
        %1855 = vmatprep.subr.mxu0 0.0
        %1856 = vmatpush2.msra.mxu0 0.0
        %1857 = vmatprep.subr.mxu0 0.0
        %1858 = vmatpush2.msra.mxu0 0.0
        %1859 = vmatprep.subr.mxu0 0.0
        %1860 = vmatpush2.msra.mxu0 0.0
        %1861 = vmatprep.subr.mxu0 0.0
        %1862 = vmatpush2.msra.mxu0 0.0
        %1863 = vmatprep.subr.mxu0 0.0
        %1864 = vmatpush2.msra.mxu0 0.0
        %1865 = vmatprep.subr.mxu0 0.0
        %1866 = vmatpush2.msra.mxu0 0.0
        %1867 = vmatprep.mubr.f32.mxu0 0.0
        %1868 = vmatmul.mubr.f32.gmra.mxu0 %v1765
        %v1869 = vpop.f32.mrf.mxu0
        %v1870 = vadd.f32 0.0, %v1869
        %v1871 = vpop.f32.mrf.mxu0
        %1872 = vmatprep.mubr.f32.mxu0 0.0
        %1873 = vmatmul.mubr.f32.gmra.mxu0 %v1768
        %v1874 = vpop.f32.mrf.mxu0
        %v1875 = vadd.f32 0.0, %v1874
        %v1876 = vpop.f32.mrf.mxu0
        %1877 = vmatprep.mubr.f32.mxu0 0.0
        %1878 = vmatmul.mubr.f32.gmra.mxu0 %v1771
        %v1879 = vpop.f32.mrf.mxu0
        %v1880 = vadd.f32 0.0, %v1879
        %v1881 = vpop.f32.mrf.mxu0
        %1882 = vmatprep.mubr.f32.mxu0 0.0
        %1883 = vmatmul.mubr.f32.gmra.mxu0 %v1774
        %v1884 = vpop.f32.mrf.mxu0
        %v1885 = vadd.f32 0.0, %v1884
        %v1886 = vpop.f32.mrf.mxu0
        %1887 = vmatprep.mubr.f32.mxu0 0.0
        %1888 = vmatmul.mubr.f32.gmra.mxu0 %v1777
        %v1889 = vpop.f32.mrf.mxu0
        %v1890 = vadd.f32 0.0, %v1889
        %v1891 = vpop.f32.mrf.mxu0
        %1892 = vmatprep.mubr.f32.mxu0 0.0
        %1893 = vmatmul.mubr.f32.gmra.mxu0 %v1780
        %v1894 = vpop.f32.mrf.mxu0
        %v1895 = vadd.f32 0.0, %v1894
        %v1896 = vpop.f32.mrf.mxu0
        %1897 = vmatprep.mubr.f32.mxu0 0.0
        %1898 = vmatmul.mubr.f32.gmra.mxu0 %v1783
        %v1899 = vpop.f32.mrf.mxu0
        %v1900 = vadd.f32 0.0, %v1899
        %v1901 = vpop.f32.mrf.mxu0
        %1902 = vmatprep.mubr.f32.mxu0 0.0
        %1903 = vmatmul.mubr.f32.gmra.mxu0 %v1786
        %v1904 = vpop.f32.mrf.mxu0
        %v1905 = vadd.f32 0.0, %v1904
        %v1906 = vpop.f32.mrf.mxu0
        %1907 = vmatprep.mubr.f32.mxu0 0.0
        %1908 = vmatmul.mubr.f32.gmra.mxu0 %v1789
        %v1909 = vpop.f32.mrf.mxu0
        %v1910 = vadd.f32 0.0, %v1909
        %v1911 = vpop.f32.mrf.mxu0
        %1912 = vmatprep.mubr.f32.mxu0 0.0
        %1913 = vmatmul.mubr.f32.gmra.mxu0 %v1792
        %v1914 = vpop.f32.mrf.mxu0
        %v1915 = vadd.f32 0.0, %v1914
        %v1916 = vpop.f32.mrf.mxu0
        %1917 = vmatprep.mubr.f32.mxu0 0.0
        %1918 = vmatmul.mubr.f32.gmra.mxu0 %v1795
        %v1919 = vpop.f32.mrf.mxu0
        %v1920 = vadd.f32 0.0, %v1919
        %v1921 = vpop.f32.mrf.mxu0
        %1922 = vmatprep.mubr.f32.mxu0 0.0
        %1923 = vmatmul.mubr.f32.gmra.mxu0 %v1798
        %v1924 = vpop.f32.mrf.mxu0
        %v1925 = vadd.f32 0.0, %v1924
        %v1926 = vpop.f32.mrf.mxu0
        %1927 = vdwg.mxu0
        %v1928 = vadd.f32 %v1740, %v1870
        %v1929 = vadd.f32 %v1741, %v1875
        %v1930 = vadd.f32 %v1742, %v1880
        %v1931 = vadd.f32 %v1743, %v1885
        %v1932 = vadd.f32 %v1744, %v1890
        %v1933 = vadd.f32 %v1745, %v1895
        %v1934 = vadd.f32 %v1746, %v1900
        %v1935 = vadd.f32 %v1747, %v1905
        %v1936 = vadd.f32 %v1748, %v1910
        %v1937 = vadd.f32 %v1749, %v1915
        %v1938 = vadd.f32 %v1750, %v1920
        %v1939 = vadd.f32 %v1751, %v1925
        %v1940 = vmax.f32 %v1928, 0.0
        %v1941 = vmax.f32 %v1929, 0.0
        %v1942 = vmax.f32 %v1930, 0.0
        %v1943 = vmax.f32 %v1931, 0.0
        %v1944 = vmax.f32 %v1932, 0.0
        %v1945 = vmax.f32 %v1933, 0.0
        %v1946 = vmax.f32 %v1934, 0.0
        %v1947 = vmax.f32 %v1935, 0.0
        %v1948 = vmax.f32 %v1936, 0.0
        %v1949 = vmax.f32 %v1937, 0.0
        %v1950 = vmax.f32 %v1938, 0.0
        %v1951 = vmax.f32 %v1939, 0.0
        %v1952 = vld [vmem:[%s1] sm:$0xff]
        %v1953 = vld [vmem:[%s1 + $0x8] sm:$0xff]
        %v1954 = vld [vmem:[%s1 + $0x10] sm:$0xff]
        %v1955 = vld [vmem:[%s1 + $0x18] sm:$0xff]
        %v1956 = vld [vmem:[%s1 + $0x20] sm:$0xff]
        %v1957 = vld [vmem:[%s1 + $0x28] sm:$0xff]
        %v1958 = vld [vmem:[%s1 + $0x30] sm:$0xff]
        %v1959 = vld [vmem:[%s1 + $0x38] sm:$0xff]
        %v1960 = vld [vmem:[%s1 + $0x40] sm:$0xff]
        %v1961 = vld [vmem:[%s1 + $0x48] sm:$0xff]
        %v1962 = vld [vmem:[%s1 + $0x50] sm:$0xff]
        %v1963 = vld [vmem:[%s1 + $0x58] sm:$0xff]
        %1965 = vset.pattern.permute.xlu0 0
        %1966 = vperm.xlu0 %1965, %v1952
        %v1967 = vpop.permute.xlu0 %1966
        %1970 = vset.pattern.permute.xlu0 0
        %1971 = vperm.xlu0 %1970, %v1953
        %v1972 = vpop.permute.xlu0 %1971
        %1975 = vset.pattern.permute.xlu0 0
        %1976 = vperm.xlu0 %1975, %v1954
        %v1977 = vpop.permute.xlu0 %1976
        %1980 = vset.pattern.permute.xlu0 0
        %1981 = vperm.xlu0 %1980, %v1955
        %v1982 = vpop.permute.xlu0 %1981
        %1985 = vset.pattern.permute.xlu0 0
        %1986 = vperm.xlu0 %1985, %v1956
        %v1987 = vpop.permute.xlu0 %1986
        %1990 = vset.pattern.permute.xlu0 0
        %1991 = vperm.xlu0 %1990, %v1957
        %v1992 = vpop.permute.xlu0 %1991
        %1995 = vset.pattern.permute.xlu0 0
        %1996 = vperm.xlu0 %1995, %v1958
        %v1997 = vpop.permute.xlu0 %1996
        %2000 = vset.pattern.permute.xlu0 0
        %2001 = vperm.xlu0 %2000, %v1959
        %v2002 = vpop.permute.xlu0 %2001
        %2005 = vset.pattern.permute.xlu0 0
        %2006 = vperm.xlu0 %2005, %v1960
        %v2007 = vpop.permute.xlu0 %2006
        %2010 = vset.pattern.permute.xlu0 0
        %2011 = vperm.xlu0 %2010, %v1961
        %v2012 = vpop.permute.xlu0 %2011
        %2015 = vset.pattern.permute.xlu0 0
        %2016 = vperm.xlu0 %2015, %v1962
        %v2017 = vpop.permute.xlu0 %2016
        %2020 = vset.pattern.permute.xlu0 0
        %2021 = vperm.xlu0 %2020, %v1963
        %v2022 = vpop.permute.xlu0 %2021
        %v2024 = vmul.f32 %v1940, %v1967
        %v2025 = vmul.f32 %v1941, %v1972
        %v2026 = vmul.f32 %v1942, %v1977
        %v2027 = vmul.f32 %v1943, %v1982
        %v2028 = vmul.f32 %v1944, %v1987
        %v2029 = vmul.f32 %v1945, %v1992
        %v2030 = vmul.f32 %v1946, %v1997
        %v2031 = vmul.f32 %v1947, %v2002
        %v2032 = vmul.f32 %v1948, %v2007
        %v2033 = vmul.f32 %v1949, %v2012
        %v2034 = vmul.f32 %v1950, %v2017
        %v2035 = vmul.f32 %v1951, %v2022
        %v2036 = vadd.f32 %v2024, %v2025
        %v2037 = vadd.f32 %v2036, %v2026
        %v2038 = vadd.f32 %v2037, %v2027
        %v2039 = vadd.f32 %v2038, %v2028
        %v2040 = vadd.f32 %v2039, %v2029
        %v2041 = vadd.f32 %v2040, %v2030
        %v2042 = vadd.f32 %v2041, %v2031
        %v2043 = vadd.f32 %v2042, %v2032
        %v2044 = vadd.f32 %v2043, %v2033
        %v2045 = vadd.f32 %v2044, %v2034
        %v2046 = vadd.f32 %v2045, %v2035
        %v2047 = vrot.slane %v2046, 4
        %v2048 = vadd.f32 %v2046, %v2047
        %v2049 = vrot.slane %v2048, 2
        %v2050 = vadd.f32 %v2048, %v2049
        %v2051 = vrot.slane %v2050, 1
        %v2052 = vadd.f32 %v2050, %v2051
        %v2053 = vadd.f32 %v2052, 0.0
        %v2054 = vld [vmem:[%s221 + $0x60] sm:$0xff]
        %v2055 = vld [vmem:[%s221 + $0x68] sm:$0xff]
        %v2056 = vld [vmem:[%s221 + $0x70] sm:$0xff]
        %v2057 = vld [vmem:[%s221 + $0x78] sm:$0xff]
        %v2058 = vld [vmem:[%s221 + $0x80] sm:$0xff]
        %v2059 = vld [vmem:[%s221 + $0x88] sm:$0xff]
        %v2060 = vld [vmem:[%s221 + $0x90] sm:$0xff]
        %v2061 = vld [vmem:[%s221 + $0x98] sm:$0xff]
        %v2062 = vld [vmem:[%s221 + $0xa0] sm:$0xff]
        %v2063 = vld [vmem:[%s221 + $0xa8] sm:$0xff]
        %v2064 = vld [vmem:[%s221 + $0xb0] sm:$0xff]
        %v2065 = vld [vmem:[%s221 + $0xb8] sm:$0xff]
        %v2067 = vsel %vm258, %v2054, 0
        %v2070 = vsel %vm258, %v2055, 0
        %v2073 = vsel %vm258, %v2056, 0
        %v2076 = vsel %vm258, %v2057, 0
        %v2079 = vsel %vm258, %v2058, 0
        %v2082 = vsel %vm258, %v2059, 0
        %v2085 = vsel %vm258, %v2060, 0
        %v2088 = vsel %vm258, %v2061, 0
        %v2091 = vsel %vm258, %v2062, 0
        %v2094 = vsel %vm258, %v2063, 0
        %v2097 = vsel %vm258, %v2064, 0
        %v2100 = vsel %vm258, %v2065, 0
        %2102 = vmatprep.subr.mxu0 0.0
        %2103 = vmatpush1.msra.mxu0 0.0
        %2104 = vmatprep.subr.mxu0 0.0
        %2105 = vmatpush1.msra.mxu0 0.0
        %2106 = vmatprep.subr.mxu0 0.0
        %2107 = vmatpush1.msra.mxu0 0.0
        %2108 = vmatprep.subr.mxu0 0.0
        %2109 = vmatpush1.msra.mxu0 0.0
        %2110 = vmatprep.subr.mxu0 0.0
        %2111 = vmatpush1.msra.mxu0 0.0
        %2112 = vmatprep.subr.mxu0 0.0
        %2113 = vmatpush1.msra.mxu0 0.0
        %2114 = vmatprep.subr.mxu0 0.0
        %2115 = vmatpush1.msra.mxu0 0.0
        %2116 = vmatprep.subr.mxu0 0.0
        %2117 = vmatpush1.msra.mxu0 0.0
        %2118 = vmatprep.subr.mxu0 0.0
        %2119 = vmatpush1.msra.mxu0 0.0
        %2120 = vmatprep.subr.mxu0 0.0
        %2121 = vmatpush1.msra.mxu0 0.0
        %2122 = vmatprep.subr.mxu0 0.0
        %2123 = vmatpush1.msra.mxu0 0.0
        %2124 = vmatprep.subr.mxu0 0.0
        %2125 = vmatpush1.msra.mxu0 0.0
        %2126 = vmatprep.subr.mxu0 0.0
        %2127 = vmatpush1.msra.mxu0 0.0
        %2128 = vmatprep.subr.mxu0 0.0
        %2129 = vmatpush1.msra.mxu0 0.0
        %2130 = vmatprep.subr.mxu0 0.0
        %2131 = vmatpush1.msra.mxu0 0.0
        %2132 = vmatprep.subr.mxu0 0.0
        %2133 = vmatpush1.msra.mxu0 %v297
        %2134 = vmatprep.subr.mxu0 0.0
        %2135 = vmatpush2.msra.mxu0 0.0
        %2136 = vmatprep.subr.mxu0 0.0
        %2137 = vmatpush2.msra.mxu0 0.0
        %2138 = vmatprep.subr.mxu0 0.0
        %2139 = vmatpush2.msra.mxu0 0.0
        %2140 = vmatprep.subr.mxu0 0.0
        %2141 = vmatpush2.msra.mxu0 0.0
        %2142 = vmatprep.subr.mxu0 0.0
        %2143 = vmatpush2.msra.mxu0 0.0
        %2144 = vmatprep.subr.mxu0 0.0
        %2145 = vmatpush2.msra.mxu0 0.0
        %2146 = vmatprep.subr.mxu0 0.0
        %2147 = vmatpush2.msra.mxu0 0.0
        %2148 = vmatprep.subr.mxu0 0.0
        %2149 = vmatpush2.msra.mxu0 0.0
        %2150 = vmatprep.subr.mxu0 0.0
        %2151 = vmatpush2.msra.mxu0 0.0
        %2152 = vmatprep.subr.mxu0 0.0
        %2153 = vmatpush2.msra.mxu0 0.0
        %2154 = vmatprep.subr.mxu0 0.0
        %2155 = vmatpush2.msra.mxu0 0.0
        %2156 = vmatprep.subr.mxu0 0.0
        %2157 = vmatpush2.msra.mxu0 0.0
        %2158 = vmatprep.subr.mxu0 0.0
        %2159 = vmatpush2.msra.mxu0 0.0
        %2160 = vmatprep.subr.mxu0 0.0
        %2161 = vmatpush2.msra.mxu0 0.0
        %2162 = vmatprep.subr.mxu0 0.0
        %2163 = vmatpush2.msra.mxu0 0.0
        %2164 = vmatprep.subr.mxu0 0.0
        %2165 = vmatpush2.msra.mxu0 0.0
        %2166 = vmatprep.mubr.f32.mxu0 0.0
        %2167 = vmatmul.mubr.f32.gmra.mxu0 %v2067
        %v2168 = vpop.f32.mrf.mxu0
        %v2169 = vadd.f32 0.0, %v2168
        %v2170 = vpop.f32.mrf.mxu0
        %2171 = vmatprep.mubr.f32.mxu0 0.0
        %2172 = vmatmul.mubr.f32.gmra.mxu0 %v2070
        %v2173 = vpop.f32.mrf.mxu0
        %v2174 = vadd.f32 0.0, %v2173
        %v2175 = vpop.f32.mrf.mxu0
        %2176 = vmatprep.mubr.f32.mxu0 0.0
        %2177 = vmatmul.mubr.f32.gmra.mxu0 %v2073
        %v2178 = vpop.f32.mrf.mxu0
        %v2179 = vadd.f32 0.0, %v2178
        %v2180 = vpop.f32.mrf.mxu0
        %2181 = vmatprep.mubr.f32.mxu0 0.0
        %2182 = vmatmul.mubr.f32.gmra.mxu0 %v2076
        %v2183 = vpop.f32.mrf.mxu0
        %v2184 = vadd.f32 0.0, %v2183
        %v2185 = vpop.f32.mrf.mxu0
        %2186 = vmatprep.mubr.f32.mxu0 0.0
        %2187 = vmatmul.mubr.f32.gmra.mxu0 %v2079
        %v2188 = vpop.f32.mrf.mxu0
        %v2189 = vadd.f32 0.0, %v2188
        %v2190 = vpop.f32.mrf.mxu0
        %2191 = vmatprep.mubr.f32.mxu0 0.0
        %2192 = vmatmul.mubr.f32.gmra.mxu0 %v2082
        %v2193 = vpop.f32.mrf.mxu0
        %v2194 = vadd.f32 0.0, %v2193
        %v2195 = vpop.f32.mrf.mxu0
        %2196 = vmatprep.mubr.f32.mxu0 0.0
        %2197 = vmatmul.mubr.f32.gmra.mxu0 %v2085
        %v2198 = vpop.f32.mrf.mxu0
        %v2199 = vadd.f32 0.0, %v2198
        %v2200 = vpop.f32.mrf.mxu0
        %2201 = vmatprep.mubr.f32.mxu0 0.0
        %2202 = vmatmul.mubr.f32.gmra.mxu0 %v2088
        %v2203 = vpop.f32.mrf.mxu0
        %v2204 = vadd.f32 0.0, %v2203
        %v2205 = vpop.f32.mrf.mxu0
        %2206 = vmatprep.mubr.f32.mxu0 0.0
        %2207 = vmatmul.mubr.f32.gmra.mxu0 %v2091
        %v2208 = vpop.f32.mrf.mxu0
        %v2209 = vadd.f32 0.0, %v2208
        %v2210 = vpop.f32.mrf.mxu0
        %2211 = vmatprep.mubr.f32.mxu0 0.0
        %2212 = vmatmul.mubr.f32.gmra.mxu0 %v2094
        %v2213 = vpop.f32.mrf.mxu0
        %v2214 = vadd.f32 0.0, %v2213
        %v2215 = vpop.f32.mrf.mxu0
        %2216 = vmatprep.mubr.f32.mxu0 0.0
        %2217 = vmatmul.mubr.f32.gmra.mxu0 %v2097
        %v2218 = vpop.f32.mrf.mxu0
        %v2219 = vadd.f32 0.0, %v2218
        %v2220 = vpop.f32.mrf.mxu0
        %2221 = vmatprep.mubr.f32.mxu0 0.0
        %2222 = vmatmul.mubr.f32.gmra.mxu0 %v2100
        %v2223 = vpop.f32.mrf.mxu0
        %v2224 = vadd.f32 0.0, %v2223
        %v2225 = vpop.f32.mrf.mxu0
        %2226 = vdwg.mxu0
        %v2227 = vadd.f32 %v244, %v2169
        %v2228 = vadd.f32 %v244, %v2174
        %v2229 = vadd.f32 %v244, %v2179
        %v2230 = vadd.f32 %v244, %v2184
        %v2231 = vadd.f32 %v244, %v2189
        %v2232 = vadd.f32 %v244, %v2194
        %v2233 = vadd.f32 %v244, %v2199
        %v2234 = vadd.f32 %v244, %v2204
        %v2235 = vadd.f32 %v244, %v2209
        %v2236 = vadd.f32 %v244, %v2214
        %v2237 = vadd.f32 %v244, %v2219
        %v2238 = vadd.f32 %v244, %v2224
        %v2239 = vld [vmem:[%s221 + $0x61] sm:$0xff]
        %v2240 = vld [vmem:[%s221 + $0x69] sm:$0xff]
        %v2241 = vld [vmem:[%s221 + $0x71] sm:$0xff]
        %v2242 = vld [vmem:[%s221 + $0x79] sm:$0xff]
        %v2243 = vld [vmem:[%s221 + $0x81] sm:$0xff]
        %v2244 = vld [vmem:[%s221 + $0x89] sm:$0xff]
        %v2245 = vld [vmem:[%s221 + $0x91] sm:$0xff]
        %v2246 = vld [vmem:[%s221 + $0x99] sm:$0xff]
        %v2247 = vld [vmem:[%s221 + $0xa1] sm:$0xff]
        %v2248 = vld [vmem:[%s221 + $0xa9] sm:$0xff]
        %v2249 = vld [vmem:[%s221 + $0xb1] sm:$0xff]
        %v2250 = vld [vmem:[%s221 + $0xb9] sm:$0xff]
        %v2252 = vsel %vm258, %v2239, 0
        %v2255 = vsel %vm258, %v2240, 0
        %v2258 = vsel %vm258, %v2241, 0
        %v2261 = vsel %vm258, %v2242, 0
        %v2264 = vsel %vm258, %v2243, 0
        %v2267 = vsel %vm258, %v2244, 0
        %v2270 = vsel %vm258, %v2245, 0
        %v2273 = vsel %vm258, %v2246, 0
        %v2276 = vsel %vm258, %v2247, 0
        %v2279 = vsel %vm258, %v2248, 0
        %v2282 = vsel %vm258, %v2249, 0
        %v2285 = vsel %vm258, %v2250, 0
        %2287 = vmatprep.subr.mxu0 0.0
        %2288 = vmatpush1.msra.mxu0 0.0
        %2289 = vmatprep.subr.mxu0 0.0
        %2290 = vmatpush1.msra.mxu0 0.0
        %2291 = vmatprep.subr.mxu0 0.0
        %2292 = vmatpush1.msra.mxu0 0.0
        %2293 = vmatprep.subr.mxu0 0.0
        %2294 = vmatpush1.msra.mxu0 0.0
        %2295 = vmatprep.subr.mxu0 0.0
        %2296 = vmatpush1.msra.mxu0 0.0
        %2297 = vmatprep.subr.mxu0 0.0
        %2298 = vmatpush1.msra.mxu0 0.0
        %2299 = vmatprep.subr.mxu0 0.0
        %2300 = vmatpush1.msra.mxu0 0.0
        %2301 = vmatprep.subr.mxu0 0.0
        %2302 = vmatpush1.msra.mxu0 0.0
        %2303 = vmatprep.subr.mxu0 0.0
        %2304 = vmatpush1.msra.mxu0 0.0
        %2305 = vmatprep.subr.mxu0 0.0
        %2306 = vmatpush1.msra.mxu0 0.0
        %2307 = vmatprep.subr.mxu0 0.0
        %2308 = vmatpush1.msra.mxu0 0.0
        %2309 = vmatprep.subr.mxu0 0.0
        %2310 = vmatpush1.msra.mxu0 0.0
        %2311 = vmatprep.subr.mxu0 0.0
        %2312 = vmatpush1.msra.mxu0 0.0
        %2313 = vmatprep.subr.mxu0 0.0
        %2314 = vmatpush1.msra.mxu0 0.0
        %2315 = vmatprep.subr.mxu0 0.0
        %2316 = vmatpush1.msra.mxu0 0.0
        %2317 = vmatprep.subr.mxu0 0.0
        %2318 = vmatpush1.msra.mxu0 %v485
        %2319 = vmatprep.subr.mxu0 0.0
        %2320 = vmatpush2.msra.mxu0 0.0
        %2321 = vmatprep.subr.mxu0 0.0
        %2322 = vmatpush2.msra.mxu0 0.0
        %2323 = vmatprep.subr.mxu0 0.0
        %2324 = vmatpush2.msra.mxu0 0.0
        %2325 = vmatprep.subr.mxu0 0.0
        %2326 = vmatpush2.msra.mxu0 0.0
        %2327 = vmatprep.subr.mxu0 0.0
        %2328 = vmatpush2.msra.mxu0 0.0
        %2329 = vmatprep.subr.mxu0 0.0
        %2330 = vmatpush2.msra.mxu0 0.0
        %2331 = vmatprep.subr.mxu0 0.0
        %2332 = vmatpush2.msra.mxu0 0.0
        %2333 = vmatprep.subr.mxu0 0.0
        %2334 = vmatpush2.msra.mxu0 0.0
        %2335 = vmatprep.subr.mxu0 0.0
        %2336 = vmatpush2.msra.mxu0 0.0
        %2337 = vmatprep.subr.mxu0 0.0
        %2338 = vmatpush2.msra.mxu0 0.0
        %2339 = vmatprep.subr.mxu0 0.0
        %2340 = vmatpush2.msra.mxu0 0.0
        %2341 = vmatprep.subr.mxu0 0.0
        %2342 = vmatpush2.msra.mxu0 0.0
        %2343 = vmatprep.subr.mxu0 0.0
        %2344 = vmatpush2.msra.mxu0 0.0
        %2345 = vmatprep.subr.mxu0 0.0
        %2346 = vmatpush2.msra.mxu0 0.0
        %2347 = vmatprep.subr.mxu0 0.0
        %2348 = vmatpush2.msra.mxu0 0.0
        %2349 = vmatprep.subr.mxu0 0.0
        %2350 = vmatpush2.msra.mxu0 0.0
        %2351 = vmatprep.mubr.f32.mxu0 0.0
        %2352 = vmatmul.mubr.f32.gmra.mxu0 %v2252
        %v2353 = vpop.f32.mrf.mxu0
        %v2354 = vadd.f32 0.0, %v2353
        %v2355 = vpop.f32.mrf.mxu0
        %2356 = vmatprep.mubr.f32.mxu0 0.0
        %2357 = vmatmul.mubr.f32.gmra.mxu0 %v2255
        %v2358 = vpop.f32.mrf.mxu0
        %v2359 = vadd.f32 0.0, %v2358
        %v2360 = vpop.f32.mrf.mxu0
        %2361 = vmatprep.mubr.f32.mxu0 0.0
        %2362 = vmatmul.mubr.f32.gmra.mxu0 %v2258
        %v2363 = vpop.f32.mrf.mxu0
        %v2364 = vadd.f32 0.0, %v2363
        %v2365 = vpop.f32.mrf.mxu0
        %2366 = vmatprep.mubr.f32.mxu0 0.0
        %2367 = vmatmul.mubr.f32.gmra.mxu0 %v2261
        %v2368 = vpop.f32.mrf.mxu0
        %v2369 = vadd.f32 0.0, %v2368
        %v2370 = vpop.f32.mrf.mxu0
        %2371 = vmatprep.mubr.f32.mxu0 0.0
        %2372 = vmatmul.mubr.f32.gmra.mxu0 %v2264
        %v2373 = vpop.f32.mrf.mxu0
        %v2374 = vadd.f32 0.0, %v2373
        %v2375 = vpop.f32.mrf.mxu0
        %2376 = vmatprep.mubr.f32.mxu0 0.0
        %2377 = vmatmul.mubr.f32.gmra.mxu0 %v2267
        %v2378 = vpop.f32.mrf.mxu0
        %v2379 = vadd.f32 0.0, %v2378
        %v2380 = vpop.f32.mrf.mxu0
        %2381 = vmatprep.mubr.f32.mxu0 0.0
        %2382 = vmatmul.mubr.f32.gmra.mxu0 %v2270
        %v2383 = vpop.f32.mrf.mxu0
        %v2384 = vadd.f32 0.0, %v2383
        %v2385 = vpop.f32.mrf.mxu0
        %2386 = vmatprep.mubr.f32.mxu0 0.0
        %2387 = vmatmul.mubr.f32.gmra.mxu0 %v2273
        %v2388 = vpop.f32.mrf.mxu0
        %v2389 = vadd.f32 0.0, %v2388
        %v2390 = vpop.f32.mrf.mxu0
        %2391 = vmatprep.mubr.f32.mxu0 0.0
        %2392 = vmatmul.mubr.f32.gmra.mxu0 %v2276
        %v2393 = vpop.f32.mrf.mxu0
        %v2394 = vadd.f32 0.0, %v2393
        %v2395 = vpop.f32.mrf.mxu0
        %2396 = vmatprep.mubr.f32.mxu0 0.0
        %2397 = vmatmul.mubr.f32.gmra.mxu0 %v2279
        %v2398 = vpop.f32.mrf.mxu0
        %v2399 = vadd.f32 0.0, %v2398
        %v2400 = vpop.f32.mrf.mxu0
        %2401 = vmatprep.mubr.f32.mxu0 0.0
        %2402 = vmatmul.mubr.f32.gmra.mxu0 %v2282
        %v2403 = vpop.f32.mrf.mxu0
        %v2404 = vadd.f32 0.0, %v2403
        %v2405 = vpop.f32.mrf.mxu0
        %2406 = vmatprep.mubr.f32.mxu0 0.0
        %2407 = vmatmul.mubr.f32.gmra.mxu0 %v2285
        %v2408 = vpop.f32.mrf.mxu0
        %v2409 = vadd.f32 0.0, %v2408
        %v2410 = vpop.f32.mrf.mxu0
        %2411 = vdwg.mxu0
        %v2412 = vadd.f32 %v2227, %v2354
        %v2413 = vadd.f32 %v2228, %v2359
        %v2414 = vadd.f32 %v2229, %v2364
        %v2415 = vadd.f32 %v2230, %v2369
        %v2416 = vadd.f32 %v2231, %v2374
        %v2417 = vadd.f32 %v2232, %v2379
        %v2418 = vadd.f32 %v2233, %v2384
        %v2419 = vadd.f32 %v2234, %v2389
        %v2420 = vadd.f32 %v2235, %v2394
        %v2421 = vadd.f32 %v2236, %v2399
        %v2422 = vadd.f32 %v2237, %v2404
        %v2423 = vadd.f32 %v2238, %v2409
        %v2424 = vld [vmem:[%s221 + $0x62] sm:$0xff]
        %v2425 = vld [vmem:[%s221 + $0x6a] sm:$0xff]
        %v2426 = vld [vmem:[%s221 + $0x72] sm:$0xff]
        %v2427 = vld [vmem:[%s221 + $0x7a] sm:$0xff]
        %v2428 = vld [vmem:[%s221 + $0x82] sm:$0xff]
        %v2429 = vld [vmem:[%s221 + $0x8a] sm:$0xff]
        %v2430 = vld [vmem:[%s221 + $0x92] sm:$0xff]
        %v2431 = vld [vmem:[%s221 + $0x9a] sm:$0xff]
        %v2432 = vld [vmem:[%s221 + $0xa2] sm:$0xff]
        %v2433 = vld [vmem:[%s221 + $0xaa] sm:$0xff]
        %v2434 = vld [vmem:[%s221 + $0xb2] sm:$0xff]
        %v2435 = vld [vmem:[%s221 + $0xba] sm:$0xff]
        %v2437 = vsel %vm258, %v2424, 0
        %v2440 = vsel %vm258, %v2425, 0
        %v2443 = vsel %vm258, %v2426, 0
        %v2446 = vsel %vm258, %v2427, 0
        %v2449 = vsel %vm258, %v2428, 0
        %v2452 = vsel %vm258, %v2429, 0
        %v2455 = vsel %vm258, %v2430, 0
        %v2458 = vsel %vm258, %v2431, 0
        %v2461 = vsel %vm258, %v2432, 0
        %v2464 = vsel %vm258, %v2433, 0
        %v2467 = vsel %vm258, %v2434, 0
        %v2470 = vsel %vm258, %v2435, 0
        %2472 = vmatprep.subr.mxu0 0.0
        %2473 = vmatpush1.msra.mxu0 0.0
        %2474 = vmatprep.subr.mxu0 0.0
        %2475 = vmatpush1.msra.mxu0 0.0
        %2476 = vmatprep.subr.mxu0 0.0
        %2477 = vmatpush1.msra.mxu0 0.0
        %2478 = vmatprep.subr.mxu0 0.0
        %2479 = vmatpush1.msra.mxu0 0.0
        %2480 = vmatprep.subr.mxu0 0.0
        %2481 = vmatpush1.msra.mxu0 0.0
        %2482 = vmatprep.subr.mxu0 0.0
        %2483 = vmatpush1.msra.mxu0 0.0
        %2484 = vmatprep.subr.mxu0 0.0
        %2485 = vmatpush1.msra.mxu0 0.0
        %2486 = vmatprep.subr.mxu0 0.0
        %2487 = vmatpush1.msra.mxu0 0.0
        %2488 = vmatprep.subr.mxu0 0.0
        %2489 = vmatpush1.msra.mxu0 0.0
        %2490 = vmatprep.subr.mxu0 0.0
        %2491 = vmatpush1.msra.mxu0 0.0
        %2492 = vmatprep.subr.mxu0 0.0
        %2493 = vmatpush1.msra.mxu0 0.0
        %2494 = vmatprep.subr.mxu0 0.0
        %2495 = vmatpush1.msra.mxu0 0.0
        %2496 = vmatprep.subr.mxu0 0.0
        %2497 = vmatpush1.msra.mxu0 0.0
        %2498 = vmatprep.subr.mxu0 0.0
        %2499 = vmatpush1.msra.mxu0 0.0
        %2500 = vmatprep.subr.mxu0 0.0
        %2501 = vmatpush1.msra.mxu0 0.0
        %2502 = vmatprep.subr.mxu0 0.0
        %2503 = vmatpush1.msra.mxu0 %v673
        %2504 = vmatprep.subr.mxu0 0.0
        %2505 = vmatpush2.msra.mxu0 0.0
        %2506 = vmatprep.subr.mxu0 0.0
        %2507 = vmatpush2.msra.mxu0 0.0
        %2508 = vmatprep.subr.mxu0 0.0
        %2509 = vmatpush2.msra.mxu0 0.0
        %2510 = vmatprep.subr.mxu0 0.0
        %2511 = vmatpush2.msra.mxu0 0.0
        %2512 = vmatprep.subr.mxu0 0.0
        %2513 = vmatpush2.msra.mxu0 0.0
        %2514 = vmatprep.subr.mxu0 0.0
        %2515 = vmatpush2.msra.mxu0 0.0
        %2516 = vmatprep.subr.mxu0 0.0
        %2517 = vmatpush2.msra.mxu0 0.0
        %2518 = vmatprep.subr.mxu0 0.0
        %2519 = vmatpush2.msra.mxu0 0.0
        %2520 = vmatprep.subr.mxu0 0.0
        %2521 = vmatpush2.msra.mxu0 0.0
        %2522 = vmatprep.subr.mxu0 0.0
        %2523 = vmatpush2.msra.mxu0 0.0
        %2524 = vmatprep.subr.mxu0 0.0
        %2525 = vmatpush2.msra.mxu0 0.0
        %2526 = vmatprep.subr.mxu0 0.0
        %2527 = vmatpush2.msra.mxu0 0.0
        %2528 = vmatprep.subr.mxu0 0.0
        %2529 = vmatpush2.msra.mxu0 0.0
        %2530 = vmatprep.subr.mxu0 0.0
        %2531 = vmatpush2.msra.mxu0 0.0
        %2532 = vmatprep.subr.mxu0 0.0
        %2533 = vmatpush2.msra.mxu0 0.0
        %2534 = vmatprep.subr.mxu0 0.0
        %2535 = vmatpush2.msra.mxu0 0.0
        %2536 = vmatprep.mubr.f32.mxu0 0.0
        %2537 = vmatmul.mubr.f32.gmra.mxu0 %v2437
        %v2538 = vpop.f32.mrf.mxu0
        %v2539 = vadd.f32 0.0, %v2538
        %v2540 = vpop.f32.mrf.mxu0
        %2541 = vmatprep.mubr.f32.mxu0 0.0
        %2542 = vmatmul.mubr.f32.gmra.mxu0 %v2440
        %v2543 = vpop.f32.mrf.mxu0
        %v2544 = vadd.f32 0.0, %v2543
        %v2545 = vpop.f32.mrf.mxu0
        %2546 = vmatprep.mubr.f32.mxu0 0.0
        %2547 = vmatmul.mubr.f32.gmra.mxu0 %v2443
        %v2548 = vpop.f32.mrf.mxu0
        %v2549 = vadd.f32 0.0, %v2548
        %v2550 = vpop.f32.mrf.mxu0
        %2551 = vmatprep.mubr.f32.mxu0 0.0
        %2552 = vmatmul.mubr.f32.gmra.mxu0 %v2446
        %v2553 = vpop.f32.mrf.mxu0
        %v2554 = vadd.f32 0.0, %v2553
        %v2555 = vpop.f32.mrf.mxu0
        %2556 = vmatprep.mubr.f32.mxu0 0.0
        %2557 = vmatmul.mubr.f32.gmra.mxu0 %v2449
        %v2558 = vpop.f32.mrf.mxu0
        %v2559 = vadd.f32 0.0, %v2558
        %v2560 = vpop.f32.mrf.mxu0
        %2561 = vmatprep.mubr.f32.mxu0 0.0
        %2562 = vmatmul.mubr.f32.gmra.mxu0 %v2452
        %v2563 = vpop.f32.mrf.mxu0
        %v2564 = vadd.f32 0.0, %v2563
        %v2565 = vpop.f32.mrf.mxu0
        %2566 = vmatprep.mubr.f32.mxu0 0.0
        %2567 = vmatmul.mubr.f32.gmra.mxu0 %v2455
        %v2568 = vpop.f32.mrf.mxu0
        %v2569 = vadd.f32 0.0, %v2568
        %v2570 = vpop.f32.mrf.mxu0
        %2571 = vmatprep.mubr.f32.mxu0 0.0
        %2572 = vmatmul.mubr.f32.gmra.mxu0 %v2458
        %v2573 = vpop.f32.mrf.mxu0
        %v2574 = vadd.f32 0.0, %v2573
        %v2575 = vpop.f32.mrf.mxu0
        %2576 = vmatprep.mubr.f32.mxu0 0.0
        %2577 = vmatmul.mubr.f32.gmra.mxu0 %v2461
        %v2578 = vpop.f32.mrf.mxu0
        %v2579 = vadd.f32 0.0, %v2578
        %v2580 = vpop.f32.mrf.mxu0
        %2581 = vmatprep.mubr.f32.mxu0 0.0
        %2582 = vmatmul.mubr.f32.gmra.mxu0 %v2464
        %v2583 = vpop.f32.mrf.mxu0
        %v2584 = vadd.f32 0.0, %v2583
        %v2585 = vpop.f32.mrf.mxu0
        %2586 = vmatprep.mubr.f32.mxu0 0.0
        %2587 = vmatmul.mubr.f32.gmra.mxu0 %v2467
        %v2588 = vpop.f32.mrf.mxu0
        %v2589 = vadd.f32 0.0, %v2588
        %v2590 = vpop.f32.mrf.mxu0
        %2591 = vmatprep.mubr.f32.mxu0 0.0
        %2592 = vmatmul.mubr.f32.gmra.mxu0 %v2470
        %v2593 = vpop.f32.mrf.mxu0
        %v2594 = vadd.f32 0.0, %v2593
        %v2595 = vpop.f32.mrf.mxu0
        %2596 = vdwg.mxu0
        %v2597 = vadd.f32 %v2412, %v2539
        %v2598 = vadd.f32 %v2413, %v2544
        %v2599 = vadd.f32 %v2414, %v2549
        %v2600 = vadd.f32 %v2415, %v2554
        %v2601 = vadd.f32 %v2416, %v2559
        %v2602 = vadd.f32 %v2417, %v2564
        %v2603 = vadd.f32 %v2418, %v2569
        %v2604 = vadd.f32 %v2419, %v2574
        %v2605 = vadd.f32 %v2420, %v2579
        %v2606 = vadd.f32 %v2421, %v2584
        %v2607 = vadd.f32 %v2422, %v2589
        %v2608 = vadd.f32 %v2423, %v2594
        %v2609 = vld [vmem:[%s221 + $0x72] sm:$0xff]
        %v2610 = vld [vmem:[%s221 + $0x7a] sm:$0xff]
        %v2611 = vld [vmem:[%s221 + $0x82] sm:$0xff]
        %v2612 = vld [vmem:[%s221 + $0x8a] sm:$0xff]
        %v2613 = vld [vmem:[%s221 + $0x92] sm:$0xff]
        %v2614 = vld [vmem:[%s221 + $0x9a] sm:$0xff]
        %v2615 = vld [vmem:[%s221 + $0xa2] sm:$0xff]
        %v2616 = vld [vmem:[%s221 + $0xaa] sm:$0xff]
        %v2617 = vld [vmem:[%s221 + $0xb2] sm:$0xff]
        %v2618 = vld [vmem:[%s221 + $0xba] sm:$0xff]
        %v2619 = vld [vmem:[%s221 + $0xc2] sm:$0xff]
        %v2620 = vld [vmem:[%s221 + $0xca] sm:$0xff]
        %v2622 = vsel %vm258, %v2609, 0
        %v2625 = vsel %vm258, %v2610, 0
        %v2628 = vsel %vm258, %v2611, 0
        %v2631 = vsel %vm258, %v2612, 0
        %v2634 = vsel %vm258, %v2613, 0
        %v2637 = vsel %vm258, %v2614, 0
        %v2640 = vsel %vm258, %v2615, 0
        %v2643 = vsel %vm258, %v2616, 0
        %v2646 = vsel %vm258, %v2617, 0
        %v2649 = vsel %vm258, %v2618, 0
        %v2652 = vsel %vm258, %v2619, 0
        %v2655 = vsel %vm258, %v2620, 0
        %2657 = vmatprep.subr.mxu0 0.0
        %2658 = vmatpush1.msra.mxu0 0.0
        %2659 = vmatprep.subr.mxu0 0.0
        %2660 = vmatpush1.msra.mxu0 0.0
        %2661 = vmatprep.subr.mxu0 0.0
        %2662 = vmatpush1.msra.mxu0 0.0
        %2663 = vmatprep.subr.mxu0 0.0
        %2664 = vmatpush1.msra.mxu0 0.0
        %2665 = vmatprep.subr.mxu0 0.0
        %2666 = vmatpush1.msra.mxu0 0.0
        %2667 = vmatprep.subr.mxu0 0.0
        %2668 = vmatpush1.msra.mxu0 0.0
        %2669 = vmatprep.subr.mxu0 0.0
        %2670 = vmatpush1.msra.mxu0 0.0
        %2671 = vmatprep.subr.mxu0 0.0
        %2672 = vmatpush1.msra.mxu0 0.0
        %2673 = vmatprep.subr.mxu0 0.0
        %2674 = vmatpush1.msra.mxu0 0.0
        %2675 = vmatprep.subr.mxu0 0.0
        %2676 = vmatpush1.msra.mxu0 0.0
        %2677 = vmatprep.subr.mxu0 0.0
        %2678 = vmatpush1.msra.mxu0 0.0
        %2679 = vmatprep.subr.mxu0 0.0
        %2680 = vmatpush1.msra.mxu0 0.0
        %2681 = vmatprep.subr.mxu0 0.0
        %2682 = vmatpush1.msra.mxu0 0.0
        %2683 = vmatprep.subr.mxu0 0.0
        %2684 = vmatpush1.msra.mxu0 0.0
        %2685 = vmatprep.subr.mxu0 0.0
        %2686 = vmatpush1.msra.mxu0 0.0
        %2687 = vmatprep.subr.mxu0 0.0
        %2688 = vmatpush1.msra.mxu0 %v861
        %2689 = vmatprep.subr.mxu0 0.0
        %2690 = vmatpush2.msra.mxu0 0.0
        %2691 = vmatprep.subr.mxu0 0.0
        %2692 = vmatpush2.msra.mxu0 0.0
        %2693 = vmatprep.subr.mxu0 0.0
        %2694 = vmatpush2.msra.mxu0 0.0
        %2695 = vmatprep.subr.mxu0 0.0
        %2696 = vmatpush2.msra.mxu0 0.0
        %2697 = vmatprep.subr.mxu0 0.0
        %2698 = vmatpush2.msra.mxu0 0.0
        %2699 = vmatprep.subr.mxu0 0.0
        %2700 = vmatpush2.msra.mxu0 0.0
        %2701 = vmatprep.subr.mxu0 0.0
        %2702 = vmatpush2.msra.mxu0 0.0
        %2703 = vmatprep.subr.mxu0 0.0
        %2704 = vmatpush2.msra.mxu0 0.0
        %2705 = vmatprep.subr.mxu0 0.0
        %2706 = vmatpush2.msra.mxu0 0.0
        %2707 = vmatprep.subr.mxu0 0.0
        %2708 = vmatpush2.msra.mxu0 0.0
        %2709 = vmatprep.subr.mxu0 0.0
        %2710 = vmatpush2.msra.mxu0 0.0
        %2711 = vmatprep.subr.mxu0 0.0
        %2712 = vmatpush2.msra.mxu0 0.0
        %2713 = vmatprep.subr.mxu0 0.0
        %2714 = vmatpush2.msra.mxu0 0.0
        %2715 = vmatprep.subr.mxu0 0.0
        %2716 = vmatpush2.msra.mxu0 0.0
        %2717 = vmatprep.subr.mxu0 0.0
        %2718 = vmatpush2.msra.mxu0 0.0
        %2719 = vmatprep.subr.mxu0 0.0
        %2720 = vmatpush2.msra.mxu0 0.0
        %2721 = vmatprep.mubr.f32.mxu0 0.0
        %2722 = vmatmul.mubr.f32.gmra.mxu0 %v2622
        %v2723 = vpop.f32.mrf.mxu0
        %v2724 = vadd.f32 0.0, %v2723
        %v2725 = vpop.f32.mrf.mxu0
        %2726 = vmatprep.mubr.f32.mxu0 0.0
        %2727 = vmatmul.mubr.f32.gmra.mxu0 %v2625
        %v2728 = vpop.f32.mrf.mxu0
        %v2729 = vadd.f32 0.0, %v2728
        %v2730 = vpop.f32.mrf.mxu0
        %2731 = vmatprep.mubr.f32.mxu0 0.0
        %2732 = vmatmul.mubr.f32.gmra.mxu0 %v2628
        %v2733 = vpop.f32.mrf.mxu0
        %v2734 = vadd.f32 0.0, %v2733
        %v2735 = vpop.f32.mrf.mxu0
        %2736 = vmatprep.mubr.f32.mxu0 0.0
        %2737 = vmatmul.mubr.f32.gmra.mxu0 %v2631
        %v2738 = vpop.f32.mrf.mxu0
        %v2739 = vadd.f32 0.0, %v2738
        %v2740 = vpop.f32.mrf.mxu0
        %2741 = vmatprep.mubr.f32.mxu0 0.0
        %2742 = vmatmul.mubr.f32.gmra.mxu0 %v2634
        %v2743 = vpop.f32.mrf.mxu0
        %v2744 = vadd.f32 0.0, %v2743
        %v2745 = vpop.f32.mrf.mxu0
        %2746 = vmatprep.mubr.f32.mxu0 0.0
        %2747 = vmatmul.mubr.f32.gmra.mxu0 %v2637
        %v2748 = vpop.f32.mrf.mxu0
        %v2749 = vadd.f32 0.0, %v2748
        %v2750 = vpop.f32.mrf.mxu0
        %2751 = vmatprep.mubr.f32.mxu0 0.0
        %2752 = vmatmul.mubr.f32.gmra.mxu0 %v2640
        %v2753 = vpop.f32.mrf.mxu0
        %v2754 = vadd.f32 0.0, %v2753
        %v2755 = vpop.f32.mrf.mxu0
        %2756 = vmatprep.mubr.f32.mxu0 0.0
        %2757 = vmatmul.mubr.f32.gmra.mxu0 %v2643
        %v2758 = vpop.f32.mrf.mxu0
        %v2759 = vadd.f32 0.0, %v2758
        %v2760 = vpop.f32.mrf.mxu0
        %2761 = vmatprep.mubr.f32.mxu0 0.0
        %2762 = vmatmul.mubr.f32.gmra.mxu0 %v2646
        %v2763 = vpop.f32.mrf.mxu0
        %v2764 = vadd.f32 0.0, %v2763
        %v2765 = vpop.f32.mrf.mxu0
        %2766 = vmatprep.mubr.f32.mxu0 0.0
        %2767 = vmatmul.mubr.f32.gmra.mxu0 %v2649
        %v2768 = vpop.f32.mrf.mxu0
        %v2769 = vadd.f32 0.0, %v2768
        %v2770 = vpop.f32.mrf.mxu0
        %2771 = vmatprep.mubr.f32.mxu0 0.0
        %2772 = vmatmul.mubr.f32.gmra.mxu0 %v2652
        %v2773 = vpop.f32.mrf.mxu0
        %v2774 = vadd.f32 0.0, %v2773
        %v2775 = vpop.f32.mrf.mxu0
        %2776 = vmatprep.mubr.f32.mxu0 0.0
        %2777 = vmatmul.mubr.f32.gmra.mxu0 %v2655
        %v2778 = vpop.f32.mrf.mxu0
        %v2779 = vadd.f32 0.0, %v2778
        %v2780 = vpop.f32.mrf.mxu0
        %2781 = vdwg.mxu0
        %v2782 = vadd.f32 %v2597, %v2724
        %v2783 = vadd.f32 %v2598, %v2729
        %v2784 = vadd.f32 %v2599, %v2734
        %v2785 = vadd.f32 %v2600, %v2739
        %v2786 = vadd.f32 %v2601, %v2744
        %v2787 = vadd.f32 %v2602, %v2749
        %v2788 = vadd.f32 %v2603, %v2754
        %v2789 = vadd.f32 %v2604, %v2759
        %v2790 = vadd.f32 %v2605, %v2764
        %v2791 = vadd.f32 %v2606, %v2769
        %v2792 = vadd.f32 %v2607, %v2774
        %v2793 = vadd.f32 %v2608, %v2779
        %v2794 = vld [vmem:[%s221 + $0x73] sm:$0xff]
        %v2795 = vld [vmem:[%s221 + $0x7b] sm:$0xff]
        %v2796 = vld [vmem:[%s221 + $0x83] sm:$0xff]
        %v2797 = vld [vmem:[%s221 + $0x8b] sm:$0xff]
        %v2798 = vld [vmem:[%s221 + $0x93] sm:$0xff]
        %v2799 = vld [vmem:[%s221 + $0x9b] sm:$0xff]
        %v2800 = vld [vmem:[%s221 + $0xa3] sm:$0xff]
        %v2801 = vld [vmem:[%s221 + $0xab] sm:$0xff]
        %v2802 = vld [vmem:[%s221 + $0xb3] sm:$0xff]
        %v2803 = vld [vmem:[%s221 + $0xbb] sm:$0xff]
        %v2804 = vld [vmem:[%s221 + $0xc3] sm:$0xff]
        %v2805 = vld [vmem:[%s221 + $0xcb] sm:$0xff]
        %v2807 = vsel %vm258, %v2794, 0
        %v2810 = vsel %vm258, %v2795, 0
        %v2813 = vsel %vm258, %v2796, 0
        %v2816 = vsel %vm258, %v2797, 0
        %v2819 = vsel %vm258, %v2798, 0
        %v2822 = vsel %vm258, %v2799, 0
        %v2825 = vsel %vm258, %v2800, 0
        %v2828 = vsel %vm258, %v2801, 0
        %v2831 = vsel %vm258, %v2802, 0
        %v2834 = vsel %vm258, %v2803, 0
        %v2837 = vsel %vm258, %v2804, 0
        %v2840 = vsel %vm258, %v2805, 0
        %2842 = vmatprep.subr.mxu0 0.0
        %2843 = vmatpush1.msra.mxu0 0.0
        %2844 = vmatprep.subr.mxu0 0.0
        %2845 = vmatpush1.msra.mxu0 0.0
        %2846 = vmatprep.subr.mxu0 0.0
        %2847 = vmatpush1.msra.mxu0 0.0
        %2848 = vmatprep.subr.mxu0 0.0
        %2849 = vmatpush1.msra.mxu0 0.0
        %2850 = vmatprep.subr.mxu0 0.0
        %2851 = vmatpush1.msra.mxu0 0.0
        %2852 = vmatprep.subr.mxu0 0.0
        %2853 = vmatpush1.msra.mxu0 0.0
        %2854 = vmatprep.subr.mxu0 0.0
        %2855 = vmatpush1.msra.mxu0 0.0
        %2856 = vmatprep.subr.mxu0 0.0
        %2857 = vmatpush1.msra.mxu0 0.0
        %2858 = vmatprep.subr.mxu0 0.0
        %2859 = vmatpush1.msra.mxu0 0.0
        %2860 = vmatprep.subr.mxu0 0.0
        %2861 = vmatpush1.msra.mxu0 0.0
        %2862 = vmatprep.subr.mxu0 0.0
        %2863 = vmatpush1.msra.mxu0 0.0
        %2864 = vmatprep.subr.mxu0 0.0
        %2865 = vmatpush1.msra.mxu0 0.0
        %2866 = vmatprep.subr.mxu0 0.0
        %2867 = vmatpush1.msra.mxu0 0.0
        %2868 = vmatprep.subr.mxu0 0.0
        %2869 = vmatpush1.msra.mxu0 0.0
        %2870 = vmatprep.subr.mxu0 0.0
        %2871 = vmatpush1.msra.mxu0 0.0
        %2872 = vmatprep.subr.mxu0 0.0
        %2873 = vmatpush1.msra.mxu0 %v1049
        %2874 = vmatprep.subr.mxu0 0.0
        %2875 = vmatpush2.msra.mxu0 0.0
        %2876 = vmatprep.subr.mxu0 0.0
        %2877 = vmatpush2.msra.mxu0 0.0
        %2878 = vmatprep.subr.mxu0 0.0
        %2879 = vmatpush2.msra.mxu0 0.0
        %2880 = vmatprep.subr.mxu0 0.0
        %2881 = vmatpush2.msra.mxu0 0.0
        %2882 = vmatprep.subr.mxu0 0.0
        %2883 = vmatpush2.msra.mxu0 0.0
        %2884 = vmatprep.subr.mxu0 0.0
        %2885 = vmatpush2.msra.mxu0 0.0
        %2886 = vmatprep.subr.mxu0 0.0
        %2887 = vmatpush2.msra.mxu0 0.0
        %2888 = vmatprep.subr.mxu0 0.0
        %2889 = vmatpush2.msra.mxu0 0.0
        %2890 = vmatprep.subr.mxu0 0.0
        %2891 = vmatpush2.msra.mxu0 0.0
        %2892 = vmatprep.subr.mxu0 0.0
        %2893 = vmatpush2.msra.mxu0 0.0
        %2894 = vmatprep.subr.mxu0 0.0
        %2895 = vmatpush2.msra.mxu0 0.0
        %2896 = vmatprep.subr.mxu0 0.0
        %2897 = vmatpush2.msra.mxu0 0.0
        %2898 = vmatprep.subr.mxu0 0.0
        %2899 = vmatpush2.msra.mxu0 0.0
        %2900 = vmatprep.subr.mxu0 0.0
        %2901 = vmatpush2.msra.mxu0 0.0
        %2902 = vmatprep.subr.mxu0 0.0
        %2903 = vmatpush2.msra.mxu0 0.0
        %2904 = vmatprep.subr.mxu0 0.0
        %2905 = vmatpush2.msra.mxu0 0.0
        %2906 = vmatprep.mubr.f32.mxu0 0.0
        %2907 = vmatmul.mubr.f32.gmra.mxu0 %v2807
        %v2908 = vpop.f32.mrf.mxu0
        %v2909 = vadd.f32 0.0, %v2908
        %v2910 = vpop.f32.mrf.mxu0
        %2911 = vmatprep.mubr.f32.mxu0 0.0
        %2912 = vmatmul.mubr.f32.gmra.mxu0 %v2810
        %v2913 = vpop.f32.mrf.mxu0
        %v2914 = vadd.f32 0.0, %v2913
        %v2915 = vpop.f32.mrf.mxu0
        %2916 = vmatprep.mubr.f32.mxu0 0.0
        %2917 = vmatmul.mubr.f32.gmra.mxu0 %v2813
        %v2918 = vpop.f32.mrf.mxu0
        %v2919 = vadd.f32 0.0, %v2918
        %v2920 = vpop.f32.mrf.mxu0
        %2921 = vmatprep.mubr.f32.mxu0 0.0
        %2922 = vmatmul.mubr.f32.gmra.mxu0 %v2816
        %v2923 = vpop.f32.mrf.mxu0
        %v2924 = vadd.f32 0.0, %v2923
        %v2925 = vpop.f32.mrf.mxu0
        %2926 = vmatprep.mubr.f32.mxu0 0.0
        %2927 = vmatmul.mubr.f32.gmra.mxu0 %v2819
        %v2928 = vpop.f32.mrf.mxu0
        %v2929 = vadd.f32 0.0, %v2928
        %v2930 = vpop.f32.mrf.mxu0
        %2931 = vmatprep.mubr.f32.mxu0 0.0
        %2932 = vmatmul.mubr.f32.gmra.mxu0 %v2822
        %v2933 = vpop.f32.mrf.mxu0
        %v2934 = vadd.f32 0.0, %v2933
        %v2935 = vpop.f32.mrf.mxu0
        %2936 = vmatprep.mubr.f32.mxu0 0.0
        %2937 = vmatmul.mubr.f32.gmra.mxu0 %v2825
        %v2938 = vpop.f32.mrf.mxu0
        %v2939 = vadd.f32 0.0, %v2938
        %v2940 = vpop.f32.mrf.mxu0
        %2941 = vmatprep.mubr.f32.mxu0 0.0
        %2942 = vmatmul.mubr.f32.gmra.mxu0 %v2828
        %v2943 = vpop.f32.mrf.mxu0
        %v2944 = vadd.f32 0.0, %v2943
        %v2945 = vpop.f32.mrf.mxu0
        %2946 = vmatprep.mubr.f32.mxu0 0.0
        %2947 = vmatmul.mubr.f32.gmra.mxu0 %v2831
        %v2948 = vpop.f32.mrf.mxu0
        %v2949 = vadd.f32 0.0, %v2948
        %v2950 = vpop.f32.mrf.mxu0
        %2951 = vmatprep.mubr.f32.mxu0 0.0
        %2952 = vmatmul.mubr.f32.gmra.mxu0 %v2834
        %v2953 = vpop.f32.mrf.mxu0
        %v2954 = vadd.f32 0.0, %v2953
        %v2955 = vpop.f32.mrf.mxu0
        %2956 = vmatprep.mubr.f32.mxu0 0.0
        %2957 = vmatmul.mubr.f32.gmra.mxu0 %v2837
        %v2958 = vpop.f32.mrf.mxu0
        %v2959 = vadd.f32 0.0, %v2958
        %v2960 = vpop.f32.mrf.mxu0
        %2961 = vmatprep.mubr.f32.mxu0 0.0
        %2962 = vmatmul.mubr.f32.gmra.mxu0 %v2840
        %v2963 = vpop.f32.mrf.mxu0
        %v2964 = vadd.f32 0.0, %v2963
        %v2965 = vpop.f32.mrf.mxu0
        %2966 = vdwg.mxu0
        %v2967 = vadd.f32 %v2782, %v2909
        %v2968 = vadd.f32 %v2783, %v2914
        %v2969 = vadd.f32 %v2784, %v2919
        %v2970 = vadd.f32 %v2785, %v2924
        %v2971 = vadd.f32 %v2786, %v2929
        %v2972 = vadd.f32 %v2787, %v2934
        %v2973 = vadd.f32 %v2788, %v2939
        %v2974 = vadd.f32 %v2789, %v2944
        %v2975 = vadd.f32 %v2790, %v2949
        %v2976 = vadd.f32 %v2791, %v2954
        %v2977 = vadd.f32 %v2792, %v2959
        %v2978 = vadd.f32 %v2793, %v2964
        %v2979 = vld [vmem:[%s221 + $0x74] sm:$0xff]
        %v2980 = vld [vmem:[%s221 + $0x7c] sm:$0xff]
        %v2981 = vld [vmem:[%s221 + $0x84] sm:$0xff]
        %v2982 = vld [vmem:[%s221 + $0x8c] sm:$0xff]
        %v2983 = vld [vmem:[%s221 + $0x94] sm:$0xff]
        %v2984 = vld [vmem:[%s221 + $0x9c] sm:$0xff]
        %v2985 = vld [vmem:[%s221 + $0xa4] sm:$0xff]
        %v2986 = vld [vmem:[%s221 + $0xac] sm:$0xff]
        %v2987 = vld [vmem:[%s221 + $0xb4] sm:$0xff]
        %v2988 = vld [vmem:[%s221 + $0xbc] sm:$0xff]
        %v2989 = vld [vmem:[%s221 + $0xc4] sm:$0xff]
        %v2990 = vld [vmem:[%s221 + $0xcc] sm:$0xff]
        %v2992 = vsel %vm258, %v2979, 0
        %v2995 = vsel %vm258, %v2980, 0
        %v2998 = vsel %vm258, %v2981, 0
        %v3001 = vsel %vm258, %v2982, 0
        %v3004 = vsel %vm258, %v2983, 0
        %v3007 = vsel %vm258, %v2984, 0
        %v3010 = vsel %vm258, %v2985, 0
        %v3013 = vsel %vm258, %v2986, 0
        %v3016 = vsel %vm258, %v2987, 0
        %v3019 = vsel %vm258, %v2988, 0
        %v3022 = vsel %vm258, %v2989, 0
        %v3025 = vsel %vm258, %v2990, 0
        %3027 = vmatprep.subr.mxu0 0.0
        %3028 = vmatpush1.msra.mxu0 0.0
        %3029 = vmatprep.subr.mxu0 0.0
        %3030 = vmatpush1.msra.mxu0 0.0
        %3031 = vmatprep.subr.mxu0 0.0
        %3032 = vmatpush1.msra.mxu0 0.0
        %3033 = vmatprep.subr.mxu0 0.0
        %3034 = vmatpush1.msra.mxu0 0.0
        %3035 = vmatprep.subr.mxu0 0.0
        %3036 = vmatpush1.msra.mxu0 0.0
        %3037 = vmatprep.subr.mxu0 0.0
        %3038 = vmatpush1.msra.mxu0 0.0
        %3039 = vmatprep.subr.mxu0 0.0
        %3040 = vmatpush1.msra.mxu0 0.0
        %3041 = vmatprep.subr.mxu0 0.0
        %3042 = vmatpush1.msra.mxu0 0.0
        %3043 = vmatprep.subr.mxu0 0.0
        %3044 = vmatpush1.msra.mxu0 0.0
        %3045 = vmatprep.subr.mxu0 0.0
        %3046 = vmatpush1.msra.mxu0 0.0
        %3047 = vmatprep.subr.mxu0 0.0
        %3048 = vmatpush1.msra.mxu0 0.0
        %3049 = vmatprep.subr.mxu0 0.0
        %3050 = vmatpush1.msra.mxu0 0.0
        %3051 = vmatprep.subr.mxu0 0.0
        %3052 = vmatpush1.msra.mxu0 0.0
        %3053 = vmatprep.subr.mxu0 0.0
        %3054 = vmatpush1.msra.mxu0 0.0
        %3055 = vmatprep.subr.mxu0 0.0
        %3056 = vmatpush1.msra.mxu0 0.0
        %3057 = vmatprep.subr.mxu0 0.0
        %3058 = vmatpush1.msra.mxu0 %v1237
        %3059 = vmatprep.subr.mxu0 0.0
        %3060 = vmatpush2.msra.mxu0 0.0
        %3061 = vmatprep.subr.mxu0 0.0
        %3062 = vmatpush2.msra.mxu0 0.0
        %3063 = vmatprep.subr.mxu0 0.0
        %3064 = vmatpush2.msra.mxu0 0.0
        %3065 = vmatprep.subr.mxu0 0.0
        %3066 = vmatpush2.msra.mxu0 0.0
        %3067 = vmatprep.subr.mxu0 0.0
        %3068 = vmatpush2.msra.mxu0 0.0
        %3069 = vmatprep.subr.mxu0 0.0
        %3070 = vmatpush2.msra.mxu0 0.0
        %3071 = vmatprep.subr.mxu0 0.0
        %3072 = vmatpush2.msra.mxu0 0.0
        %3073 = vmatprep.subr.mxu0 0.0
        %3074 = vmatpush2.msra.mxu0 0.0
        %3075 = vmatprep.subr.mxu0 0.0
        %3076 = vmatpush2.msra.mxu0 0.0
        %3077 = vmatprep.subr.mxu0 0.0
        %3078 = vmatpush2.msra.mxu0 0.0
        %3079 = vmatprep.subr.mxu0 0.0
        %3080 = vmatpush2.msra.mxu0 0.0
        %3081 = vmatprep.subr.mxu0 0.0
        %3082 = vmatpush2.msra.mxu0 0.0
        %3083 = vmatprep.subr.mxu0 0.0
        %3084 = vmatpush2.msra.mxu0 0.0
        %3085 = vmatprep.subr.mxu0 0.0
        %3086 = vmatpush2.msra.mxu0 0.0
        %3087 = vmatprep.subr.mxu0 0.0
        %3088 = vmatpush2.msra.mxu0 0.0
        %3089 = vmatprep.subr.mxu0 0.0
        %3090 = vmatpush2.msra.mxu0 0.0
        %3091 = vmatprep.mubr.f32.mxu0 0.0
        %3092 = vmatmul.mubr.f32.gmra.mxu0 %v2992
        %v3093 = vpop.f32.mrf.mxu0
        %v3094 = vadd.f32 0.0, %v3093
        %v3095 = vpop.f32.mrf.mxu0
        %3096 = vmatprep.mubr.f32.mxu0 0.0
        %3097 = vmatmul.mubr.f32.gmra.mxu0 %v2995
        %v3098 = vpop.f32.mrf.mxu0
        %v3099 = vadd.f32 0.0, %v3098
        %v3100 = vpop.f32.mrf.mxu0
        %3101 = vmatprep.mubr.f32.mxu0 0.0
        %3102 = vmatmul.mubr.f32.gmra.mxu0 %v2998
        %v3103 = vpop.f32.mrf.mxu0
        %v3104 = vadd.f32 0.0, %v3103
        %v3105 = vpop.f32.mrf.mxu0
        %3106 = vmatprep.mubr.f32.mxu0 0.0
        %3107 = vmatmul.mubr.f32.gmra.mxu0 %v3001
        %v3108 = vpop.f32.mrf.mxu0
        %v3109 = vadd.f32 0.0, %v3108
        %v3110 = vpop.f32.mrf.mxu0
        %3111 = vmatprep.mubr.f32.mxu0 0.0
        %3112 = vmatmul.mubr.f32.gmra.mxu0 %v3004
        %v3113 = vpop.f32.mrf.mxu0
        %v3114 = vadd.f32 0.0, %v3113
        %v3115 = vpop.f32.mrf.mxu0
        %3116 = vmatprep.mubr.f32.mxu0 0.0
        %3117 = vmatmul.mubr.f32.gmra.mxu0 %v3007
        %v3118 = vpop.f32.mrf.mxu0
        %v3119 = vadd.f32 0.0, %v3118
        %v3120 = vpop.f32.mrf.mxu0
        %3121 = vmatprep.mubr.f32.mxu0 0.0
        %3122 = vmatmul.mubr.f32.gmra.mxu0 %v3010
        %v3123 = vpop.f32.mrf.mxu0
        %v3124 = vadd.f32 0.0, %v3123
        %v3125 = vpop.f32.mrf.mxu0
        %3126 = vmatprep.mubr.f32.mxu0 0.0
        %3127 = vmatmul.mubr.f32.gmra.mxu0 %v3013
        %v3128 = vpop.f32.mrf.mxu0
        %v3129 = vadd.f32 0.0, %v3128
        %v3130 = vpop.f32.mrf.mxu0
        %3131 = vmatprep.mubr.f32.mxu0 0.0
        %3132 = vmatmul.mubr.f32.gmra.mxu0 %v3016
        %v3133 = vpop.f32.mrf.mxu0
        %v3134 = vadd.f32 0.0, %v3133
        %v3135 = vpop.f32.mrf.mxu0
        %3136 = vmatprep.mubr.f32.mxu0 0.0
        %3137 = vmatmul.mubr.f32.gmra.mxu0 %v3019
        %v3138 = vpop.f32.mrf.mxu0
        %v3139 = vadd.f32 0.0, %v3138
        %v3140 = vpop.f32.mrf.mxu0
        %3141 = vmatprep.mubr.f32.mxu0 0.0
        %3142 = vmatmul.mubr.f32.gmra.mxu0 %v3022
        %v3143 = vpop.f32.mrf.mxu0
        %v3144 = vadd.f32 0.0, %v3143
        %v3145 = vpop.f32.mrf.mxu0
        %3146 = vmatprep.mubr.f32.mxu0 0.0
        %3147 = vmatmul.mubr.f32.gmra.mxu0 %v3025
        %v3148 = vpop.f32.mrf.mxu0
        %v3149 = vadd.f32 0.0, %v3148
        %v3150 = vpop.f32.mrf.mxu0
        %3151 = vdwg.mxu0
        %v3152 = vadd.f32 %v2967, %v3094
        %v3153 = vadd.f32 %v2968, %v3099
        %v3154 = vadd.f32 %v2969, %v3104
        %v3155 = vadd.f32 %v2970, %v3109
        %v3156 = vadd.f32 %v2971, %v3114
        %v3157 = vadd.f32 %v2972, %v3119
        %v3158 = vadd.f32 %v2973, %v3124
        %v3159 = vadd.f32 %v2974, %v3129
        %v3160 = vadd.f32 %v2975, %v3134
        %v3161 = vadd.f32 %v2976, %v3139
        %v3162 = vadd.f32 %v2977, %v3144
        %v3163 = vadd.f32 %v2978, %v3149
        %v3164 = vld [vmem:[%s221 + $0x84] sm:$0xff]
        %v3165 = vld [vmem:[%s221 + $0x8c] sm:$0xff]
        %v3166 = vld [vmem:[%s221 + $0x94] sm:$0xff]
        %v3167 = vld [vmem:[%s221 + $0x9c] sm:$0xff]
        %v3168 = vld [vmem:[%s221 + $0xa4] sm:$0xff]
        %v3169 = vld [vmem:[%s221 + $0xac] sm:$0xff]
        %v3170 = vld [vmem:[%s221 + $0xb4] sm:$0xff]
        %v3171 = vld [vmem:[%s221 + $0xbc] sm:$0xff]
        %v3172 = vld [vmem:[%s221 + $0xc4] sm:$0xff]
        %v3173 = vld [vmem:[%s221 + $0xcc] sm:$0xff]
        %v3174 = vld [vmem:[%s221 + $0xd4] sm:$0xff]
        %v3175 = vld [vmem:[%s221 + $0xdc] sm:$0xff]
        %v3177 = vsel %vm258, %v3164, 0
        %v3180 = vsel %vm258, %v3165, 0
        %v3183 = vsel %vm258, %v3166, 0
        %v3186 = vsel %vm258, %v3167, 0
        %v3189 = vsel %vm258, %v3168, 0
        %v3192 = vsel %vm258, %v3169, 0
        %v3195 = vsel %vm258, %v3170, 0
        %v3198 = vsel %vm258, %v3171, 0
        %v3201 = vsel %vm258, %v3172, 0
        %v3204 = vsel %vm258, %v3173, 0
        %v3207 = vsel %vm258, %v3174, 0
        %v3210 = vsel %vm258, %v3175, 0
        %3212 = vmatprep.subr.mxu0 0.0
        %3213 = vmatpush1.msra.mxu0 0.0
        %3214 = vmatprep.subr.mxu0 0.0
        %3215 = vmatpush1.msra.mxu0 0.0
        %3216 = vmatprep.subr.mxu0 0.0
        %3217 = vmatpush1.msra.mxu0 0.0
        %3218 = vmatprep.subr.mxu0 0.0
        %3219 = vmatpush1.msra.mxu0 0.0
        %3220 = vmatprep.subr.mxu0 0.0
        %3221 = vmatpush1.msra.mxu0 0.0
        %3222 = vmatprep.subr.mxu0 0.0
        %3223 = vmatpush1.msra.mxu0 0.0
        %3224 = vmatprep.subr.mxu0 0.0
        %3225 = vmatpush1.msra.mxu0 0.0
        %3226 = vmatprep.subr.mxu0 0.0
        %3227 = vmatpush1.msra.mxu0 0.0
        %3228 = vmatprep.subr.mxu0 0.0
        %3229 = vmatpush1.msra.mxu0 0.0
        %3230 = vmatprep.subr.mxu0 0.0
        %3231 = vmatpush1.msra.mxu0 0.0
        %3232 = vmatprep.subr.mxu0 0.0
        %3233 = vmatpush1.msra.mxu0 0.0
        %3234 = vmatprep.subr.mxu0 0.0
        %3235 = vmatpush1.msra.mxu0 0.0
        %3236 = vmatprep.subr.mxu0 0.0
        %3237 = vmatpush1.msra.mxu0 0.0
        %3238 = vmatprep.subr.mxu0 0.0
        %3239 = vmatpush1.msra.mxu0 0.0
        %3240 = vmatprep.subr.mxu0 0.0
        %3241 = vmatpush1.msra.mxu0 0.0
        %3242 = vmatprep.subr.mxu0 0.0
        %3243 = vmatpush1.msra.mxu0 %v1425
        %3244 = vmatprep.subr.mxu0 0.0
        %3245 = vmatpush2.msra.mxu0 0.0
        %3246 = vmatprep.subr.mxu0 0.0
        %3247 = vmatpush2.msra.mxu0 0.0
        %3248 = vmatprep.subr.mxu0 0.0
        %3249 = vmatpush2.msra.mxu0 0.0
        %3250 = vmatprep.subr.mxu0 0.0
        %3251 = vmatpush2.msra.mxu0 0.0
        %3252 = vmatprep.subr.mxu0 0.0
        %3253 = vmatpush2.msra.mxu0 0.0
        %3254 = vmatprep.subr.mxu0 0.0
        %3255 = vmatpush2.msra.mxu0 0.0
        %3256 = vmatprep.subr.mxu0 0.0
        %3257 = vmatpush2.msra.mxu0 0.0
        %3258 = vmatprep.subr.mxu0 0.0
        %3259 = vmatpush2.msra.mxu0 0.0
        %3260 = vmatprep.subr.mxu0 0.0
        %3261 = vmatpush2.msra.mxu0 0.0
        %3262 = vmatprep.subr.mxu0 0.0
        %3263 = vmatpush2.msra.mxu0 0.0
        %3264 = vmatprep.subr.mxu0 0.0
        %3265 = vmatpush2.msra.mxu0 0.0
        %3266 = vmatprep.subr.mxu0 0.0
        %3267 = vmatpush2.msra.mxu0 0.0
        %3268 = vmatprep.subr.mxu0 0.0
        %3269 = vmatpush2.msra.mxu0 0.0
        %3270 = vmatprep.subr.mxu0 0.0
        %3271 = vmatpush2.msra.mxu0 0.0
        %3272 = vmatprep.subr.mxu0 0.0
        %3273 = vmatpush2.msra.mxu0 0.0
        %3274 = vmatprep.subr.mxu0 0.0
        %3275 = vmatpush2.msra.mxu0 0.0
        %3276 = vmatprep.mubr.f32.mxu0 0.0
        %3277 = vmatmul.mubr.f32.gmra.mxu0 %v3177
        %v3278 = vpop.f32.mrf.mxu0
        %v3279 = vadd.f32 0.0, %v3278
        %v3280 = vpop.f32.mrf.mxu0
        %3281 = vmatprep.mubr.f32.mxu0 0.0
        %3282 = vmatmul.mubr.f32.gmra.mxu0 %v3180
        %v3283 = vpop.f32.mrf.mxu0
        %v3284 = vadd.f32 0.0, %v3283
        %v3285 = vpop.f32.mrf.mxu0
        %3286 = vmatprep.mubr.f32.mxu0 0.0
        %3287 = vmatmul.mubr.f32.gmra.mxu0 %v3183
        %v3288 = vpop.f32.mrf.mxu0
        %v3289 = vadd.f32 0.0, %v3288
        %v3290 = vpop.f32.mrf.mxu0
        %3291 = vmatprep.mubr.f32.mxu0 0.0
        %3292 = vmatmul.mubr.f32.gmra.mxu0 %v3186
        %v3293 = vpop.f32.mrf.mxu0
        %v3294 = vadd.f32 0.0, %v3293
        %v3295 = vpop.f32.mrf.mxu0
        %3296 = vmatprep.mubr.f32.mxu0 0.0
        %3297 = vmatmul.mubr.f32.gmra.mxu0 %v3189
        %v3298 = vpop.f32.mrf.mxu0
        %v3299 = vadd.f32 0.0, %v3298
        %v3300 = vpop.f32.mrf.mxu0
        %3301 = vmatprep.mubr.f32.mxu0 0.0
        %3302 = vmatmul.mubr.f32.gmra.mxu0 %v3192
        %v3303 = vpop.f32.mrf.mxu0
        %v3304 = vadd.f32 0.0, %v3303
        %v3305 = vpop.f32.mrf.mxu0
        %3306 = vmatprep.mubr.f32.mxu0 0.0
        %3307 = vmatmul.mubr.f32.gmra.mxu0 %v3195
        %v3308 = vpop.f32.mrf.mxu0
        %v3309 = vadd.f32 0.0, %v3308
        %v3310 = vpop.f32.mrf.mxu0
        %3311 = vmatprep.mubr.f32.mxu0 0.0
        %3312 = vmatmul.mubr.f32.gmra.mxu0 %v3198
        %v3313 = vpop.f32.mrf.mxu0
        %v3314 = vadd.f32 0.0, %v3313
        %v3315 = vpop.f32.mrf.mxu0
        %3316 = vmatprep.mubr.f32.mxu0 0.0
        %3317 = vmatmul.mubr.f32.gmra.mxu0 %v3201
        %v3318 = vpop.f32.mrf.mxu0
        %v3319 = vadd.f32 0.0, %v3318
        %v3320 = vpop.f32.mrf.mxu0
        %3321 = vmatprep.mubr.f32.mxu0 0.0
        %3322 = vmatmul.mubr.f32.gmra.mxu0 %v3204
        %v3323 = vpop.f32.mrf.mxu0
        %v3324 = vadd.f32 0.0, %v3323
        %v3325 = vpop.f32.mrf.mxu0
        %3326 = vmatprep.mubr.f32.mxu0 0.0
        %3327 = vmatmul.mubr.f32.gmra.mxu0 %v3207
        %v3328 = vpop.f32.mrf.mxu0
        %v3329 = vadd.f32 0.0, %v3328
        %v3330 = vpop.f32.mrf.mxu0
        %3331 = vmatprep.mubr.f32.mxu0 0.0
        %3332 = vmatmul.mubr.f32.gmra.mxu0 %v3210
        %v3333 = vpop.f32.mrf.mxu0
        %v3334 = vadd.f32 0.0, %v3333
        %v3335 = vpop.f32.mrf.mxu0
        %3336 = vdwg.mxu0
        %v3337 = vadd.f32 %v3152, %v3279
        %v3338 = vadd.f32 %v3153, %v3284
        %v3339 = vadd.f32 %v3154, %v3289
        %v3340 = vadd.f32 %v3155, %v3294
        %v3341 = vadd.f32 %v3156, %v3299
        %v3342 = vadd.f32 %v3157, %v3304
        %v3343 = vadd.f32 %v3158, %v3309
        %v3344 = vadd.f32 %v3159, %v3314
        %v3345 = vadd.f32 %v3160, %v3319
        %v3346 = vadd.f32 %v3161, %v3324
        %v3347 = vadd.f32 %v3162, %v3329
        %v3348 = vadd.f32 %v3163, %v3334
        %v3349 = vld [vmem:[%s221 + $0x85] sm:$0xff]
        %v3350 = vld [vmem:[%s221 + $0x8d] sm:$0xff]
        %v3351 = vld [vmem:[%s221 + $0x95] sm:$0xff]
        %v3352 = vld [vmem:[%s221 + $0x9d] sm:$0xff]
        %v3353 = vld [vmem:[%s221 + $0xa5] sm:$0xff]
        %v3354 = vld [vmem:[%s221 + $0xad] sm:$0xff]
        %v3355 = vld [vmem:[%s221 + $0xb5] sm:$0xff]
        %v3356 = vld [vmem:[%s221 + $0xbd] sm:$0xff]
        %v3357 = vld [vmem:[%s221 + $0xc5] sm:$0xff]
        %v3358 = vld [vmem:[%s221 + $0xcd] sm:$0xff]
        %v3359 = vld [vmem:[%s221 + $0xd5] sm:$0xff]
        %v3360 = vld [vmem:[%s221 + $0xdd] sm:$0xff]
        %v3362 = vsel %vm258, %v3349, 0
        %v3365 = vsel %vm258, %v3350, 0
        %v3368 = vsel %vm258, %v3351, 0
        %v3371 = vsel %vm258, %v3352, 0
        %v3374 = vsel %vm258, %v3353, 0
        %v3377 = vsel %vm258, %v3354, 0
        %v3380 = vsel %vm258, %v3355, 0
        %v3383 = vsel %vm258, %v3356, 0
        %v3386 = vsel %vm258, %v3357, 0
        %v3389 = vsel %vm258, %v3358, 0
        %v3392 = vsel %vm258, %v3359, 0
        %v3395 = vsel %vm258, %v3360, 0
        %3397 = vmatprep.subr.mxu0 0.0
        %3398 = vmatpush1.msra.mxu0 0.0
        %3399 = vmatprep.subr.mxu0 0.0
        %3400 = vmatpush1.msra.mxu0 0.0
        %3401 = vmatprep.subr.mxu0 0.0
        %3402 = vmatpush1.msra.mxu0 0.0
        %3403 = vmatprep.subr.mxu0 0.0
        %3404 = vmatpush1.msra.mxu0 0.0
        %3405 = vmatprep.subr.mxu0 0.0
        %3406 = vmatpush1.msra.mxu0 0.0
        %3407 = vmatprep.subr.mxu0 0.0
        %3408 = vmatpush1.msra.mxu0 0.0
        %3409 = vmatprep.subr.mxu0 0.0
        %3410 = vmatpush1.msra.mxu0 0.0
        %3411 = vmatprep.subr.mxu0 0.0
        %3412 = vmatpush1.msra.mxu0 0.0
        %3413 = vmatprep.subr.mxu0 0.0
        %3414 = vmatpush1.msra.mxu0 0.0
        %3415 = vmatprep.subr.mxu0 0.0
        %3416 = vmatpush1.msra.mxu0 0.0
        %3417 = vmatprep.subr.mxu0 0.0
        %3418 = vmatpush1.msra.mxu0 0.0
        %3419 = vmatprep.subr.mxu0 0.0
        %3420 = vmatpush1.msra.mxu0 0.0
        %3421 = vmatprep.subr.mxu0 0.0
        %3422 = vmatpush1.msra.mxu0 0.0
        %3423 = vmatprep.subr.mxu0 0.0
        %3424 = vmatpush1.msra.mxu0 0.0
        %3425 = vmatprep.subr.mxu0 0.0
        %3426 = vmatpush1.msra.mxu0 0.0
        %3427 = vmatprep.subr.mxu0 0.0
        %3428 = vmatpush1.msra.mxu0 %v1613
        %3429 = vmatprep.subr.mxu0 0.0
        %3430 = vmatpush2.msra.mxu0 0.0
        %3431 = vmatprep.subr.mxu0 0.0
        %3432 = vmatpush2.msra.mxu0 0.0
        %3433 = vmatprep.subr.mxu0 0.0
        %3434 = vmatpush2.msra.mxu0 0.0
        %3435 = vmatprep.subr.mxu0 0.0
        %3436 = vmatpush2.msra.mxu0 0.0
        %3437 = vmatprep.subr.mxu0 0.0
        %3438 = vmatpush2.msra.mxu0 0.0
        %3439 = vmatprep.subr.mxu0 0.0
        %3440 = vmatpush2.msra.mxu0 0.0
        %3441 = vmatprep.subr.mxu0 0.0
        %3442 = vmatpush2.msra.mxu0 0.0
        %3443 = vmatprep.subr.mxu0 0.0
        %3444 = vmatpush2.msra.mxu0 0.0
        %3445 = vmatprep.subr.mxu0 0.0
        %3446 = vmatpush2.msra.mxu0 0.0
        %3447 = vmatprep.subr.mxu0 0.0
        %3448 = vmatpush2.msra.mxu0 0.0
        %3449 = vmatprep.subr.mxu0 0.0
        %3450 = vmatpush2.msra.mxu0 0.0
        %3451 = vmatprep.subr.mxu0 0.0
        %3452 = vmatpush2.msra.mxu0 0.0
        %3453 = vmatprep.subr.mxu0 0.0
        %3454 = vmatpush2.msra.mxu0 0.0
        %3455 = vmatprep.subr.mxu0 0.0
        %3456 = vmatpush2.msra.mxu0 0.0
        %3457 = vmatprep.subr.mxu0 0.0
        %3458 = vmatpush2.msra.mxu0 0.0
        %3459 = vmatprep.subr.mxu0 0.0
        %3460 = vmatpush2.msra.mxu0 0.0
        %3461 = vmatprep.mubr.f32.mxu0 0.0
        %3462 = vmatmul.mubr.f32.gmra.mxu0 %v3362
        %v3463 = vpop.f32.mrf.mxu0
        %v3464 = vadd.f32 0.0, %v3463
        %v3465 = vpop.f32.mrf.mxu0
        %3466 = vmatprep.mubr.f32.mxu0 0.0
        %3467 = vmatmul.mubr.f32.gmra.mxu0 %v3365
        %v3468 = vpop.f32.mrf.mxu0
        %v3469 = vadd.f32 0.0, %v3468
        %v3470 = vpop.f32.mrf.mxu0
        %3471 = vmatprep.mubr.f32.mxu0 0.0
        %3472 = vmatmul.mubr.f32.gmra.mxu0 %v3368
        %v3473 = vpop.f32.mrf.mxu0
        %v3474 = vadd.f32 0.0, %v3473
        %v3475 = vpop.f32.mrf.mxu0
        %3476 = vmatprep.mubr.f32.mxu0 0.0
        %3477 = vmatmul.mubr.f32.gmra.mxu0 %v3371
        %v3478 = vpop.f32.mrf.mxu0
        %v3479 = vadd.f32 0.0, %v3478
        %v3480 = vpop.f32.mrf.mxu0
        %3481 = vmatprep.mubr.f32.mxu0 0.0
        %3482 = vmatmul.mubr.f32.gmra.mxu0 %v3374
        %v3483 = vpop.f32.mrf.mxu0
        %v3484 = vadd.f32 0.0, %v3483
        %v3485 = vpop.f32.mrf.mxu0
        %3486 = vmatprep.mubr.f32.mxu0 0.0
        %3487 = vmatmul.mubr.f32.gmra.mxu0 %v3377
        %v3488 = vpop.f32.mrf.mxu0
        %v3489 = vadd.f32 0.0, %v3488
        %v3490 = vpop.f32.mrf.mxu0
        %3491 = vmatprep.mubr.f32.mxu0 0.0
        %3492 = vmatmul.mubr.f32.gmra.mxu0 %v3380
        %v3493 = vpop.f32.mrf.mxu0
        %v3494 = vadd.f32 0.0, %v3493
        %v3495 = vpop.f32.mrf.mxu0
        %3496 = vmatprep.mubr.f32.mxu0 0.0
        %3497 = vmatmul.mubr.f32.gmra.mxu0 %v3383
        %v3498 = vpop.f32.mrf.mxu0
        %v3499 = vadd.f32 0.0, %v3498
        %v3500 = vpop.f32.mrf.mxu0
        %3501 = vmatprep.mubr.f32.mxu0 0.0
        %3502 = vmatmul.mubr.f32.gmra.mxu0 %v3386
        %v3503 = vpop.f32.mrf.mxu0
        %v3504 = vadd.f32 0.0, %v3503
        %v3505 = vpop.f32.mrf.mxu0
        %3506 = vmatprep.mubr.f32.mxu0 0.0
        %3507 = vmatmul.mubr.f32.gmra.mxu0 %v3389
        %v3508 = vpop.f32.mrf.mxu0
        %v3509 = vadd.f32 0.0, %v3508
        %v3510 = vpop.f32.mrf.mxu0
        %3511 = vmatprep.mubr.f32.mxu0 0.0
        %3512 = vmatmul.mubr.f32.gmra.mxu0 %v3392
        %v3513 = vpop.f32.mrf.mxu0
        %v3514 = vadd.f32 0.0, %v3513
        %v3515 = vpop.f32.mrf.mxu0
        %3516 = vmatprep.mubr.f32.mxu0 0.0
        %3517 = vmatmul.mubr.f32.gmra.mxu0 %v3395
        %v3518 = vpop.f32.mrf.mxu0
        %v3519 = vadd.f32 0.0, %v3518
        %v3520 = vpop.f32.mrf.mxu0
        %3521 = vdwg.mxu0
        %v3522 = vadd.f32 %v3337, %v3464
        %v3523 = vadd.f32 %v3338, %v3469
        %v3524 = vadd.f32 %v3339, %v3474
        %v3525 = vadd.f32 %v3340, %v3479
        %v3526 = vadd.f32 %v3341, %v3484
        %v3527 = vadd.f32 %v3342, %v3489
        %v3528 = vadd.f32 %v3343, %v3494
        %v3529 = vadd.f32 %v3344, %v3499
        %v3530 = vadd.f32 %v3345, %v3504
        %v3531 = vadd.f32 %v3346, %v3509
        %v3532 = vadd.f32 %v3347, %v3514
        %v3533 = vadd.f32 %v3348, %v3519
        %v3534 = vld [vmem:[%s221 + $0x86] sm:$0xff]
        %v3535 = vld [vmem:[%s221 + $0x8e] sm:$0xff]
        %v3536 = vld [vmem:[%s221 + $0x96] sm:$0xff]
        %v3537 = vld [vmem:[%s221 + $0x9e] sm:$0xff]
        %v3538 = vld [vmem:[%s221 + $0xa6] sm:$0xff]
        %v3539 = vld [vmem:[%s221 + $0xae] sm:$0xff]
        %v3540 = vld [vmem:[%s221 + $0xb6] sm:$0xff]
        %v3541 = vld [vmem:[%s221 + $0xbe] sm:$0xff]
        %v3542 = vld [vmem:[%s221 + $0xc6] sm:$0xff]
        %v3543 = vld [vmem:[%s221 + $0xce] sm:$0xff]
        %v3544 = vld [vmem:[%s221 + $0xd6] sm:$0xff]
        %v3545 = vld [vmem:[%s221 + $0xde] sm:$0xff]
        %v3547 = vsel %vm258, %v3534, 0
        %v3550 = vsel %vm258, %v3535, 0
        %v3553 = vsel %vm258, %v3536, 0
        %v3556 = vsel %vm258, %v3537, 0
        %v3559 = vsel %vm258, %v3538, 0
        %v3562 = vsel %vm258, %v3539, 0
        %v3565 = vsel %vm258, %v3540, 0
        %v3568 = vsel %vm258, %v3541, 0
        %v3571 = vsel %vm258, %v3542, 0
        %v3574 = vsel %vm258, %v3543, 0
        %v3577 = vsel %vm258, %v3544, 0
        %v3580 = vsel %vm258, %v3545, 0
        %3582 = vmatprep.subr.mxu0 0.0
        %3583 = vmatpush1.msra.mxu0 0.0
        %3584 = vmatprep.subr.mxu0 0.0
        %3585 = vmatpush1.msra.mxu0 0.0
        %3586 = vmatprep.subr.mxu0 0.0
        %3587 = vmatpush1.msra.mxu0 0.0
        %3588 = vmatprep.subr.mxu0 0.0
        %3589 = vmatpush1.msra.mxu0 0.0
        %3590 = vmatprep.subr.mxu0 0.0
        %3591 = vmatpush1.msra.mxu0 0.0
        %3592 = vmatprep.subr.mxu0 0.0
        %3593 = vmatpush1.msra.mxu0 0.0
        %3594 = vmatprep.subr.mxu0 0.0
        %3595 = vmatpush1.msra.mxu0 0.0
        %3596 = vmatprep.subr.mxu0 0.0
        %3597 = vmatpush1.msra.mxu0 0.0
        %3598 = vmatprep.subr.mxu0 0.0
        %3599 = vmatpush1.msra.mxu0 0.0
        %3600 = vmatprep.subr.mxu0 0.0
        %3601 = vmatpush1.msra.mxu0 0.0
        %3602 = vmatprep.subr.mxu0 0.0
        %3603 = vmatpush1.msra.mxu0 0.0
        %3604 = vmatprep.subr.mxu0 0.0
        %3605 = vmatpush1.msra.mxu0 0.0
        %3606 = vmatprep.subr.mxu0 0.0
        %3607 = vmatpush1.msra.mxu0 0.0
        %3608 = vmatprep.subr.mxu0 0.0
        %3609 = vmatpush1.msra.mxu0 0.0
        %3610 = vmatprep.subr.mxu0 0.0
        %3611 = vmatpush1.msra.mxu0 0.0
        %3612 = vmatprep.subr.mxu0 0.0
        %3613 = vmatpush1.msra.mxu0 %v1801
        %3614 = vmatprep.subr.mxu0 0.0
        %3615 = vmatpush2.msra.mxu0 0.0
        %3616 = vmatprep.subr.mxu0 0.0
        %3617 = vmatpush2.msra.mxu0 0.0
        %3618 = vmatprep.subr.mxu0 0.0
        %3619 = vmatpush2.msra.mxu0 0.0
        %3620 = vmatprep.subr.mxu0 0.0
        %3621 = vmatpush2.msra.mxu0 0.0
        %3622 = vmatprep.subr.mxu0 0.0
        %3623 = vmatpush2.msra.mxu0 0.0
        %3624 = vmatprep.subr.mxu0 0.0
        %3625 = vmatpush2.msra.mxu0 0.0
        %3626 = vmatprep.subr.mxu0 0.0
        %3627 = vmatpush2.msra.mxu0 0.0
        %3628 = vmatprep.subr.mxu0 0.0
        %3629 = vmatpush2.msra.mxu0 0.0
        %3630 = vmatprep.subr.mxu0 0.0
        %3631 = vmatpush2.msra.mxu0 0.0
        %3632 = vmatprep.subr.mxu0 0.0
        %3633 = vmatpush2.msra.mxu0 0.0
        %3634 = vmatprep.subr.mxu0 0.0
        %3635 = vmatpush2.msra.mxu0 0.0
        %3636 = vmatprep.subr.mxu0 0.0
        %3637 = vmatpush2.msra.mxu0 0.0
        %3638 = vmatprep.subr.mxu0 0.0
        %3639 = vmatpush2.msra.mxu0 0.0
        %3640 = vmatprep.subr.mxu0 0.0
        %3641 = vmatpush2.msra.mxu0 0.0
        %3642 = vmatprep.subr.mxu0 0.0
        %3643 = vmatpush2.msra.mxu0 0.0
        %3644 = vmatprep.subr.mxu0 0.0
        %3645 = vmatpush2.msra.mxu0 0.0
        %3646 = vmatprep.mubr.f32.mxu0 0.0
        %3647 = vmatmul.mubr.f32.gmra.mxu0 %v3547
        %v3648 = vpop.f32.mrf.mxu0
        %v3649 = vadd.f32 0.0, %v3648
        %v3650 = vpop.f32.mrf.mxu0
        %3651 = vmatprep.mubr.f32.mxu0 0.0
        %3652 = vmatmul.mubr.f32.gmra.mxu0 %v3550
        %v3653 = vpop.f32.mrf.mxu0
        %v3654 = vadd.f32 0.0, %v3653
        %v3655 = vpop.f32.mrf.mxu0
        %3656 = vmatprep.mubr.f32.mxu0 0.0
        %3657 = vmatmul.mubr.f32.gmra.mxu0 %v3553
        %v3658 = vpop.f32.mrf.mxu0
        %v3659 = vadd.f32 0.0, %v3658
        %v3660 = vpop.f32.mrf.mxu0
        %3661 = vmatprep.mubr.f32.mxu0 0.0
        %3662 = vmatmul.mubr.f32.gmra.mxu0 %v3556
        %v3663 = vpop.f32.mrf.mxu0
        %v3664 = vadd.f32 0.0, %v3663
        %v3665 = vpop.f32.mrf.mxu0
        %3666 = vmatprep.mubr.f32.mxu0 0.0
        %3667 = vmatmul.mubr.f32.gmra.mxu0 %v3559
        %v3668 = vpop.f32.mrf.mxu0
        %v3669 = vadd.f32 0.0, %v3668
        %v3670 = vpop.f32.mrf.mxu0
        %3671 = vmatprep.mubr.f32.mxu0 0.0
        %3672 = vmatmul.mubr.f32.gmra.mxu0 %v3562
        %v3673 = vpop.f32.mrf.mxu0
        %v3674 = vadd.f32 0.0, %v3673
        %v3675 = vpop.f32.mrf.mxu0
        %3676 = vmatprep.mubr.f32.mxu0 0.0
        %3677 = vmatmul.mubr.f32.gmra.mxu0 %v3565
        %v3678 = vpop.f32.mrf.mxu0
        %v3679 = vadd.f32 0.0, %v3678
        %v3680 = vpop.f32.mrf.mxu0
        %3681 = vmatprep.mubr.f32.mxu0 0.0
        %3682 = vmatmul.mubr.f32.gmra.mxu0 %v3568
        %v3683 = vpop.f32.mrf.mxu0
        %v3684 = vadd.f32 0.0, %v3683
        %v3685 = vpop.f32.mrf.mxu0
        %3686 = vmatprep.mubr.f32.mxu0 0.0
        %3687 = vmatmul.mubr.f32.gmra.mxu0 %v3571
        %v3688 = vpop.f32.mrf.mxu0
        %v3689 = vadd.f32 0.0, %v3688
        %v3690 = vpop.f32.mrf.mxu0
        %3691 = vmatprep.mubr.f32.mxu0 0.0
        %3692 = vmatmul.mubr.f32.gmra.mxu0 %v3574
        %v3693 = vpop.f32.mrf.mxu0
        %v3694 = vadd.f32 0.0, %v3693
        %v3695 = vpop.f32.mrf.mxu0
        %3696 = vmatprep.mubr.f32.mxu0 0.0
        %3697 = vmatmul.mubr.f32.gmra.mxu0 %v3577
        %v3698 = vpop.f32.mrf.mxu0
        %v3699 = vadd.f32 0.0, %v3698
        %v3700 = vpop.f32.mrf.mxu0
        %3701 = vmatprep.mubr.f32.mxu0 0.0
        %3702 = vmatmul.mubr.f32.gmra.mxu0 %v3580
        %v3703 = vpop.f32.mrf.mxu0
        %v3704 = vadd.f32 0.0, %v3703
        %v3705 = vpop.f32.mrf.mxu0
        %3706 = vdwg.mxu0
        %v3707 = vadd.f32 %v3522, %v3649
        %v3708 = vadd.f32 %v3523, %v3654
        %v3709 = vadd.f32 %v3524, %v3659
        %v3710 = vadd.f32 %v3525, %v3664
        %v3711 = vadd.f32 %v3526, %v3669
        %v3712 = vadd.f32 %v3527, %v3674
        %v3713 = vadd.f32 %v3528, %v3679
        %v3714 = vadd.f32 %v3529, %v3684
        %v3715 = vadd.f32 %v3530, %v3689
        %v3716 = vadd.f32 %v3531, %v3694
        %v3717 = vadd.f32 %v3532, %v3699
        %v3718 = vadd.f32 %v3533, %v3704
        %v3719 = vmax.f32 %v3707, 0.0
        %v3720 = vmax.f32 %v3708, 0.0
        %v3721 = vmax.f32 %v3709, 0.0
        %v3722 = vmax.f32 %v3710, 0.0
        %v3723 = vmax.f32 %v3711, 0.0
        %v3724 = vmax.f32 %v3712, 0.0
        %v3725 = vmax.f32 %v3713, 0.0
        %v3726 = vmax.f32 %v3714, 0.0
        %v3727 = vmax.f32 %v3715, 0.0
        %v3728 = vmax.f32 %v3716, 0.0
        %v3729 = vmax.f32 %v3717, 0.0
        %v3730 = vmax.f32 %v3718, 0.0
        %v3731 = vld [vmem:[%s1 + $0x60] sm:$0xff]
        %v3732 = vld [vmem:[%s1 + $0x68] sm:$0xff]
        %v3733 = vld [vmem:[%s1 + $0x70] sm:$0xff]
        %v3734 = vld [vmem:[%s1 + $0x78] sm:$0xff]
        %v3735 = vld [vmem:[%s1 + $0x80] sm:$0xff]
        %v3736 = vld [vmem:[%s1 + $0x88] sm:$0xff]
        %v3737 = vld [vmem:[%s1 + $0x90] sm:$0xff]
        %v3738 = vld [vmem:[%s1 + $0x98] sm:$0xff]
        %v3739 = vld [vmem:[%s1 + $0xa0] sm:$0xff]
        %v3740 = vld [vmem:[%s1 + $0xa8] sm:$0xff]
        %v3741 = vld [vmem:[%s1 + $0xb0] sm:$0xff]
        %v3742 = vld [vmem:[%s1 + $0xb8] sm:$0xff]
        %3744 = vset.pattern.permute.xlu0 0
        %3745 = vperm.xlu0 %3744, %v3731
        %v3746 = vpop.permute.xlu0 %3745
        %3749 = vset.pattern.permute.xlu0 0
        %3750 = vperm.xlu0 %3749, %v3732
        %v3751 = vpop.permute.xlu0 %3750
        %3754 = vset.pattern.permute.xlu0 0
        %3755 = vperm.xlu0 %3754, %v3733
        %v3756 = vpop.permute.xlu0 %3755
        %3759 = vset.pattern.permute.xlu0 0
        %3760 = vperm.xlu0 %3759, %v3734
        %v3761 = vpop.permute.xlu0 %3760
        %3764 = vset.pattern.permute.xlu0 0
        %3765 = vperm.xlu0 %3764, %v3735
        %v3766 = vpop.permute.xlu0 %3765
        %3769 = vset.pattern.permute.xlu0 0
        %3770 = vperm.xlu0 %3769, %v3736
        %v3771 = vpop.permute.xlu0 %3770
        %3774 = vset.pattern.permute.xlu0 0
        %3775 = vperm.xlu0 %3774, %v3737
        %v3776 = vpop.permute.xlu0 %3775
        %3779 = vset.pattern.permute.xlu0 0
        %3780 = vperm.xlu0 %3779, %v3738
        %v3781 = vpop.permute.xlu0 %3780
        %3784 = vset.pattern.permute.xlu0 0
        %3785 = vperm.xlu0 %3784, %v3739
        %v3786 = vpop.permute.xlu0 %3785
        %3789 = vset.pattern.permute.xlu0 0
        %3790 = vperm.xlu0 %3789, %v3740
        %v3791 = vpop.permute.xlu0 %3790
        %3794 = vset.pattern.permute.xlu0 0
        %3795 = vperm.xlu0 %3794, %v3741
        %v3796 = vpop.permute.xlu0 %3795
        %3799 = vset.pattern.permute.xlu0 0
        %3800 = vperm.xlu0 %3799, %v3742
        %v3801 = vpop.permute.xlu0 %3800
        %v3803 = vmul.f32 %v3719, %v3746
        %v3804 = vmul.f32 %v3720, %v3751
        %v3805 = vmul.f32 %v3721, %v3756
        %v3806 = vmul.f32 %v3722, %v3761
        %v3807 = vmul.f32 %v3723, %v3766
        %v3808 = vmul.f32 %v3724, %v3771
        %v3809 = vmul.f32 %v3725, %v3776
        %v3810 = vmul.f32 %v3726, %v3781
        %v3811 = vmul.f32 %v3727, %v3786
        %v3812 = vmul.f32 %v3728, %v3791
        %v3813 = vmul.f32 %v3729, %v3796
        %v3814 = vmul.f32 %v3730, %v3801
        %v3815 = vadd.f32 %v3803, %v3804
        %v3816 = vadd.f32 %v3815, %v3805
        %v3817 = vadd.f32 %v3816, %v3806
        %v3818 = vadd.f32 %v3817, %v3807
        %v3819 = vadd.f32 %v3818, %v3808
        %v3820 = vadd.f32 %v3819, %v3809
        %v3821 = vadd.f32 %v3820, %v3810
        %v3822 = vadd.f32 %v3821, %v3811
        %v3823 = vadd.f32 %v3822, %v3812
        %v3824 = vadd.f32 %v3823, %v3813
        %v3825 = vadd.f32 %v3824, %v3814
        %v3826 = vrot.slane %v3825, 4
        %v3827 = vadd.f32 %v3825, %v3826
        %v3828 = vrot.slane %v3827, 2
        %v3829 = vadd.f32 %v3827, %v3828
        %v3830 = vrot.slane %v3829, 1
        %v3831 = vadd.f32 %v3829, %v3830
        %v3832 = vadd.f32 %v2053, %v3831
        %v3833 = vld [vmem:[%s221 + $0xc0] sm:$0xff]
        %v3834 = vld [vmem:[%s221 + $0xc8] sm:$0xff]
        %v3835 = vld [vmem:[%s221 + $0xd0] sm:$0xff]
        %v3836 = vld [vmem:[%s221 + $0xd8] sm:$0xff]
        %v3837 = vld [vmem:[%s221 + $0xe0] sm:$0xff]
        %v3838 = vld [vmem:[%s221 + $0xe8] sm:$0xff]
        %v3839 = vld [vmem:[%s221 + $0xf0] sm:$0xff]
        %v3840 = vld [vmem:[%s221 + $0xf8] sm:$0xff]
        %v3841 = vld [vmem:[%s221 + $0x100] sm:$0xff]
        %v3842 = vld [vmem:[%s221 + $0x108] sm:$0xff]
        %v3843 = vld [vmem:[%s221 + $0x110] sm:$0xff]
        %v3844 = vld [vmem:[%s221 + $0x118] sm:$0xff]
        %v3846 = vsel %vm258, %v3833, 0
        %v3849 = vsel %vm258, %v3834, 0
        %v3852 = vsel %vm258, %v3835, 0
        %v3855 = vsel %vm258, %v3836, 0
        %v3858 = vsel %vm258, %v3837, 0
        %v3861 = vsel %vm258, %v3838, 0
        %v3864 = vsel %vm258, %v3839, 0
        %v3867 = vsel %vm258, %v3840, 0
        %v3870 = vsel %vm258, %v3841, 0
        %v3873 = vsel %vm258, %v3842, 0
        %v3876 = vsel %vm258, %v3843, 0
        %v3879 = vsel %vm258, %v3844, 0
        %3881 = vmatprep.subr.mxu0 0.0
        %3882 = vmatpush1.msra.mxu0 0.0
        %3883 = vmatprep.subr.mxu0 0.0
        %3884 = vmatpush1.msra.mxu0 0.0
        %3885 = vmatprep.subr.mxu0 0.0
        %3886 = vmatpush1.msra.mxu0 0.0
        %3887 = vmatprep.subr.mxu0 0.0
        %3888 = vmatpush1.msra.mxu0 0.0
        %3889 = vmatprep.subr.mxu0 0.0
        %3890 = vmatpush1.msra.mxu0 0.0
        %3891 = vmatprep.subr.mxu0 0.0
        %3892 = vmatpush1.msra.mxu0 0.0
        %3893 = vmatprep.subr.mxu0 0.0
        %3894 = vmatpush1.msra.mxu0 0.0
        %3895 = vmatprep.subr.mxu0 0.0
        %3896 = vmatpush1.msra.mxu0 0.0
        %3897 = vmatprep.subr.mxu0 0.0
        %3898 = vmatpush1.msra.mxu0 0.0
        %3899 = vmatprep.subr.mxu0 0.0
        %3900 = vmatpush1.msra.mxu0 0.0
        %3901 = vmatprep.subr.mxu0 0.0
        %3902 = vmatpush1.msra.mxu0 0.0
        %3903 = vmatprep.subr.mxu0 0.0
        %3904 = vmatpush1.msra.mxu0 0.0
        %3905 = vmatprep.subr.mxu0 0.0
        %3906 = vmatpush1.msra.mxu0 0.0
        %3907 = vmatprep.subr.mxu0 0.0
        %3908 = vmatpush1.msra.mxu0 0.0
        %3909 = vmatprep.subr.mxu0 0.0
        %3910 = vmatpush1.msra.mxu0 0.0
        %3911 = vmatprep.subr.mxu0 0.0
        %3912 = vmatpush1.msra.mxu0 %v297
        %3913 = vmatprep.subr.mxu0 0.0
        %3914 = vmatpush2.msra.mxu0 0.0
        %3915 = vmatprep.subr.mxu0 0.0
        %3916 = vmatpush2.msra.mxu0 0.0
        %3917 = vmatprep.subr.mxu0 0.0
        %3918 = vmatpush2.msra.mxu0 0.0
        %3919 = vmatprep.subr.mxu0 0.0
        %3920 = vmatpush2.msra.mxu0 0.0
        %3921 = vmatprep.subr.mxu0 0.0
        %3922 = vmatpush2.msra.mxu0 0.0
        %3923 = vmatprep.subr.mxu0 0.0
        %3924 = vmatpush2.msra.mxu0 0.0
        %3925 = vmatprep.subr.mxu0 0.0
        %3926 = vmatpush2.msra.mxu0 0.0
        %3927 = vmatprep.subr.mxu0 0.0
        %3928 = vmatpush2.msra.mxu0 0.0
        %3929 = vmatprep.subr.mxu0 0.0
        %3930 = vmatpush2.msra.mxu0 0.0
        %3931 = vmatprep.subr.mxu0 0.0
        %3932 = vmatpush2.msra.mxu0 0.0
        %3933 = vmatprep.subr.mxu0 0.0
        %3934 = vmatpush2.msra.mxu0 0.0
        %3935 = vmatprep.subr.mxu0 0.0
        %3936 = vmatpush2.msra.mxu0 0.0
        %3937 = vmatprep.subr.mxu0 0.0
        %3938 = vmatpush2.msra.mxu0 0.0
        %3939 = vmatprep.subr.mxu0 0.0
        %3940 = vmatpush2.msra.mxu0 0.0
        %3941 = vmatprep.subr.mxu0 0.0
        %3942 = vmatpush2.msra.mxu0 0.0
        %3943 = vmatprep.subr.mxu0 0.0
        %3944 = vmatpush2.msra.mxu0 0.0
        %3945 = vmatprep.mubr.f32.mxu0 0.0
        %3946 = vmatmul.mubr.f32.gmra.mxu0 %v3846
        %v3947 = vpop.f32.mrf.mxu0
        %v3948 = vadd.f32 0.0, %v3947
        %v3949 = vpop.f32.mrf.mxu0
        %3950 = vmatprep.mubr.f32.mxu0 0.0
        %3951 = vmatmul.mubr.f32.gmra.mxu0 %v3849
        %v3952 = vpop.f32.mrf.mxu0
        %v3953 = vadd.f32 0.0, %v3952
        %v3954 = vpop.f32.mrf.mxu0
        %3955 = vmatprep.mubr.f32.mxu0 0.0
        %3956 = vmatmul.mubr.f32.gmra.mxu0 %v3852
        %v3957 = vpop.f32.mrf.mxu0
        %v3958 = vadd.f32 0.0, %v3957
        %v3959 = vpop.f32.mrf.mxu0
        %3960 = vmatprep.mubr.f32.mxu0 0.0
        %3961 = vmatmul.mubr.f32.gmra.mxu0 %v3855
        %v3962 = vpop.f32.mrf.mxu0
        %v3963 = vadd.f32 0.0, %v3962
        %v3964 = vpop.f32.mrf.mxu0
        %3965 = vmatprep.mubr.f32.mxu0 0.0
        %3966 = vmatmul.mubr.f32.gmra.mxu0 %v3858
        %v3967 = vpop.f32.mrf.mxu0
        %v3968 = vadd.f32 0.0, %v3967
        %v3969 = vpop.f32.mrf.mxu0
        %3970 = vmatprep.mubr.f32.mxu0 0.0
        %3971 = vmatmul.mubr.f32.gmra.mxu0 %v3861
        %v3972 = vpop.f32.mrf.mxu0
        %v3973 = vadd.f32 0.0, %v3972
        %v3974 = vpop.f32.mrf.mxu0
        %3975 = vmatprep.mubr.f32.mxu0 0.0
        %3976 = vmatmul.mubr.f32.gmra.mxu0 %v3864
        %v3977 = vpop.f32.mrf.mxu0
        %v3978 = vadd.f32 0.0, %v3977
        %v3979 = vpop.f32.mrf.mxu0
        %3980 = vmatprep.mubr.f32.mxu0 0.0
        %3981 = vmatmul.mubr.f32.gmra.mxu0 %v3867
        %v3982 = vpop.f32.mrf.mxu0
        %v3983 = vadd.f32 0.0, %v3982
        %v3984 = vpop.f32.mrf.mxu0
        %3985 = vmatprep.mubr.f32.mxu0 0.0
        %3986 = vmatmul.mubr.f32.gmra.mxu0 %v3870
        %v3987 = vpop.f32.mrf.mxu0
        %v3988 = vadd.f32 0.0, %v3987
        %v3989 = vpop.f32.mrf.mxu0
        %3990 = vmatprep.mubr.f32.mxu0 0.0
        %3991 = vmatmul.mubr.f32.gmra.mxu0 %v3873
        %v3992 = vpop.f32.mrf.mxu0
        %v3993 = vadd.f32 0.0, %v3992
        %v3994 = vpop.f32.mrf.mxu0
        %3995 = vmatprep.mubr.f32.mxu0 0.0
        %3996 = vmatmul.mubr.f32.gmra.mxu0 %v3876
        %v3997 = vpop.f32.mrf.mxu0
        %v3998 = vadd.f32 0.0, %v3997
        %v3999 = vpop.f32.mrf.mxu0
        %4000 = vmatprep.mubr.f32.mxu0 0.0
        %4001 = vmatmul.mubr.f32.gmra.mxu0 %v3879
        %v4002 = vpop.f32.mrf.mxu0
        %v4003 = vadd.f32 0.0, %v4002
        %v4004 = vpop.f32.mrf.mxu0
        %4005 = vdwg.mxu0
        %v4006 = vadd.f32 %v244, %v3948
        %v4007 = vadd.f32 %v244, %v3953
        %v4008 = vadd.f32 %v244, %v3958
        %v4009 = vadd.f32 %v244, %v3963
        %v4010 = vadd.f32 %v244, %v3968
        %v4011 = vadd.f32 %v244, %v3973
        %v4012 = vadd.f32 %v244, %v3978
        %v4013 = vadd.f32 %v244, %v3983
        %v4014 = vadd.f32 %v244, %v3988
        %v4015 = vadd.f32 %v244, %v3993
        %v4016 = vadd.f32 %v244, %v3998
        %v4017 = vadd.f32 %v244, %v4003
        %v4018 = vld [vmem:[%s221 + $0xc1] sm:$0xff]
        %v4019 = vld [vmem:[%s221 + $0xc9] sm:$0xff]
        %v4020 = vld [vmem:[%s221 + $0xd1] sm:$0xff]
        %v4021 = vld [vmem:[%s221 + $0xd9] sm:$0xff]
        %v4022 = vld [vmem:[%s221 + $0xe1] sm:$0xff]
        %v4023 = vld [vmem:[%s221 + $0xe9] sm:$0xff]
        %v4024 = vld [vmem:[%s221 + $0xf1] sm:$0xff]
        %v4025 = vld [vmem:[%s221 + $0xf9] sm:$0xff]
        %v4026 = vld [vmem:[%s221 + $0x101] sm:$0xff]
        %v4027 = vld [vmem:[%s221 + $0x109] sm:$0xff]
        %v4028 = vld [vmem:[%s221 + $0x111] sm:$0xff]
        %v4029 = vld [vmem:[%s221 + $0x119] sm:$0xff]
        %v4031 = vsel %vm258, %v4018, 0
        %v4034 = vsel %vm258, %v4019, 0
        %v4037 = vsel %vm258, %v4020, 0
        %v4040 = vsel %vm258, %v4021, 0
        %v4043 = vsel %vm258, %v4022, 0
        %v4046 = vsel %vm258, %v4023, 0
        %v4049 = vsel %vm258, %v4024, 0
        %v4052 = vsel %vm258, %v4025, 0
        %v4055 = vsel %vm258, %v4026, 0
        %v4058 = vsel %vm258, %v4027, 0
        %v4061 = vsel %vm258, %v4028, 0
        %v4064 = vsel %vm258, %v4029, 0
        %4066 = vmatprep.subr.mxu0 0.0
        %4067 = vmatpush1.msra.mxu0 0.0
        %4068 = vmatprep.subr.mxu0 0.0
        %4069 = vmatpush1.msra.mxu0 0.0
        %4070 = vmatprep.subr.mxu0 0.0
        %4071 = vmatpush1.msra.mxu0 0.0
        %4072 = vmatprep.subr.mxu0 0.0
        %4073 = vmatpush1.msra.mxu0 0.0
        %4074 = vmatprep.subr.mxu0 0.0
        %4075 = vmatpush1.msra.mxu0 0.0
        %4076 = vmatprep.subr.mxu0 0.0
        %4077 = vmatpush1.msra.mxu0 0.0
        %4078 = vmatprep.subr.mxu0 0.0
        %4079 = vmatpush1.msra.mxu0 0.0
        %4080 = vmatprep.subr.mxu0 0.0
        %4081 = vmatpush1.msra.mxu0 0.0
        %4082 = vmatprep.subr.mxu0 0.0
        %4083 = vmatpush1.msra.mxu0 0.0
        %4084 = vmatprep.subr.mxu0 0.0
        %4085 = vmatpush1.msra.mxu0 0.0
        %4086 = vmatprep.subr.mxu0 0.0
        %4087 = vmatpush1.msra.mxu0 0.0
        %4088 = vmatprep.subr.mxu0 0.0
        %4089 = vmatpush1.msra.mxu0 0.0
        %4090 = vmatprep.subr.mxu0 0.0
        %4091 = vmatpush1.msra.mxu0 0.0
        %4092 = vmatprep.subr.mxu0 0.0
        %4093 = vmatpush1.msra.mxu0 0.0
        %4094 = vmatprep.subr.mxu0 0.0
        %4095 = vmatpush1.msra.mxu0 0.0
        %4096 = vmatprep.subr.mxu0 0.0
        %4097 = vmatpush1.msra.mxu0 %v485
        %4098 = vmatprep.subr.mxu0 0.0
        %4099 = vmatpush2.msra.mxu0 0.0
        %4100 = vmatprep.subr.mxu0 0.0
        %4101 = vmatpush2.msra.mxu0 0.0
        %4102 = vmatprep.subr.mxu0 0.0
        %4103 = vmatpush2.msra.mxu0 0.0
        %4104 = vmatprep.subr.mxu0 0.0
        %4105 = vmatpush2.msra.mxu0 0.0
        %4106 = vmatprep.subr.mxu0 0.0
        %4107 = vmatpush2.msra.mxu0 0.0
        %4108 = vmatprep.subr.mxu0 0.0
        %4109 = vmatpush2.msra.mxu0 0.0
        %4110 = vmatprep.subr.mxu0 0.0
        %4111 = vmatpush2.msra.mxu0 0.0
        %4112 = vmatprep.subr.mxu0 0.0
        %4113 = vmatpush2.msra.mxu0 0.0
        %4114 = vmatprep.subr.mxu0 0.0
        %4115 = vmatpush2.msra.mxu0 0.0
        %4116 = vmatprep.subr.mxu0 0.0
        %4117 = vmatpush2.msra.mxu0 0.0
        %4118 = vmatprep.subr.mxu0 0.0
        %4119 = vmatpush2.msra.mxu0 0.0
        %4120 = vmatprep.subr.mxu0 0.0
        %4121 = vmatpush2.msra.mxu0 0.0
        %4122 = vmatprep.subr.mxu0 0.0
        %4123 = vmatpush2.msra.mxu0 0.0
        %4124 = vmatprep.subr.mxu0 0.0
        %4125 = vmatpush2.msra.mxu0 0.0
        %4126 = vmatprep.subr.mxu0 0.0
        %4127 = vmatpush2.msra.mxu0 0.0
        %4128 = vmatprep.subr.mxu0 0.0
        %4129 = vmatpush2.msra.mxu0 0.0
        %4130 = vmatprep.mubr.f32.mxu0 0.0
        %4131 = vmatmul.mubr.f32.gmra.mxu0 %v4031
        %v4132 = vpop.f32.mrf.mxu0
        %v4133 = vadd.f32 0.0, %v4132
        %v4134 = vpop.f32.mrf.mxu0
        %4135 = vmatprep.mubr.f32.mxu0 0.0
        %4136 = vmatmul.mubr.f32.gmra.mxu0 %v4034
        %v4137 = vpop.f32.mrf.mxu0
        %v4138 = vadd.f32 0.0, %v4137
        %v4139 = vpop.f32.mrf.mxu0
        %4140 = vmatprep.mubr.f32.mxu0 0.0
        %4141 = vmatmul.mubr.f32.gmra.mxu0 %v4037
        %v4142 = vpop.f32.mrf.mxu0
        %v4143 = vadd.f32 0.0, %v4142
        %v4144 = vpop.f32.mrf.mxu0
        %4145 = vmatprep.mubr.f32.mxu0 0.0
        %4146 = vmatmul.mubr.f32.gmra.mxu0 %v4040
        %v4147 = vpop.f32.mrf.mxu0
        %v4148 = vadd.f32 0.0, %v4147
        %v4149 = vpop.f32.mrf.mxu0
        %4150 = vmatprep.mubr.f32.mxu0 0.0
        %4151 = vmatmul.mubr.f32.gmra.mxu0 %v4043
        %v4152 = vpop.f32.mrf.mxu0
        %v4153 = vadd.f32 0.0, %v4152
        %v4154 = vpop.f32.mrf.mxu0
        %4155 = vmatprep.mubr.f32.mxu0 0.0
        %4156 = vmatmul.mubr.f32.gmra.mxu0 %v4046
        %v4157 = vpop.f32.mrf.mxu0
        %v4158 = vadd.f32 0.0, %v4157
        %v4159 = vpop.f32.mrf.mxu0
        %4160 = vmatprep.mubr.f32.mxu0 0.0
        %4161 = vmatmul.mubr.f32.gmra.mxu0 %v4049
        %v4162 = vpop.f32.mrf.mxu0
        %v4163 = vadd.f32 0.0, %v4162
        %v4164 = vpop.f32.mrf.mxu0
        %4165 = vmatprep.mubr.f32.mxu0 0.0
        %4166 = vmatmul.mubr.f32.gmra.mxu0 %v4052
        %v4167 = vpop.f32.mrf.mxu0
        %v4168 = vadd.f32 0.0, %v4167
        %v4169 = vpop.f32.mrf.mxu0
        %4170 = vmatprep.mubr.f32.mxu0 0.0
        %4171 = vmatmul.mubr.f32.gmra.mxu0 %v4055
        %v4172 = vpop.f32.mrf.mxu0
        %v4173 = vadd.f32 0.0, %v4172
        %v4174 = vpop.f32.mrf.mxu0
        %4175 = vmatprep.mubr.f32.mxu0 0.0
        %4176 = vmatmul.mubr.f32.gmra.mxu0 %v4058
        %v4177 = vpop.f32.mrf.mxu0
        %v4178 = vadd.f32 0.0, %v4177
        %v4179 = vpop.f32.mrf.mxu0
        %4180 = vmatprep.mubr.f32.mxu0 0.0
        %4181 = vmatmul.mubr.f32.gmra.mxu0 %v4061
        %v4182 = vpop.f32.mrf.mxu0
        %v4183 = vadd.f32 0.0, %v4182
        %v4184 = vpop.f32.mrf.mxu0
        %4185 = vmatprep.mubr.f32.mxu0 0.0
        %4186 = vmatmul.mubr.f32.gmra.mxu0 %v4064
        %v4187 = vpop.f32.mrf.mxu0
        %v4188 = vadd.f32 0.0, %v4187
        %v4189 = vpop.f32.mrf.mxu0
        %4190 = vdwg.mxu0
        %v4191 = vadd.f32 %v4006, %v4133
        %v4192 = vadd.f32 %v4007, %v4138
        %v4193 = vadd.f32 %v4008, %v4143
        %v4194 = vadd.f32 %v4009, %v4148
        %v4195 = vadd.f32 %v4010, %v4153
        %v4196 = vadd.f32 %v4011, %v4158
        %v4197 = vadd.f32 %v4012, %v4163
        %v4198 = vadd.f32 %v4013, %v4168
        %v4199 = vadd.f32 %v4014, %v4173
        %v4200 = vadd.f32 %v4015, %v4178
        %v4201 = vadd.f32 %v4016, %v4183
        %v4202 = vadd.f32 %v4017, %v4188
        %v4203 = vld [vmem:[%s221 + $0xc2] sm:$0xff]
        %v4204 = vld [vmem:[%s221 + $0xca] sm:$0xff]
        %v4205 = vld [vmem:[%s221 + $0xd2] sm:$0xff]
        %v4206 = vld [vmem:[%s221 + $0xda] sm:$0xff]
        %v4207 = vld [vmem:[%s221 + $0xe2] sm:$0xff]
        %v4208 = vld [vmem:[%s221 + $0xea] sm:$0xff]
        %v4209 = vld [vmem:[%s221 + $0xf2] sm:$0xff]
        %v4210 = vld [vmem:[%s221 + $0xfa] sm:$0xff]
        %v4211 = vld [vmem:[%s221 + $0x102] sm:$0xff]
        %v4212 = vld [vmem:[%s221 + $0x10a] sm:$0xff]
        %v4213 = vld [vmem:[%s221 + $0x112] sm:$0xff]
        %v4214 = vld [vmem:[%s221 + $0x11a] sm:$0xff]
        %v4216 = vsel %vm258, %v4203, 0
        %v4219 = vsel %vm258, %v4204, 0
        %v4222 = vsel %vm258, %v4205, 0
        %v4225 = vsel %vm258, %v4206, 0
        %v4228 = vsel %vm258, %v4207, 0
        %v4231 = vsel %vm258, %v4208, 0
        %v4234 = vsel %vm258, %v4209, 0
        %v4237 = vsel %vm258, %v4210, 0
        %v4240 = vsel %vm258, %v4211, 0
        %v4243 = vsel %vm258, %v4212, 0
        %v4246 = vsel %vm258, %v4213, 0
        %v4249 = vsel %vm258, %v4214, 0
        %4251 = vmatprep.subr.mxu0 0.0
        %4252 = vmatpush1.msra.mxu0 0.0
        %4253 = vmatprep.subr.mxu0 0.0
        %4254 = vmatpush1.msra.mxu0 0.0
        %4255 = vmatprep.subr.mxu0 0.0
        %4256 = vmatpush1.msra.mxu0 0.0
        %4257 = vmatprep.subr.mxu0 0.0
        %4258 = vmatpush1.msra.mxu0 0.0
        %4259 = vmatprep.subr.mxu0 0.0
        %4260 = vmatpush1.msra.mxu0 0.0
        %4261 = vmatprep.subr.mxu0 0.0
        %4262 = vmatpush1.msra.mxu0 0.0
        %4263 = vmatprep.subr.mxu0 0.0
        %4264 = vmatpush1.msra.mxu0 0.0
        %4265 = vmatprep.subr.mxu0 0.0
        %4266 = vmatpush1.msra.mxu0 0.0
        %4267 = vmatprep.subr.mxu0 0.0
        %4268 = vmatpush1.msra.mxu0 0.0
        %4269 = vmatprep.subr.mxu0 0.0
        %4270 = vmatpush1.msra.mxu0 0.0
        %4271 = vmatprep.subr.mxu0 0.0
        %4272 = vmatpush1.msra.mxu0 0.0
        %4273 = vmatprep.subr.mxu0 0.0
        %4274 = vmatpush1.msra.mxu0 0.0
        %4275 = vmatprep.subr.mxu0 0.0
        %4276 = vmatpush1.msra.mxu0 0.0
        %4277 = vmatprep.subr.mxu0 0.0
        %4278 = vmatpush1.msra.mxu0 0.0
        %4279 = vmatprep.subr.mxu0 0.0
        %4280 = vmatpush1.msra.mxu0 0.0
        %4281 = vmatprep.subr.mxu0 0.0
        %4282 = vmatpush1.msra.mxu0 %v673
        %4283 = vmatprep.subr.mxu0 0.0
        %4284 = vmatpush2.msra.mxu0 0.0
        %4285 = vmatprep.subr.mxu0 0.0
        %4286 = vmatpush2.msra.mxu0 0.0
        %4287 = vmatprep.subr.mxu0 0.0
        %4288 = vmatpush2.msra.mxu0 0.0
        %4289 = vmatprep.subr.mxu0 0.0
        %4290 = vmatpush2.msra.mxu0 0.0
        %4291 = vmatprep.subr.mxu0 0.0
        %4292 = vmatpush2.msra.mxu0 0.0
        %4293 = vmatprep.subr.mxu0 0.0
        %4294 = vmatpush2.msra.mxu0 0.0
        %4295 = vmatprep.subr.mxu0 0.0
        %4296 = vmatpush2.msra.mxu0 0.0
        %4297 = vmatprep.subr.mxu0 0.0
        %4298 = vmatpush2.msra.mxu0 0.0
        %4299 = vmatprep.subr.mxu0 0.0
        %4300 = vmatpush2.msra.mxu0 0.0
        %4301 = vmatprep.subr.mxu0 0.0
        %4302 = vmatpush2.msra.mxu0 0.0
        %4303 = vmatprep.subr.mxu0 0.0
        %4304 = vmatpush2.msra.mxu0 0.0
        %4305 = vmatprep.subr.mxu0 0.0
        %4306 = vmatpush2.msra.mxu0 0.0
        %4307 = vmatprep.subr.mxu0 0.0
        %4308 = vmatpush2.msra.mxu0 0.0
        %4309 = vmatprep.subr.mxu0 0.0
        %4310 = vmatpush2.msra.mxu0 0.0
        %4311 = vmatprep.subr.mxu0 0.0
        %4312 = vmatpush2.msra.mxu0 0.0
        %4313 = vmatprep.subr.mxu0 0.0
        %4314 = vmatpush2.msra.mxu0 0.0
        %4315 = vmatprep.mubr.f32.mxu0 0.0
        %4316 = vmatmul.mubr.f32.gmra.mxu0 %v4216
        %v4317 = vpop.f32.mrf.mxu0
        %v4318 = vadd.f32 0.0, %v4317
        %v4319 = vpop.f32.mrf.mxu0
        %4320 = vmatprep.mubr.f32.mxu0 0.0
        %4321 = vmatmul.mubr.f32.gmra.mxu0 %v4219
        %v4322 = vpop.f32.mrf.mxu0
        %v4323 = vadd.f32 0.0, %v4322
        %v4324 = vpop.f32.mrf.mxu0
        %4325 = vmatprep.mubr.f32.mxu0 0.0
        %4326 = vmatmul.mubr.f32.gmra.mxu0 %v4222
        %v4327 = vpop.f32.mrf.mxu0
        %v4328 = vadd.f32 0.0, %v4327
        %v4329 = vpop.f32.mrf.mxu0
        %4330 = vmatprep.mubr.f32.mxu0 0.0
        %4331 = vmatmul.mubr.f32.gmra.mxu0 %v4225
        %v4332 = vpop.f32.mrf.mxu0
        %v4333 = vadd.f32 0.0, %v4332
        %v4334 = vpop.f32.mrf.mxu0
        %4335 = vmatprep.mubr.f32.mxu0 0.0
        %4336 = vmatmul.mubr.f32.gmra.mxu0 %v4228
        %v4337 = vpop.f32.mrf.mxu0
        %v4338 = vadd.f32 0.0, %v4337
        %v4339 = vpop.f32.mrf.mxu0
        %4340 = vmatprep.mubr.f32.mxu0 0.0
        %4341 = vmatmul.mubr.f32.gmra.mxu0 %v4231
        %v4342 = vpop.f32.mrf.mxu0
        %v4343 = vadd.f32 0.0, %v4342
        %v4344 = vpop.f32.mrf.mxu0
        %4345 = vmatprep.mubr.f32.mxu0 0.0
        %4346 = vmatmul.mubr.f32.gmra.mxu0 %v4234
        %v4347 = vpop.f32.mrf.mxu0
        %v4348 = vadd.f32 0.0, %v4347
        %v4349 = vpop.f32.mrf.mxu0
        %4350 = vmatprep.mubr.f32.mxu0 0.0
        %4351 = vmatmul.mubr.f32.gmra.mxu0 %v4237
        %v4352 = vpop.f32.mrf.mxu0
        %v4353 = vadd.f32 0.0, %v4352
        %v4354 = vpop.f32.mrf.mxu0
        %4355 = vmatprep.mubr.f32.mxu0 0.0
        %4356 = vmatmul.mubr.f32.gmra.mxu0 %v4240
        %v4357 = vpop.f32.mrf.mxu0
        %v4358 = vadd.f32 0.0, %v4357
        %v4359 = vpop.f32.mrf.mxu0
        %4360 = vmatprep.mubr.f32.mxu0 0.0
        %4361 = vmatmul.mubr.f32.gmra.mxu0 %v4243
        %v4362 = vpop.f32.mrf.mxu0
        %v4363 = vadd.f32 0.0, %v4362
        %v4364 = vpop.f32.mrf.mxu0
        %4365 = vmatprep.mubr.f32.mxu0 0.0
        %4366 = vmatmul.mubr.f32.gmra.mxu0 %v4246
        %v4367 = vpop.f32.mrf.mxu0
        %v4368 = vadd.f32 0.0, %v4367
        %v4369 = vpop.f32.mrf.mxu0
        %4370 = vmatprep.mubr.f32.mxu0 0.0
        %4371 = vmatmul.mubr.f32.gmra.mxu0 %v4249
        %v4372 = vpop.f32.mrf.mxu0
        %v4373 = vadd.f32 0.0, %v4372
        %v4374 = vpop.f32.mrf.mxu0
        %4375 = vdwg.mxu0
        %v4376 = vadd.f32 %v4191, %v4318
        %v4377 = vadd.f32 %v4192, %v4323
        %v4378 = vadd.f32 %v4193, %v4328
        %v4379 = vadd.f32 %v4194, %v4333
        %v4380 = vadd.f32 %v4195, %v4338
        %v4381 = vadd.f32 %v4196, %v4343
        %v4382 = vadd.f32 %v4197, %v4348
        %v4383 = vadd.f32 %v4198, %v4353
        %v4384 = vadd.f32 %v4199, %v4358
        %v4385 = vadd.f32 %v4200, %v4363
        %v4386 = vadd.f32 %v4201, %v4368
        %v4387 = vadd.f32 %v4202, %v4373
        %v4388 = vld [vmem:[%s221 + $0xd2] sm:$0xff]
        %v4389 = vld [vmem:[%s221 + $0xda] sm:$0xff]
        %v4390 = vld [vmem:[%s221 + $0xe2] sm:$0xff]
        %v4391 = vld [vmem:[%s221 + $0xea] sm:$0xff]
        %v4392 = vld [vmem:[%s221 + $0xf2] sm:$0xff]
        %v4393 = vld [vmem:[%s221 + $0xfa] sm:$0xff]
        %v4394 = vld [vmem:[%s221 + $0x102] sm:$0xff]
        %v4395 = vld [vmem:[%s221 + $0x10a] sm:$0xff]
        %v4396 = vld [vmem:[%s221 + $0x112] sm:$0xff]
        %v4397 = vld [vmem:[%s221 + $0x11a] sm:$0xff]
        %v4398 = vld [vmem:[%s221 + $0x122] sm:$0xff]
        %v4399 = vld [vmem:[%s221 + $0x12a] sm:$0xff]
        %v4401 = vsel %vm258, %v4388, 0
        %v4404 = vsel %vm258, %v4389, 0
        %v4407 = vsel %vm258, %v4390, 0
        %v4410 = vsel %vm258, %v4391, 0
        %v4413 = vsel %vm258, %v4392, 0
        %v4416 = vsel %vm258, %v4393, 0
        %v4419 = vsel %vm258, %v4394, 0
        %v4422 = vsel %vm258, %v4395, 0
        %v4425 = vsel %vm258, %v4396, 0
        %v4428 = vsel %vm258, %v4397, 0
        %v4431 = vsel %vm258, %v4398, 0
        %v4434 = vsel %vm258, %v4399, 0
        %4436 = vmatprep.subr.mxu0 0.0
        %4437 = vmatpush1.msra.mxu0 0.0
        %4438 = vmatprep.subr.mxu0 0.0
        %4439 = vmatpush1.msra.mxu0 0.0
        %4440 = vmatprep.subr.mxu0 0.0
        %4441 = vmatpush1.msra.mxu0 0.0
        %4442 = vmatprep.subr.mxu0 0.0
        %4443 = vmatpush1.msra.mxu0 0.0
        %4444 = vmatprep.subr.mxu0 0.0
        %4445 = vmatpush1.msra.mxu0 0.0
        %4446 = vmatprep.subr.mxu0 0.0
        %4447 = vmatpush1.msra.mxu0 0.0
        %4448 = vmatprep.subr.mxu0 0.0
        %4449 = vmatpush1.msra.mxu0 0.0
        %4450 = vmatprep.subr.mxu0 0.0
        %4451 = vmatpush1.msra.mxu0 0.0
        %4452 = vmatprep.subr.mxu0 0.0
        %4453 = vmatpush1.msra.mxu0 0.0
        %4454 = vmatprep.subr.mxu0 0.0
        %4455 = vmatpush1.msra.mxu0 0.0
        %4456 = vmatprep.subr.mxu0 0.0
        %4457 = vmatpush1.msra.mxu0 0.0
        %4458 = vmatprep.subr.mxu0 0.0
        %4459 = vmatpush1.msra.mxu0 0.0
        %4460 = vmatprep.subr.mxu0 0.0
        %4461 = vmatpush1.msra.mxu0 0.0
        %4462 = vmatprep.subr.mxu0 0.0
        %4463 = vmatpush1.msra.mxu0 0.0
        %4464 = vmatprep.subr.mxu0 0.0
        %4465 = vmatpush1.msra.mxu0 0.0
        %4466 = vmatprep.subr.mxu0 0.0
        %4467 = vmatpush1.msra.mxu0 %v861
        %4468 = vmatprep.subr.mxu0 0.0
        %4469 = vmatpush2.msra.mxu0 0.0
        %4470 = vmatprep.subr.mxu0 0.0
        %4471 = vmatpush2.msra.mxu0 0.0
        %4472 = vmatprep.subr.mxu0 0.0
        %4473 = vmatpush2.msra.mxu0 0.0
        %4474 = vmatprep.subr.mxu0 0.0
        %4475 = vmatpush2.msra.mxu0 0.0
        %4476 = vmatprep.subr.mxu0 0.0
        %4477 = vmatpush2.msra.mxu0 0.0
        %4478 = vmatprep.subr.mxu0 0.0
        %4479 = vmatpush2.msra.mxu0 0.0
        %4480 = vmatprep.subr.mxu0 0.0
        %4481 = vmatpush2.msra.mxu0 0.0
        %4482 = vmatprep.subr.mxu0 0.0
        %4483 = vmatpush2.msra.mxu0 0.0
        %4484 = vmatprep.subr.mxu0 0.0
        %4485 = vmatpush2.msra.mxu0 0.0
        %4486 = vmatprep.subr.mxu0 0.0
        %4487 = vmatpush2.msra.mxu0 0.0
        %4488 = vmatprep.subr.mxu0 0.0
        %4489 = vmatpush2.msra.mxu0 0.0
        %4490 = vmatprep.subr.mxu0 0.0
        %4491 = vmatpush2.msra.mxu0 0.0
        %4492 = vmatprep.subr.mxu0 0.0
        %4493 = vmatpush2.msra.mxu0 0.0
        %4494 = vmatprep.subr.mxu0 0.0
        %4495 = vmatpush2.msra.mxu0 0.0
        %4496 = vmatprep.subr.mxu0 0.0
        %4497 = vmatpush2.msra.mxu0 0.0
        %4498 = vmatprep.subr.mxu0 0.0
        %4499 = vmatpush2.msra.mxu0 0.0
        %4500 = vmatprep.mubr.f32.mxu0 0.0
        %4501 = vmatmul.mubr.f32.gmra.mxu0 %v4401
        %v4502 = vpop.f32.mrf.mxu0
        %v4503 = vadd.f32 0.0, %v4502
        %v4504 = vpop.f32.mrf.mxu0
        %4505 = vmatprep.mubr.f32.mxu0 0.0
        %4506 = vmatmul.mubr.f32.gmra.mxu0 %v4404
        %v4507 = vpop.f32.mrf.mxu0
        %v4508 = vadd.f32 0.0, %v4507
        %v4509 = vpop.f32.mrf.mxu0
        %4510 = vmatprep.mubr.f32.mxu0 0.0
        %4511 = vmatmul.mubr.f32.gmra.mxu0 %v4407
        %v4512 = vpop.f32.mrf.mxu0
        %v4513 = vadd.f32 0.0, %v4512
        %v4514 = vpop.f32.mrf.mxu0
        %4515 = vmatprep.mubr.f32.mxu0 0.0
        %4516 = vmatmul.mubr.f32.gmra.mxu0 %v4410
        %v4517 = vpop.f32.mrf.mxu0
        %v4518 = vadd.f32 0.0, %v4517
        %v4519 = vpop.f32.mrf.mxu0
        %4520 = vmatprep.mubr.f32.mxu0 0.0
        %4521 = vmatmul.mubr.f32.gmra.mxu0 %v4413
        %v4522 = vpop.f32.mrf.mxu0
        %v4523 = vadd.f32 0.0, %v4522
        %v4524 = vpop.f32.mrf.mxu0
        %4525 = vmatprep.mubr.f32.mxu0 0.0
        %4526 = vmatmul.mubr.f32.gmra.mxu0 %v4416
        %v4527 = vpop.f32.mrf.mxu0
        %v4528 = vadd.f32 0.0, %v4527
        %v4529 = vpop.f32.mrf.mxu0
        %4530 = vmatprep.mubr.f32.mxu0 0.0
        %4531 = vmatmul.mubr.f32.gmra.mxu0 %v4419
        %v4532 = vpop.f32.mrf.mxu0
        %v4533 = vadd.f32 0.0, %v4532
        %v4534 = vpop.f32.mrf.mxu0
        %4535 = vmatprep.mubr.f32.mxu0 0.0
        %4536 = vmatmul.mubr.f32.gmra.mxu0 %v4422
        %v4537 = vpop.f32.mrf.mxu0
        %v4538 = vadd.f32 0.0, %v4537
        %v4539 = vpop.f32.mrf.mxu0
        %4540 = vmatprep.mubr.f32.mxu0 0.0
        %4541 = vmatmul.mubr.f32.gmra.mxu0 %v4425
        %v4542 = vpop.f32.mrf.mxu0
        %v4543 = vadd.f32 0.0, %v4542
        %v4544 = vpop.f32.mrf.mxu0
        %4545 = vmatprep.mubr.f32.mxu0 0.0
        %4546 = vmatmul.mubr.f32.gmra.mxu0 %v4428
        %v4547 = vpop.f32.mrf.mxu0
        %v4548 = vadd.f32 0.0, %v4547
        %v4549 = vpop.f32.mrf.mxu0
        %4550 = vmatprep.mubr.f32.mxu0 0.0
        %4551 = vmatmul.mubr.f32.gmra.mxu0 %v4431
        %v4552 = vpop.f32.mrf.mxu0
        %v4553 = vadd.f32 0.0, %v4552
        %v4554 = vpop.f32.mrf.mxu0
        %4555 = vmatprep.mubr.f32.mxu0 0.0
        %4556 = vmatmul.mubr.f32.gmra.mxu0 %v4434
        %v4557 = vpop.f32.mrf.mxu0
        %v4558 = vadd.f32 0.0, %v4557
        %v4559 = vpop.f32.mrf.mxu0
        %4560 = vdwg.mxu0
        %v4561 = vadd.f32 %v4376, %v4503
        %v4562 = vadd.f32 %v4377, %v4508
        %v4563 = vadd.f32 %v4378, %v4513
        %v4564 = vadd.f32 %v4379, %v4518
        %v4565 = vadd.f32 %v4380, %v4523
        %v4566 = vadd.f32 %v4381, %v4528
        %v4567 = vadd.f32 %v4382, %v4533
        %v4568 = vadd.f32 %v4383, %v4538
        %v4569 = vadd.f32 %v4384, %v4543
        %v4570 = vadd.f32 %v4385, %v4548
        %v4571 = vadd.f32 %v4386, %v4553
        %v4572 = vadd.f32 %v4387, %v4558
        %v4573 = vld [vmem:[%s221 + $0xd3] sm:$0xff]
        %v4574 = vld [vmem:[%s221 + $0xdb] sm:$0xff]
        %v4575 = vld [vmem:[%s221 + $0xe3] sm:$0xff]
        %v4576 = vld [vmem:[%s221 + $0xeb] sm:$0xff]
        %v4577 = vld [vmem:[%s221 + $0xf3] sm:$0xff]
        %v4578 = vld [vmem:[%s221 + $0xfb] sm:$0xff]
        %v4579 = vld [vmem:[%s221 + $0x103] sm:$0xff]
        %v4580 = vld [vmem:[%s221 + $0x10b] sm:$0xff]
        %v4581 = vld [vmem:[%s221 + $0x113] sm:$0xff]
        %v4582 = vld [vmem:[%s221 + $0x11b] sm:$0xff]
        %v4583 = vld [vmem:[%s221 + $0x123] sm:$0xff]
        %v4584 = vld [vmem:[%s221 + $0x12b] sm:$0xff]
        %v4586 = vsel %vm258, %v4573, 0
        %v4589 = vsel %vm258, %v4574, 0
        %v4592 = vsel %vm258, %v4575, 0
        %v4595 = vsel %vm258, %v4576, 0
        %v4598 = vsel %vm258, %v4577, 0
        %v4601 = vsel %vm258, %v4578, 0
        %v4604 = vsel %vm258, %v4579, 0
        %v4607 = vsel %vm258, %v4580, 0
        %v4610 = vsel %vm258, %v4581, 0
        %v4613 = vsel %vm258, %v4582, 0
        %v4616 = vsel %vm258, %v4583, 0
        %v4619 = vsel %vm258, %v4584, 0
        %4621 = vmatprep.subr.mxu0 0.0
        %4622 = vmatpush1.msra.mxu0 0.0
        %4623 = vmatprep.subr.mxu0 0.0
        %4624 = vmatpush1.msra.mxu0 0.0
        %4625 = vmatprep.subr.mxu0 0.0
        %4626 = vmatpush1.msra.mxu0 0.0
        %4627 = vmatprep.subr.mxu0 0.0
        %4628 = vmatpush1.msra.mxu0 0.0
        %4629 = vmatprep.subr.mxu0 0.0
        %4630 = vmatpush1.msra.mxu0 0.0
        %4631 = vmatprep.subr.mxu0 0.0
        %4632 = vmatpush1.msra.mxu0 0.0
        %4633 = vmatprep.subr.mxu0 0.0
        %4634 = vmatpush1.msra.mxu0 0.0
        %4635 = vmatprep.subr.mxu0 0.0
        %4636 = vmatpush1.msra.mxu0 0.0
        %4637 = vmatprep.subr.mxu0 0.0
        %4638 = vmatpush1.msra.mxu0 0.0
        %4639 = vmatprep.subr.mxu0 0.0
        %4640 = vmatpush1.msra.mxu0 0.0
        %4641 = vmatprep.subr.mxu0 0.0
        %4642 = vmatpush1.msra.mxu0 0.0
        %4643 = vmatprep.subr.mxu0 0.0
        %4644 = vmatpush1.msra.mxu0 0.0
        %4645 = vmatprep.subr.mxu0 0.0
        %4646 = vmatpush1.msra.mxu0 0.0
        %4647 = vmatprep.subr.mxu0 0.0
        %4648 = vmatpush1.msra.mxu0 0.0
        %4649 = vmatprep.subr.mxu0 0.0
        %4650 = vmatpush1.msra.mxu0 0.0
        %4651 = vmatprep.subr.mxu0 0.0
        %4652 = vmatpush1.msra.mxu0 %v1049
        %4653 = vmatprep.subr.mxu0 0.0
        %4654 = vmatpush2.msra.mxu0 0.0
        %4655 = vmatprep.subr.mxu0 0.0
        %4656 = vmatpush2.msra.mxu0 0.0
        %4657 = vmatprep.subr.mxu0 0.0
        %4658 = vmatpush2.msra.mxu0 0.0
        %4659 = vmatprep.subr.mxu0 0.0
        %4660 = vmatpush2.msra.mxu0 0.0
        %4661 = vmatprep.subr.mxu0 0.0
        %4662 = vmatpush2.msra.mxu0 0.0
        %4663 = vmatprep.subr.mxu0 0.0
        %4664 = vmatpush2.msra.mxu0 0.0
        %4665 = vmatprep.subr.mxu0 0.0
        %4666 = vmatpush2.msra.mxu0 0.0
        %4667 = vmatprep.subr.mxu0 0.0
        %4668 = vmatpush2.msra.mxu0 0.0
        %4669 = vmatprep.subr.mxu0 0.0
        %4670 = vmatpush2.msra.mxu0 0.0
        %4671 = vmatprep.subr.mxu0 0.0
        %4672 = vmatpush2.msra.mxu0 0.0
        %4673 = vmatprep.subr.mxu0 0.0
        %4674 = vmatpush2.msra.mxu0 0.0
        %4675 = vmatprep.subr.mxu0 0.0
        %4676 = vmatpush2.msra.mxu0 0.0
        %4677 = vmatprep.subr.mxu0 0.0
        %4678 = vmatpush2.msra.mxu0 0.0
        %4679 = vmatprep.subr.mxu0 0.0
        %4680 = vmatpush2.msra.mxu0 0.0
        %4681 = vmatprep.subr.mxu0 0.0
        %4682 = vmatpush2.msra.mxu0 0.0
        %4683 = vmatprep.subr.mxu0 0.0
        %4684 = vmatpush2.msra.mxu0 0.0
        %4685 = vmatprep.mubr.f32.mxu0 0.0
        %4686 = vmatmul.mubr.f32.gmra.mxu0 %v4586
        %v4687 = vpop.f32.mrf.mxu0
        %v4688 = vadd.f32 0.0, %v4687
        %v4689 = vpop.f32.mrf.mxu0
        %4690 = vmatprep.mubr.f32.mxu0 0.0
        %4691 = vmatmul.mubr.f32.gmra.mxu0 %v4589
        %v4692 = vpop.f32.mrf.mxu0
        %v4693 = vadd.f32 0.0, %v4692
        %v4694 = vpop.f32.mrf.mxu0
        %4695 = vmatprep.mubr.f32.mxu0 0.0
        %4696 = vmatmul.mubr.f32.gmra.mxu0 %v4592
        %v4697 = vpop.f32.mrf.mxu0
        %v4698 = vadd.f32 0.0, %v4697
        %v4699 = vpop.f32.mrf.mxu0
        %4700 = vmatprep.mubr.f32.mxu0 0.0
        %4701 = vmatmul.mubr.f32.gmra.mxu0 %v4595
        %v4702 = vpop.f32.mrf.mxu0
        %v4703 = vadd.f32 0.0, %v4702
        %v4704 = vpop.f32.mrf.mxu0
        %4705 = vmatprep.mubr.f32.mxu0 0.0
        %4706 = vmatmul.mubr.f32.gmra.mxu0 %v4598
        %v4707 = vpop.f32.mrf.mxu0
        %v4708 = vadd.f32 0.0, %v4707
        %v4709 = vpop.f32.mrf.mxu0
        %4710 = vmatprep.mubr.f32.mxu0 0.0
        %4711 = vmatmul.mubr.f32.gmra.mxu0 %v4601
        %v4712 = vpop.f32.mrf.mxu0
        %v4713 = vadd.f32 0.0, %v4712
        %v4714 = vpop.f32.mrf.mxu0
        %4715 = vmatprep.mubr.f32.mxu0 0.0
        %4716 = vmatmul.mubr.f32.gmra.mxu0 %v4604
        %v4717 = vpop.f32.mrf.mxu0
        %v4718 = vadd.f32 0.0, %v4717
        %v4719 = vpop.f32.mrf.mxu0
        %4720 = vmatprep.mubr.f32.mxu0 0.0
        %4721 = vmatmul.mubr.f32.gmra.mxu0 %v4607
        %v4722 = vpop.f32.mrf.mxu0
        %v4723 = vadd.f32 0.0, %v4722
        %v4724 = vpop.f32.mrf.mxu0
        %4725 = vmatprep.mubr.f32.mxu0 0.0
        %4726 = vmatmul.mubr.f32.gmra.mxu0 %v4610
        %v4727 = vpop.f32.mrf.mxu0
        %v4728 = vadd.f32 0.0, %v4727
        %v4729 = vpop.f32.mrf.mxu0
        %4730 = vmatprep.mubr.f32.mxu0 0.0
        %4731 = vmatmul.mubr.f32.gmra.mxu0 %v4613
        %v4732 = vpop.f32.mrf.mxu0
        %v4733 = vadd.f32 0.0, %v4732
        %v4734 = vpop.f32.mrf.mxu0
        %4735 = vmatprep.mubr.f32.mxu0 0.0
        %4736 = vmatmul.mubr.f32.gmra.mxu0 %v4616
        %v4737 = vpop.f32.mrf.mxu0
        %v4738 = vadd.f32 0.0, %v4737
        %v4739 = vpop.f32.mrf.mxu0
        %4740 = vmatprep.mubr.f32.mxu0 0.0
        %4741 = vmatmul.mubr.f32.gmra.mxu0 %v4619
        %v4742 = vpop.f32.mrf.mxu0
        %v4743 = vadd.f32 0.0, %v4742
        %v4744 = vpop.f32.mrf.mxu0
        %4745 = vdwg.mxu0
        %v4746 = vadd.f32 %v4561, %v4688
        %v4747 = vadd.f32 %v4562, %v4693
        %v4748 = vadd.f32 %v4563, %v4698
        %v4749 = vadd.f32 %v4564, %v4703
        %v4750 = vadd.f32 %v4565, %v4708
        %v4751 = vadd.f32 %v4566, %v4713
        %v4752 = vadd.f32 %v4567, %v4718
        %v4753 = vadd.f32 %v4568, %v4723
        %v4754 = vadd.f32 %v4569, %v4728
        %v4755 = vadd.f32 %v4570, %v4733
        %v4756 = vadd.f32 %v4571, %v4738
        %v4757 = vadd.f32 %v4572, %v4743
        %v4758 = vld [vmem:[%s221 + $0xd4] sm:$0xff]
        %v4759 = vld [vmem:[%s221 + $0xdc] sm:$0xff]
        %v4760 = vld [vmem:[%s221 + $0xe4] sm:$0xff]
        %v4761 = vld [vmem:[%s221 + $0xec] sm:$0xff]
        %v4762 = vld [vmem:[%s221 + $0xf4] sm:$0xff]
        %v4763 = vld [vmem:[%s221 + $0xfc] sm:$0xff]
        %v4764 = vld [vmem:[%s221 + $0x104] sm:$0xff]
        %v4765 = vld [vmem:[%s221 + $0x10c] sm:$0xff]
        %v4766 = vld [vmem:[%s221 + $0x114] sm:$0xff]
        %v4767 = vld [vmem:[%s221 + $0x11c] sm:$0xff]
        %v4768 = vld [vmem:[%s221 + $0x124] sm:$0xff]
        %v4769 = vld [vmem:[%s221 + $0x12c] sm:$0xff]
        %v4771 = vsel %vm258, %v4758, 0
        %v4774 = vsel %vm258, %v4759, 0
        %v4777 = vsel %vm258, %v4760, 0
        %v4780 = vsel %vm258, %v4761, 0
        %v4783 = vsel %vm258, %v4762, 0
        %v4786 = vsel %vm258, %v4763, 0
        %v4789 = vsel %vm258, %v4764, 0
        %v4792 = vsel %vm258, %v4765, 0
        %v4795 = vsel %vm258, %v4766, 0
        %v4798 = vsel %vm258, %v4767, 0
        %v4801 = vsel %vm258, %v4768, 0
        %v4804 = vsel %vm258, %v4769, 0
        %4806 = vmatprep.subr.mxu0 0.0
        %4807 = vmatpush1.msra.mxu0 0.0
        %4808 = vmatprep.subr.mxu0 0.0
        %4809 = vmatpush1.msra.mxu0 0.0
        %4810 = vmatprep.subr.mxu0 0.0
        %4811 = vmatpush1.msra.mxu0 0.0
        %4812 = vmatprep.subr.mxu0 0.0
        %4813 = vmatpush1.msra.mxu0 0.0
        %4814 = vmatprep.subr.mxu0 0.0
        %4815 = vmatpush1.msra.mxu0 0.0
        %4816 = vmatprep.subr.mxu0 0.0
        %4817 = vmatpush1.msra.mxu0 0.0
        %4818 = vmatprep.subr.mxu0 0.0
        %4819 = vmatpush1.msra.mxu0 0.0
        %4820 = vmatprep.subr.mxu0 0.0
        %4821 = vmatpush1.msra.mxu0 0.0
        %4822 = vmatprep.subr.mxu0 0.0
        %4823 = vmatpush1.msra.mxu0 0.0
        %4824 = vmatprep.subr.mxu0 0.0
        %4825 = vmatpush1.msra.mxu0 0.0
        %4826 = vmatprep.subr.mxu0 0.0
        %4827 = vmatpush1.msra.mxu0 0.0
        %4828 = vmatprep.subr.mxu0 0.0
        %4829 = vmatpush1.msra.mxu0 0.0
        %4830 = vmatprep.subr.mxu0 0.0
        %4831 = vmatpush1.msra.mxu0 0.0
        %4832 = vmatprep.subr.mxu0 0.0
        %4833 = vmatpush1.msra.mxu0 0.0
        %4834 = vmatprep.subr.mxu0 0.0
        %4835 = vmatpush1.msra.mxu0 0.0
        %4836 = vmatprep.subr.mxu0 0.0
        %4837 = vmatpush1.msra.mxu0 %v1237
        %4838 = vmatprep.subr.mxu0 0.0
        %4839 = vmatpush2.msra.mxu0 0.0
        %4840 = vmatprep.subr.mxu0 0.0
        %4841 = vmatpush2.msra.mxu0 0.0
        %4842 = vmatprep.subr.mxu0 0.0
        %4843 = vmatpush2.msra.mxu0 0.0
        %4844 = vmatprep.subr.mxu0 0.0
        %4845 = vmatpush2.msra.mxu0 0.0
        %4846 = vmatprep.subr.mxu0 0.0
        %4847 = vmatpush2.msra.mxu0 0.0
        %4848 = vmatprep.subr.mxu0 0.0
        %4849 = vmatpush2.msra.mxu0 0.0
        %4850 = vmatprep.subr.mxu0 0.0
        %4851 = vmatpush2.msra.mxu0 0.0
        %4852 = vmatprep.subr.mxu0 0.0
        %4853 = vmatpush2.msra.mxu0 0.0
        %4854 = vmatprep.subr.mxu0 0.0
        %4855 = vmatpush2.msra.mxu0 0.0
        %4856 = vmatprep.subr.mxu0 0.0
        %4857 = vmatpush2.msra.mxu0 0.0
        %4858 = vmatprep.subr.mxu0 0.0
        %4859 = vmatpush2.msra.mxu0 0.0
        %4860 = vmatprep.subr.mxu0 0.0
        %4861 = vmatpush2.msra.mxu0 0.0
        %4862 = vmatprep.subr.mxu0 0.0
        %4863 = vmatpush2.msra.mxu0 0.0
        %4864 = vmatprep.subr.mxu0 0.0
        %4865 = vmatpush2.msra.mxu0 0.0
        %4866 = vmatprep.subr.mxu0 0.0
        %4867 = vmatpush2.msra.mxu0 0.0
        %4868 = vmatprep.subr.mxu0 0.0
        %4869 = vmatpush2.msra.mxu0 0.0
        %4870 = vmatprep.mubr.f32.mxu0 0.0
        %4871 = vmatmul.mubr.f32.gmra.mxu0 %v4771
        %v4872 = vpop.f32.mrf.mxu0
        %v4873 = vadd.f32 0.0, %v4872
        %v4874 = vpop.f32.mrf.mxu0
        %4875 = vmatprep.mubr.f32.mxu0 0.0
        %4876 = vmatmul.mubr.f32.gmra.mxu0 %v4774
        %v4877 = vpop.f32.mrf.mxu0
        %v4878 = vadd.f32 0.0, %v4877
        %v4879 = vpop.f32.mrf.mxu0
        %4880 = vmatprep.mubr.f32.mxu0 0.0
        %4881 = vmatmul.mubr.f32.gmra.mxu0 %v4777
        %v4882 = vpop.f32.mrf.mxu0
        %v4883 = vadd.f32 0.0, %v4882
        %v4884 = vpop.f32.mrf.mxu0
        %4885 = vmatprep.mubr.f32.mxu0 0.0
        %4886 = vmatmul.mubr.f32.gmra.mxu0 %v4780
        %v4887 = vpop.f32.mrf.mxu0
        %v4888 = vadd.f32 0.0, %v4887
        %v4889 = vpop.f32.mrf.mxu0
        %4890 = vmatprep.mubr.f32.mxu0 0.0
        %4891 = vmatmul.mubr.f32.gmra.mxu0 %v4783
        %v4892 = vpop.f32.mrf.mxu0
        %v4893 = vadd.f32 0.0, %v4892
        %v4894 = vpop.f32.mrf.mxu0
        %4895 = vmatprep.mubr.f32.mxu0 0.0
        %4896 = vmatmul.mubr.f32.gmra.mxu0 %v4786
        %v4897 = vpop.f32.mrf.mxu0
        %v4898 = vadd.f32 0.0, %v4897
        %v4899 = vpop.f32.mrf.mxu0
        %4900 = vmatprep.mubr.f32.mxu0 0.0
        %4901 = vmatmul.mubr.f32.gmra.mxu0 %v4789
        %v4902 = vpop.f32.mrf.mxu0
        %v4903 = vadd.f32 0.0, %v4902
        %v4904 = vpop.f32.mrf.mxu0
        %4905 = vmatprep.mubr.f32.mxu0 0.0
        %4906 = vmatmul.mubr.f32.gmra.mxu0 %v4792
        %v4907 = vpop.f32.mrf.mxu0
        %v4908 = vadd.f32 0.0, %v4907
        %v4909 = vpop.f32.mrf.mxu0
        %4910 = vmatprep.mubr.f32.mxu0 0.0
        %4911 = vmatmul.mubr.f32.gmra.mxu0 %v4795
        %v4912 = vpop.f32.mrf.mxu0
        %v4913 = vadd.f32 0.0, %v4912
        %v4914 = vpop.f32.mrf.mxu0
        %4915 = vmatprep.mubr.f32.mxu0 0.0
        %4916 = vmatmul.mubr.f32.gmra.mxu0 %v4798
        %v4917 = vpop.f32.mrf.mxu0
        %v4918 = vadd.f32 0.0, %v4917
        %v4919 = vpop.f32.mrf.mxu0
        %4920 = vmatprep.mubr.f32.mxu0 0.0
        %4921 = vmatmul.mubr.f32.gmra.mxu0 %v4801
        %v4922 = vpop.f32.mrf.mxu0
        %v4923 = vadd.f32 0.0, %v4922
        %v4924 = vpop.f32.mrf.mxu0
        %4925 = vmatprep.mubr.f32.mxu0 0.0
        %4926 = vmatmul.mubr.f32.gmra.mxu0 %v4804
        %v4927 = vpop.f32.mrf.mxu0
        %v4928 = vadd.f32 0.0, %v4927
        %v4929 = vpop.f32.mrf.mxu0
        %4930 = vdwg.mxu0
        %v4931 = vadd.f32 %v4746, %v4873
        %v4932 = vadd.f32 %v4747, %v4878
        %v4933 = vadd.f32 %v4748, %v4883
        %v4934 = vadd.f32 %v4749, %v4888
        %v4935 = vadd.f32 %v4750, %v4893
        %v4936 = vadd.f32 %v4751, %v4898
        %v4937 = vadd.f32 %v4752, %v4903
        %v4938 = vadd.f32 %v4753, %v4908
        %v4939 = vadd.f32 %v4754, %v4913
        %v4940 = vadd.f32 %v4755, %v4918
        %v4941 = vadd.f32 %v4756, %v4923
        %v4942 = vadd.f32 %v4757, %v4928
        %v4943 = vld [vmem:[%s221 + $0xe4] sm:$0xff]
        %v4944 = vld [vmem:[%s221 + $0xec] sm:$0xff]
        %v4945 = vld [vmem:[%s221 + $0xf4] sm:$0xff]
        %v4946 = vld [vmem:[%s221 + $0xfc] sm:$0xff]
        %v4947 = vld [vmem:[%s221 + $0x104] sm:$0xff]
        %v4948 = vld [vmem:[%s221 + $0x10c] sm:$0xff]
        %v4949 = vld [vmem:[%s221 + $0x114] sm:$0xff]
        %v4950 = vld [vmem:[%s221 + $0x11c] sm:$0xff]
        %v4951 = vld [vmem:[%s221 + $0x124] sm:$0xff]
        %v4952 = vld [vmem:[%s221 + $0x12c] sm:$0xff]
        %v4953 = vld [vmem:[%s221 + $0x134] sm:$0xff]
        %v4954 = vld [vmem:[%s221 + $0x13c] sm:$0xff]
        %v4956 = vsel %vm258, %v4943, 0
        %v4959 = vsel %vm258, %v4944, 0
        %v4962 = vsel %vm258, %v4945, 0
        %v4965 = vsel %vm258, %v4946, 0
        %v4968 = vsel %vm258, %v4947, 0
        %v4971 = vsel %vm258, %v4948, 0
        %v4974 = vsel %vm258, %v4949, 0
        %v4977 = vsel %vm258, %v4950, 0
        %v4980 = vsel %vm258, %v4951, 0
        %v4983 = vsel %vm258, %v4952, 0
        %v4986 = vsel %vm258, %v4953, 0
        %v4989 = vsel %vm258, %v4954, 0
        %4991 = vmatprep.subr.mxu0 0.0
        %4992 = vmatpush1.msra.mxu0 0.0
        %4993 = vmatprep.subr.mxu0 0.0
        %4994 = vmatpush1.msra.mxu0 0.0
        %4995 = vmatprep.subr.mxu0 0.0
        %4996 = vmatpush1.msra.mxu0 0.0
        %4997 = vmatprep.subr.mxu0 0.0
        %4998 = vmatpush1.msra.mxu0 0.0
        %4999 = vmatprep.subr.mxu0 0.0
        %5000 = vmatpush1.msra.mxu0 0.0
        %5001 = vmatprep.subr.mxu0 0.0
        %5002 = vmatpush1.msra.mxu0 0.0
        %5003 = vmatprep.subr.mxu0 0.0
        %5004 = vmatpush1.msra.mxu0 0.0
        %5005 = vmatprep.subr.mxu0 0.0
        %5006 = vmatpush1.msra.mxu0 0.0
        %5007 = vmatprep.subr.mxu0 0.0
        %5008 = vmatpush1.msra.mxu0 0.0
        %5009 = vmatprep.subr.mxu0 0.0
        %5010 = vmatpush1.msra.mxu0 0.0
        %5011 = vmatprep.subr.mxu0 0.0
        %5012 = vmatpush1.msra.mxu0 0.0
        %5013 = vmatprep.subr.mxu0 0.0
        %5014 = vmatpush1.msra.mxu0 0.0
        %5015 = vmatprep.subr.mxu0 0.0
        %5016 = vmatpush1.msra.mxu0 0.0
        %5017 = vmatprep.subr.mxu0 0.0
        %5018 = vmatpush1.msra.mxu0 0.0
        %5019 = vmatprep.subr.mxu0 0.0
        %5020 = vmatpush1.msra.mxu0 0.0
        %5021 = vmatprep.subr.mxu0 0.0
        %5022 = vmatpush1.msra.mxu0 %v1425
        %5023 = vmatprep.subr.mxu0 0.0
        %5024 = vmatpush2.msra.mxu0 0.0
        %5025 = vmatprep.subr.mxu0 0.0
        %5026 = vmatpush2.msra.mxu0 0.0
        %5027 = vmatprep.subr.mxu0 0.0
        %5028 = vmatpush2.msra.mxu0 0.0
        %5029 = vmatprep.subr.mxu0 0.0
        %5030 = vmatpush2.msra.mxu0 0.0
        %5031 = vmatprep.subr.mxu0 0.0
        %5032 = vmatpush2.msra.mxu0 0.0
        %5033 = vmatprep.subr.mxu0 0.0
        %5034 = vmatpush2.msra.mxu0 0.0
        %5035 = vmatprep.subr.mxu0 0.0
        %5036 = vmatpush2.msra.mxu0 0.0
        %5037 = vmatprep.subr.mxu0 0.0
        %5038 = vmatpush2.msra.mxu0 0.0
        %5039 = vmatprep.subr.mxu0 0.0
        %5040 = vmatpush2.msra.mxu0 0.0
        %5041 = vmatprep.subr.mxu0 0.0
        %5042 = vmatpush2.msra.mxu0 0.0
        %5043 = vmatprep.subr.mxu0 0.0
        %5044 = vmatpush2.msra.mxu0 0.0
        %5045 = vmatprep.subr.mxu0 0.0
        %5046 = vmatpush2.msra.mxu0 0.0
        %5047 = vmatprep.subr.mxu0 0.0
        %5048 = vmatpush2.msra.mxu0 0.0
        %5049 = vmatprep.subr.mxu0 0.0
        %5050 = vmatpush2.msra.mxu0 0.0
        %5051 = vmatprep.subr.mxu0 0.0
        %5052 = vmatpush2.msra.mxu0 0.0
        %5053 = vmatprep.subr.mxu0 0.0
        %5054 = vmatpush2.msra.mxu0 0.0
        %5055 = vmatprep.mubr.f32.mxu0 0.0
        %5056 = vmatmul.mubr.f32.gmra.mxu0 %v4956
        %v5057 = vpop.f32.mrf.mxu0
        %v5058 = vadd.f32 0.0, %v5057
        %v5059 = vpop.f32.mrf.mxu0
        %5060 = vmatprep.mubr.f32.mxu0 0.0
        %5061 = vmatmul.mubr.f32.gmra.mxu0 %v4959
        %v5062 = vpop.f32.mrf.mxu0
        %v5063 = vadd.f32 0.0, %v5062
        %v5064 = vpop.f32.mrf.mxu0
        %5065 = vmatprep.mubr.f32.mxu0 0.0
        %5066 = vmatmul.mubr.f32.gmra.mxu0 %v4962
        %v5067 = vpop.f32.mrf.mxu0
        %v5068 = vadd.f32 0.0, %v5067
        %v5069 = vpop.f32.mrf.mxu0
        %5070 = vmatprep.mubr.f32.mxu0 0.0
        %5071 = vmatmul.mubr.f32.gmra.mxu0 %v4965
        %v5072 = vpop.f32.mrf.mxu0
        %v5073 = vadd.f32 0.0, %v5072
        %v5074 = vpop.f32.mrf.mxu0
        %5075 = vmatprep.mubr.f32.mxu0 0.0
        %5076 = vmatmul.mubr.f32.gmra.mxu0 %v4968
        %v5077 = vpop.f32.mrf.mxu0
        %v5078 = vadd.f32 0.0, %v5077
        %v5079 = vpop.f32.mrf.mxu0
        %5080 = vmatprep.mubr.f32.mxu0 0.0
        %5081 = vmatmul.mubr.f32.gmra.mxu0 %v4971
        %v5082 = vpop.f32.mrf.mxu0
        %v5083 = vadd.f32 0.0, %v5082
        %v5084 = vpop.f32.mrf.mxu0
        %5085 = vmatprep.mubr.f32.mxu0 0.0
        %5086 = vmatmul.mubr.f32.gmra.mxu0 %v4974
        %v5087 = vpop.f32.mrf.mxu0
        %v5088 = vadd.f32 0.0, %v5087
        %v5089 = vpop.f32.mrf.mxu0
        %5090 = vmatprep.mubr.f32.mxu0 0.0
        %5091 = vmatmul.mubr.f32.gmra.mxu0 %v4977
        %v5092 = vpop.f32.mrf.mxu0
        %v5093 = vadd.f32 0.0, %v5092
        %v5094 = vpop.f32.mrf.mxu0
        %5095 = vmatprep.mubr.f32.mxu0 0.0
        %5096 = vmatmul.mubr.f32.gmra.mxu0 %v4980
        %v5097 = vpop.f32.mrf.mxu0
        %v5098 = vadd.f32 0.0, %v5097
        %v5099 = vpop.f32.mrf.mxu0
        %5100 = vmatprep.mubr.f32.mxu0 0.0
        %5101 = vmatmul.mubr.f32.gmra.mxu0 %v4983
        %v5102 = vpop.f32.mrf.mxu0
        %v5103 = vadd.f32 0.0, %v5102
        %v5104 = vpop.f32.mrf.mxu0
        %5105 = vmatprep.mubr.f32.mxu0 0.0
        %5106 = vmatmul.mubr.f32.gmra.mxu0 %v4986
        %v5107 = vpop.f32.mrf.mxu0
        %v5108 = vadd.f32 0.0, %v5107
        %v5109 = vpop.f32.mrf.mxu0
        %5110 = vmatprep.mubr.f32.mxu0 0.0
        %5111 = vmatmul.mubr.f32.gmra.mxu0 %v4989
        %v5112 = vpop.f32.mrf.mxu0
        %v5113 = vadd.f32 0.0, %v5112
        %v5114 = vpop.f32.mrf.mxu0
        %5115 = vdwg.mxu0
        %v5116 = vadd.f32 %v4931, %v5058
        %v5117 = vadd.f32 %v4932, %v5063
        %v5118 = vadd.f32 %v4933, %v5068
        %v5119 = vadd.f32 %v4934, %v5073
        %v5120 = vadd.f32 %v4935, %v5078
        %v5121 = vadd.f32 %v4936, %v5083
        %v5122 = vadd.f32 %v4937, %v5088
        %v5123 = vadd.f32 %v4938, %v5093
        %v5124 = vadd.f32 %v4939, %v5098
        %v5125 = vadd.f32 %v4940, %v5103
        %v5126 = vadd.f32 %v4941, %v5108
        %v5127 = vadd.f32 %v4942, %v5113
        %v5128 = vld [vmem:[%s221 + $0xe5] sm:$0xff]
        %v5129 = vld [vmem:[%s221 + $0xed] sm:$0xff]
        %v5130 = vld [vmem:[%s221 + $0xf5] sm:$0xff]
        %v5131 = vld [vmem:[%s221 + $0xfd] sm:$0xff]
        %v5132 = vld [vmem:[%s221 + $0x105] sm:$0xff]
        %v5133 = vld [vmem:[%s221 + $0x10d] sm:$0xff]
        %v5134 = vld [vmem:[%s221 + $0x115] sm:$0xff]
        %v5135 = vld [vmem:[%s221 + $0x11d] sm:$0xff]
        %v5136 = vld [vmem:[%s221 + $0x125] sm:$0xff]
        %v5137 = vld [vmem:[%s221 + $0x12d] sm:$0xff]
        %v5138 = vld [vmem:[%s221 + $0x135] sm:$0xff]
        %v5139 = vld [vmem:[%s221 + $0x13d] sm:$0xff]
        %v5141 = vsel %vm258, %v5128, 0
        %v5144 = vsel %vm258, %v5129, 0
        %v5147 = vsel %vm258, %v5130, 0
        %v5150 = vsel %vm258, %v5131, 0
        %v5153 = vsel %vm258, %v5132, 0
        %v5156 = vsel %vm258, %v5133, 0
        %v5159 = vsel %vm258, %v5134, 0
        %v5162 = vsel %vm258, %v5135, 0
        %v5165 = vsel %vm258, %v5136, 0
        %v5168 = vsel %vm258, %v5137, 0
        %v5171 = vsel %vm258, %v5138, 0
        %v5174 = vsel %vm258, %v5139, 0
        %5176 = vmatprep.subr.mxu0 0.0
        %5177 = vmatpush1.msra.mxu0 0.0
        %5178 = vmatprep.subr.mxu0 0.0
        %5179 = vmatpush1.msra.mxu0 0.0
        %5180 = vmatprep.subr.mxu0 0.0
        %5181 = vmatpush1.msra.mxu0 0.0
        %5182 = vmatprep.subr.mxu0 0.0
        %5183 = vmatpush1.msra.mxu0 0.0
        %5184 = vmatprep.subr.mxu0 0.0
        %5185 = vmatpush1.msra.mxu0 0.0
        %5186 = vmatprep.subr.mxu0 0.0
        %5187 = vmatpush1.msra.mxu0 0.0
        %5188 = vmatprep.subr.mxu0 0.0
        %5189 = vmatpush1.msra.mxu0 0.0
        %5190 = vmatprep.subr.mxu0 0.0
        %5191 = vmatpush1.msra.mxu0 0.0
        %5192 = vmatprep.subr.mxu0 0.0
        %5193 = vmatpush1.msra.mxu0 0.0
        %5194 = vmatprep.subr.mxu0 0.0
        %5195 = vmatpush1.msra.mxu0 0.0
        %5196 = vmatprep.subr.mxu0 0.0
        %5197 = vmatpush1.msra.mxu0 0.0
        %5198 = vmatprep.subr.mxu0 0.0
        %5199 = vmatpush1.msra.mxu0 0.0
        %5200 = vmatprep.subr.mxu0 0.0
        %5201 = vmatpush1.msra.mxu0 0.0
        %5202 = vmatprep.subr.mxu0 0.0
        %5203 = vmatpush1.msra.mxu0 0.0
        %5204 = vmatprep.subr.mxu0 0.0
        %5205 = vmatpush1.msra.mxu0 0.0
        %5206 = vmatprep.subr.mxu0 0.0
        %5207 = vmatpush1.msra.mxu0 %v1613
        %5208 = vmatprep.subr.mxu0 0.0
        %5209 = vmatpush2.msra.mxu0 0.0
        %5210 = vmatprep.subr.mxu0 0.0
        %5211 = vmatpush2.msra.mxu0 0.0
        %5212 = vmatprep.subr.mxu0 0.0
        %5213 = vmatpush2.msra.mxu0 0.0
        %5214 = vmatprep.subr.mxu0 0.0
        %5215 = vmatpush2.msra.mxu0 0.0
        %5216 = vmatprep.subr.mxu0 0.0
        %5217 = vmatpush2.msra.mxu0 0.0
        %5218 = vmatprep.subr.mxu0 0.0
        %5219 = vmatpush2.msra.mxu0 0.0
        %5220 = vmatprep.subr.mxu0 0.0
        %5221 = vmatpush2.msra.mxu0 0.0
        %5222 = vmatprep.subr.mxu0 0.0
        %5223 = vmatpush2.msra.mxu0 0.0
        %5224 = vmatprep.subr.mxu0 0.0
        %5225 = vmatpush2.msra.mxu0 0.0
        %5226 = vmatprep.subr.mxu0 0.0
        %5227 = vmatpush2.msra.mxu0 0.0
        %5228 = vmatprep.subr.mxu0 0.0
        %5229 = vmatpush2.msra.mxu0 0.0
        %5230 = vmatprep.subr.mxu0 0.0
        %5231 = vmatpush2.msra.mxu0 0.0
        %5232 = vmatprep.subr.mxu0 0.0
        %5233 = vmatpush2.msra.mxu0 0.0
        %5234 = vmatprep.subr.mxu0 0.0
        %5235 = vmatpush2.msra.mxu0 0.0
        %5236 = vmatprep.subr.mxu0 0.0
        %5237 = vmatpush2.msra.mxu0 0.0
        %5238 = vmatprep.subr.mxu0 0.0
        %5239 = vmatpush2.msra.mxu0 0.0
        %5240 = vmatprep.mubr.f32.mxu0 0.0
        %5241 = vmatmul.mubr.f32.gmra.mxu0 %v5141
        %v5242 = vpop.f32.mrf.mxu0
        %v5243 = vadd.f32 0.0, %v5242
        %v5244 = vpop.f32.mrf.mxu0
        %5245 = vmatprep.mubr.f32.mxu0 0.0
        %5246 = vmatmul.mubr.f32.gmra.mxu0 %v5144
        %v5247 = vpop.f32.mrf.mxu0
        %v5248 = vadd.f32 0.0, %v5247
        %v5249 = vpop.f32.mrf.mxu0
        %5250 = vmatprep.mubr.f32.mxu0 0.0
        %5251 = vmatmul.mubr.f32.gmra.mxu0 %v5147
        %v5252 = vpop.f32.mrf.mxu0
        %v5253 = vadd.f32 0.0, %v5252
        %v5254 = vpop.f32.mrf.mxu0
        %5255 = vmatprep.mubr.f32.mxu0 0.0
        %5256 = vmatmul.mubr.f32.gmra.mxu0 %v5150
        %v5257 = vpop.f32.mrf.mxu0
        %v5258 = vadd.f32 0.0, %v5257
        %v5259 = vpop.f32.mrf.mxu0
        %5260 = vmatprep.mubr.f32.mxu0 0.0
        %5261 = vmatmul.mubr.f32.gmra.mxu0 %v5153
        %v5262 = vpop.f32.mrf.mxu0
        %v5263 = vadd.f32 0.0, %v5262
        %v5264 = vpop.f32.mrf.mxu0
        %5265 = vmatprep.mubr.f32.mxu0 0.0
        %5266 = vmatmul.mubr.f32.gmra.mxu0 %v5156
        %v5267 = vpop.f32.mrf.mxu0
        %v5268 = vadd.f32 0.0, %v5267
        %v5269 = vpop.f32.mrf.mxu0
        %5270 = vmatprep.mubr.f32.mxu0 0.0
        %5271 = vmatmul.mubr.f32.gmra.mxu0 %v5159
        %v5272 = vpop.f32.mrf.mxu0
        %v5273 = vadd.f32 0.0, %v5272
        %v5274 = vpop.f32.mrf.mxu0
        %5275 = vmatprep.mubr.f32.mxu0 0.0
        %5276 = vmatmul.mubr.f32.gmra.mxu0 %v5162
        %v5277 = vpop.f32.mrf.mxu0
        %v5278 = vadd.f32 0.0, %v5277
        %v5279 = vpop.f32.mrf.mxu0
        %5280 = vmatprep.mubr.f32.mxu0 0.0
        %5281 = vmatmul.mubr.f32.gmra.mxu0 %v5165
        %v5282 = vpop.f32.mrf.mxu0
        %v5283 = vadd.f32 0.0, %v5282
        %v5284 = vpop.f32.mrf.mxu0
        %5285 = vmatprep.mubr.f32.mxu0 0.0
        %5286 = vmatmul.mubr.f32.gmra.mxu0 %v5168
        %v5287 = vpop.f32.mrf.mxu0
        %v5288 = vadd.f32 0.0, %v5287
        %v5289 = vpop.f32.mrf.mxu0
        %5290 = vmatprep.mubr.f32.mxu0 0.0
        %5291 = vmatmul.mubr.f32.gmra.mxu0 %v5171
        %v5292 = vpop.f32.mrf.mxu0
        %v5293 = vadd.f32 0.0, %v5292
        %v5294 = vpop.f32.mrf.mxu0
        %5295 = vmatprep.mubr.f32.mxu0 0.0
        %5296 = vmatmul.mubr.f32.gmra.mxu0 %v5174
        %v5297 = vpop.f32.mrf.mxu0
        %v5298 = vadd.f32 0.0, %v5297
        %v5299 = vpop.f32.mrf.mxu0
        %5300 = vdwg.mxu0
        %v5301 = vadd.f32 %v5116, %v5243
        %v5302 = vadd.f32 %v5117, %v5248
        %v5303 = vadd.f32 %v5118, %v5253
        %v5304 = vadd.f32 %v5119, %v5258
        %v5305 = vadd.f32 %v5120, %v5263
        %v5306 = vadd.f32 %v5121, %v5268
        %v5307 = vadd.f32 %v5122, %v5273
        %v5308 = vadd.f32 %v5123, %v5278
        %v5309 = vadd.f32 %v5124, %v5283
        %v5310 = vadd.f32 %v5125, %v5288
        %v5311 = vadd.f32 %v5126, %v5293
        %v5312 = vadd.f32 %v5127, %v5298
        %v5313 = vld [vmem:[%s221 + $0xe6] sm:$0xff]
        %v5314 = vld [vmem:[%s221 + $0xee] sm:$0xff]
        %v5315 = vld [vmem:[%s221 + $0xf6] sm:$0xff]
        %v5316 = vld [vmem:[%s221 + $0xfe] sm:$0xff]
        %v5317 = vld [vmem:[%s221 + $0x106] sm:$0xff]
        %v5318 = vld [vmem:[%s221 + $0x10e] sm:$0xff]
        %v5319 = vld [vmem:[%s221 + $0x116] sm:$0xff]
        %v5320 = vld [vmem:[%s221 + $0x11e] sm:$0xff]
        %v5321 = vld [vmem:[%s221 + $0x126] sm:$0xff]
        %v5322 = vld [vmem:[%s221 + $0x12e] sm:$0xff]
        %v5323 = vld [vmem:[%s221 + $0x136] sm:$0xff]
        %v5324 = vld [vmem:[%s221 + $0x13e] sm:$0xff]
        %v5326 = vsel %vm258, %v5313, 0
        %v5329 = vsel %vm258, %v5314, 0
        %v5332 = vsel %vm258, %v5315, 0
        %v5335 = vsel %vm258, %v5316, 0
        %v5338 = vsel %vm258, %v5317, 0
        %v5341 = vsel %vm258, %v5318, 0
        %v5344 = vsel %vm258, %v5319, 0
        %v5347 = vsel %vm258, %v5320, 0
        %v5350 = vsel %vm258, %v5321, 0
        %v5353 = vsel %vm258, %v5322, 0
        %v5356 = vsel %vm258, %v5323, 0
        %v5359 = vsel %vm258, %v5324, 0
        %5361 = vmatprep.subr.mxu0 0.0
        %5362 = vmatpush1.msra.mxu0 0.0
        %5363 = vmatprep.subr.mxu0 0.0
        %5364 = vmatpush1.msra.mxu0 0.0
        %5365 = vmatprep.subr.mxu0 0.0
        %5366 = vmatpush1.msra.mxu0 0.0
        %5367 = vmatprep.subr.mxu0 0.0
        %5368 = vmatpush1.msra.mxu0 0.0
        %5369 = vmatprep.subr.mxu0 0.0
        %5370 = vmatpush1.msra.mxu0 0.0
        %5371 = vmatprep.subr.mxu0 0.0
        %5372 = vmatpush1.msra.mxu0 0.0
        %5373 = vmatprep.subr.mxu0 0.0
        %5374 = vmatpush1.msra.mxu0 0.0
        %5375 = vmatprep.subr.mxu0 0.0
        %5376 = vmatpush1.msra.mxu0 0.0
        %5377 = vmatprep.subr.mxu0 0.0
        %5378 = vmatpush1.msra.mxu0 0.0
        %5379 = vmatprep.subr.mxu0 0.0
        %5380 = vmatpush1.msra.mxu0 0.0
        %5381 = vmatprep.subr.mxu0 0.0
        %5382 = vmatpush1.msra.mxu0 0.0
        %5383 = vmatprep.subr.mxu0 0.0
        %5384 = vmatpush1.msra.mxu0 0.0
        %5385 = vmatprep.subr.mxu0 0.0
        %5386 = vmatpush1.msra.mxu0 0.0
        %5387 = vmatprep.subr.mxu0 0.0
        %5388 = vmatpush1.msra.mxu0 0.0
        %5389 = vmatprep.subr.mxu0 0.0
        %5390 = vmatpush1.msra.mxu0 0.0
        %5391 = vmatprep.subr.mxu0 0.0
        %5392 = vmatpush1.msra.mxu0 %v1801
        %5393 = vmatprep.subr.mxu0 0.0
        %5394 = vmatpush2.msra.mxu0 0.0
        %5395 = vmatprep.subr.mxu0 0.0
        %5396 = vmatpush2.msra.mxu0 0.0
        %5397 = vmatprep.subr.mxu0 0.0
        %5398 = vmatpush2.msra.mxu0 0.0
        %5399 = vmatprep.subr.mxu0 0.0
        %5400 = vmatpush2.msra.mxu0 0.0
        %5401 = vmatprep.subr.mxu0 0.0
        %5402 = vmatpush2.msra.mxu0 0.0
        %5403 = vmatprep.subr.mxu0 0.0
        %5404 = vmatpush2.msra.mxu0 0.0
        %5405 = vmatprep.subr.mxu0 0.0
        %5406 = vmatpush2.msra.mxu0 0.0
        %5407 = vmatprep.subr.mxu0 0.0
        %5408 = vmatpush2.msra.mxu0 0.0
        %5409 = vmatprep.subr.mxu0 0.0
        %5410 = vmatpush2.msra.mxu0 0.0
        %5411 = vmatprep.subr.mxu0 0.0
        %5412 = vmatpush2.msra.mxu0 0.0
        %5413 = vmatprep.subr.mxu0 0.0
        %5414 = vmatpush2.msra.mxu0 0.0
        %5415 = vmatprep.subr.mxu0 0.0
        %5416 = vmatpush2.msra.mxu0 0.0
        %5417 = vmatprep.subr.mxu0 0.0
        %5418 = vmatpush2.msra.mxu0 0.0
        %5419 = vmatprep.subr.mxu0 0.0
        %5420 = vmatpush2.msra.mxu0 0.0
        %5421 = vmatprep.subr.mxu0 0.0
        %5422 = vmatpush2.msra.mxu0 0.0
        %5423 = vmatprep.subr.mxu0 0.0
        %5424 = vmatpush2.msra.mxu0 0.0
        %5425 = vmatprep.mubr.f32.mxu0 0.0
        %5426 = vmatmul.mubr.f32.gmra.mxu0 %v5326
        %v5427 = vpop.f32.mrf.mxu0
        %v5428 = vadd.f32 0.0, %v5427
        %v5429 = vpop.f32.mrf.mxu0
        %5430 = vmatprep.mubr.f32.mxu0 0.0
        %5431 = vmatmul.mubr.f32.gmra.mxu0 %v5329
        %v5432 = vpop.f32.mrf.mxu0
        %v5433 = vadd.f32 0.0, %v5432
        %v5434 = vpop.f32.mrf.mxu0
        %5435 = vmatprep.mubr.f32.mxu0 0.0
        %5436 = vmatmul.mubr.f32.gmra.mxu0 %v5332
        %v5437 = vpop.f32.mrf.mxu0
        %v5438 = vadd.f32 0.0, %v5437
        %v5439 = vpop.f32.mrf.mxu0
        %5440 = vmatprep.mubr.f32.mxu0 0.0
        %5441 = vmatmul.mubr.f32.gmra.mxu0 %v5335
        %v5442 = vpop.f32.mrf.mxu0
        %v5443 = vadd.f32 0.0, %v5442
        %v5444 = vpop.f32.mrf.mxu0
        %5445 = vmatprep.mubr.f32.mxu0 0.0
        %5446 = vmatmul.mubr.f32.gmra.mxu0 %v5338
        %v5447 = vpop.f32.mrf.mxu0
        %v5448 = vadd.f32 0.0, %v5447
        %v5449 = vpop.f32.mrf.mxu0
        %5450 = vmatprep.mubr.f32.mxu0 0.0
        %5451 = vmatmul.mubr.f32.gmra.mxu0 %v5341
        %v5452 = vpop.f32.mrf.mxu0
        %v5453 = vadd.f32 0.0, %v5452
        %v5454 = vpop.f32.mrf.mxu0
        %5455 = vmatprep.mubr.f32.mxu0 0.0
        %5456 = vmatmul.mubr.f32.gmra.mxu0 %v5344
        %v5457 = vpop.f32.mrf.mxu0
        %v5458 = vadd.f32 0.0, %v5457
        %v5459 = vpop.f32.mrf.mxu0
        %5460 = vmatprep.mubr.f32.mxu0 0.0
        %5461 = vmatmul.mubr.f32.gmra.mxu0 %v5347
        %v5462 = vpop.f32.mrf.mxu0
        %v5463 = vadd.f32 0.0, %v5462
        %v5464 = vpop.f32.mrf.mxu0
        %5465 = vmatprep.mubr.f32.mxu0 0.0
        %5466 = vmatmul.mubr.f32.gmra.mxu0 %v5350
        %v5467 = vpop.f32.mrf.mxu0
        %v5468 = vadd.f32 0.0, %v5467
        %v5469 = vpop.f32.mrf.mxu0
        %5470 = vmatprep.mubr.f32.mxu0 0.0
        %5471 = vmatmul.mubr.f32.gmra.mxu0 %v5353
        %v5472 = vpop.f32.mrf.mxu0
        %v5473 = vadd.f32 0.0, %v5472
        %v5474 = vpop.f32.mrf.mxu0
        %5475 = vmatprep.mubr.f32.mxu0 0.0
        %5476 = vmatmul.mubr.f32.gmra.mxu0 %v5356
        %v5477 = vpop.f32.mrf.mxu0
        %v5478 = vadd.f32 0.0, %v5477
        %v5479 = vpop.f32.mrf.mxu0
        %5480 = vmatprep.mubr.f32.mxu0 0.0
        %5481 = vmatmul.mubr.f32.gmra.mxu0 %v5359
        %v5482 = vpop.f32.mrf.mxu0
        %v5483 = vadd.f32 0.0, %v5482
        %v5484 = vpop.f32.mrf.mxu0
        %5485 = vdwg.mxu0
        %v5486 = vadd.f32 %v5301, %v5428
        %v5487 = vadd.f32 %v5302, %v5433
        %v5488 = vadd.f32 %v5303, %v5438
        %v5489 = vadd.f32 %v5304, %v5443
        %v5490 = vadd.f32 %v5305, %v5448
        %v5491 = vadd.f32 %v5306, %v5453
        %v5492 = vadd.f32 %v5307, %v5458
        %v5493 = vadd.f32 %v5308, %v5463
        %v5494 = vadd.f32 %v5309, %v5468
        %v5495 = vadd.f32 %v5310, %v5473
        %v5496 = vadd.f32 %v5311, %v5478
        %v5497 = vadd.f32 %v5312, %v5483
        %v5498 = vmax.f32 %v5486, 0.0
        %v5499 = vmax.f32 %v5487, 0.0
        %v5500 = vmax.f32 %v5488, 0.0
        %v5501 = vmax.f32 %v5489, 0.0
        %v5502 = vmax.f32 %v5490, 0.0
        %v5503 = vmax.f32 %v5491, 0.0
        %v5504 = vmax.f32 %v5492, 0.0
        %v5505 = vmax.f32 %v5493, 0.0
        %v5506 = vmax.f32 %v5494, 0.0
        %v5507 = vmax.f32 %v5495, 0.0
        %v5508 = vmax.f32 %v5496, 0.0
        %v5509 = vmax.f32 %v5497, 0.0
        %v5510 = vld [vmem:[%s1 + $0xc0] sm:$0xff]
        %v5511 = vld [vmem:[%s1 + $0xc8] sm:$0xff]
        %v5512 = vld [vmem:[%s1 + $0xd0] sm:$0xff]
        %v5513 = vld [vmem:[%s1 + $0xd8] sm:$0xff]
        %v5514 = vld [vmem:[%s1 + $0xe0] sm:$0xff]
        %v5515 = vld [vmem:[%s1 + $0xe8] sm:$0xff]
        %v5516 = vld [vmem:[%s1 + $0xf0] sm:$0xff]
        %v5517 = vld [vmem:[%s1 + $0xf8] sm:$0xff]
        %v5518 = vld [vmem:[%s1 + $0x100] sm:$0xff]
        %v5519 = vld [vmem:[%s1 + $0x108] sm:$0xff]
        %v5520 = vld [vmem:[%s1 + $0x110] sm:$0xff]
        %v5521 = vld [vmem:[%s1 + $0x118] sm:$0xff]
        %5523 = vset.pattern.permute.xlu0 0
        %5524 = vperm.xlu0 %5523, %v5510
        %v5525 = vpop.permute.xlu0 %5524
        %5528 = vset.pattern.permute.xlu0 0
        %5529 = vperm.xlu0 %5528, %v5511
        %v5530 = vpop.permute.xlu0 %5529
        %5533 = vset.pattern.permute.xlu0 0
        %5534 = vperm.xlu0 %5533, %v5512
        %v5535 = vpop.permute.xlu0 %5534
        %5538 = vset.pattern.permute.xlu0 0
        %5539 = vperm.xlu0 %5538, %v5513
        %v5540 = vpop.permute.xlu0 %5539
        %5543 = vset.pattern.permute.xlu0 0
        %5544 = vperm.xlu0 %5543, %v5514
        %v5545 = vpop.permute.xlu0 %5544
        %5548 = vset.pattern.permute.xlu0 0
        %5549 = vperm.xlu0 %5548, %v5515
        %v5550 = vpop.permute.xlu0 %5549
        %5553 = vset.pattern.permute.xlu0 0
        %5554 = vperm.xlu0 %5553, %v5516
        %v5555 = vpop.permute.xlu0 %5554
        %5558 = vset.pattern.permute.xlu0 0
        %5559 = vperm.xlu0 %5558, %v5517
        %v5560 = vpop.permute.xlu0 %5559
        %5563 = vset.pattern.permute.xlu0 0
        %5564 = vperm.xlu0 %5563, %v5518
        %v5565 = vpop.permute.xlu0 %5564
        %5568 = vset.pattern.permute.xlu0 0
        %5569 = vperm.xlu0 %5568, %v5519
        %v5570 = vpop.permute.xlu0 %5569
        %5573 = vset.pattern.permute.xlu0 0
        %5574 = vperm.xlu0 %5573, %v5520
        %v5575 = vpop.permute.xlu0 %5574
        %5578 = vset.pattern.permute.xlu0 0
        %5579 = vperm.xlu0 %5578, %v5521
        %v5580 = vpop.permute.xlu0 %5579
        %v5582 = vmul.f32 %v5498, %v5525
        %v5583 = vmul.f32 %v5499, %v5530
        %v5584 = vmul.f32 %v5500, %v5535
        %v5585 = vmul.f32 %v5501, %v5540
        %v5586 = vmul.f32 %v5502, %v5545
        %v5587 = vmul.f32 %v5503, %v5550
        %v5588 = vmul.f32 %v5504, %v5555
        %v5589 = vmul.f32 %v5505, %v5560
        %v5590 = vmul.f32 %v5506, %v5565
        %v5591 = vmul.f32 %v5507, %v5570
        %v5592 = vmul.f32 %v5508, %v5575
        %v5593 = vmul.f32 %v5509, %v5580
        %v5594 = vadd.f32 %v5582, %v5583
        %v5595 = vadd.f32 %v5594, %v5584
        %v5596 = vadd.f32 %v5595, %v5585
        %v5597 = vadd.f32 %v5596, %v5586
        %v5598 = vadd.f32 %v5597, %v5587
        %v5599 = vadd.f32 %v5598, %v5588
        %v5600 = vadd.f32 %v5599, %v5589
        %v5601 = vadd.f32 %v5600, %v5590
        %v5602 = vadd.f32 %v5601, %v5591
        %v5603 = vadd.f32 %v5602, %v5592
        %v5604 = vadd.f32 %v5603, %v5593
        %v5605 = vrot.slane %v5604, 4
        %v5606 = vadd.f32 %v5604, %v5605
        %v5607 = vrot.slane %v5606, 2
        %v5608 = vadd.f32 %v5606, %v5607
        %v5609 = vrot.slane %v5608, 1
        %v5610 = vadd.f32 %v5608, %v5609
        %v5611 = vadd.f32 %v3832, %v5610
        %v5612 = vld [vmem:[%s4] sm:$0xff]
        %v5613 = vld [vmem:[%s4 + $0x8] sm:$0xff]
        %v5614 = vld [vmem:[%s4 + $0x10] sm:$0xff]
        %v5615 = vld [vmem:[%s4 + $0x18] sm:$0xff]
        %v5616 = vld [vmem:[%s4 + $0x20] sm:$0xff]
        %v5617 = vld [vmem:[%s4 + $0x28] sm:$0xff]
        %v5618 = vld [vmem:[%s4 + $0x30] sm:$0xff]
        %v5619 = vld [vmem:[%s4 + $0x38] sm:$0xff]
        %v5620 = vld [vmem:[%s4 + $0x40] sm:$0xff]
        %v5621 = vld [vmem:[%s4 + $0x48] sm:$0xff]
        %v5622 = vld [vmem:[%s4 + $0x50] sm:$0xff]
        %v5623 = vld [vmem:[%s4 + $0x58] sm:$0xff]
        %v5624 = vld [vmem:[%s4 + $0x60] sm:$0xff]
        %v5625 = vld [vmem:[%s4 + $0x68] sm:$0xff]
        %v5626 = vld [vmem:[%s4 + $0x70] sm:$0xff]
        %v5627 = vld [vmem:[%s4 + $0x78] sm:$0xff]
        %5628 = vmatprep.subr.mxu0 0.0
        %5629 = vmatpush1.msra.mxu0 %v5627
        %5630 = vmatprep.subr.mxu0 0.0
        %5631 = vmatpush1.msra.mxu0 %v5626
        %5632 = vmatprep.subr.mxu0 0.0
        %5633 = vmatpush1.msra.mxu0 %v5625
        %5634 = vmatprep.subr.mxu0 0.0
        %5635 = vmatpush1.msra.mxu0 %v5624
        %5636 = vmatprep.subr.mxu0 0.0
        %5637 = vmatpush1.msra.mxu0 %v5623
        %5638 = vmatprep.subr.mxu0 0.0
        %5639 = vmatpush1.msra.mxu0 %v5622
        %5640 = vmatprep.subr.mxu0 0.0
        %5641 = vmatpush1.msra.mxu0 %v5621
        %5642 = vmatprep.subr.mxu0 0.0
        %5643 = vmatpush1.msra.mxu0 %v5620
        %5644 = vmatprep.subr.mxu0 0.0
        %5645 = vmatpush1.msra.mxu0 %v5619
        %5646 = vmatprep.subr.mxu0 0.0
        %5647 = vmatpush1.msra.mxu0 %v5618
        %5648 = vmatprep.subr.mxu0 0.0
        %5649 = vmatpush1.msra.mxu0 %v5617
        %5650 = vmatprep.subr.mxu0 0.0
        %5651 = vmatpush1.msra.mxu0 %v5616
        %5652 = vmatprep.subr.mxu0 0.0
        %5653 = vmatpush1.msra.mxu0 %v5615
        %5654 = vmatprep.subr.mxu0 0.0
        %5655 = vmatpush1.msra.mxu0 %v5614
        %5656 = vmatprep.subr.mxu0 0.0
        %5657 = vmatpush1.msra.mxu0 %v5613
        %5658 = vmatprep.subr.mxu0 0.0
        %5659 = vmatpush1.msra.mxu0 %v5612
        %5660 = vmatprep.subr.mxu0 0.0
        %5661 = vmatpush2.msra.mxu0 0.0
        %5662 = vmatprep.subr.mxu0 0.0
        %5663 = vmatpush2.msra.mxu0 0.0
        %5664 = vmatprep.subr.mxu0 0.0
        %5665 = vmatpush2.msra.mxu0 0.0
        %5666 = vmatprep.subr.mxu0 0.0
        %5667 = vmatpush2.msra.mxu0 0.0
        %5668 = vmatprep.subr.mxu0 0.0
        %5669 = vmatpush2.msra.mxu0 0.0
        %5670 = vmatprep.subr.mxu0 0.0
        %5671 = vmatpush2.msra.mxu0 0.0
        %5672 = vmatprep.subr.mxu0 0.0
        %5673 = vmatpush2.msra.mxu0 0.0
        %5674 = vmatprep.subr.mxu0 0.0
        %5675 = vmatpush2.msra.mxu0 0.0
        %5676 = vmatprep.subr.mxu0 0.0
        %5677 = vmatpush2.msra.mxu0 0.0
        %5678 = vmatprep.subr.mxu0 0.0
        %5679 = vmatpush2.msra.mxu0 0.0
        %5680 = vmatprep.subr.mxu0 0.0
        %5681 = vmatpush2.msra.mxu0 0.0
        %5682 = vmatprep.subr.mxu0 0.0
        %5683 = vmatpush2.msra.mxu0 0.0
        %5684 = vmatprep.subr.mxu0 0.0
        %5685 = vmatpush2.msra.mxu0 0.0
        %5686 = vmatprep.subr.mxu0 0.0
        %5687 = vmatpush2.msra.mxu0 0.0
        %5688 = vmatprep.subr.mxu0 0.0
        %5689 = vmatpush2.msra.mxu0 0.0
        %5690 = vmatprep.subr.mxu0 0.0
        %5691 = vmatpush2.msra.mxu0 0.0
        %5692 = vmatprep.mubr.f32.mxu0 0.0
        %5693 = vmatmul.mubr.f32.gmra.mxu0 %v5611
        %v5694 = vpop.f32.mrf.mxu0
        %v5695 = vadd.f32 0.0, %v5694
        %v5696 = vpop.f32.mrf.mxu0
        %5697 = vdwg.mxu0
        %5698 = vst [vmem:[%s216] sm:$0x1] %v5695
        %s5699 = sand.u32 %s137, 1
        %s5700 = scalar_lea.sflag [#allocation3], %s5699
        %s5701 = sand.u32 %s137, 1
        %s5702 = scalar_lea.vmem [#allocation2], %s5701
        // Predicated region
        $region41: #{_lambda_.1} parent=39 // pred_check
          %p5703 = pneg %p147
        $region42: #{_lambda_.1} parent=39 // pred_check_branch
          %5705 = sbr.rel (%p5703) target = $region44
        $region43: #{_lambda_.1} parent=39 // pred_region
          %s5707 = ssub.s32 16, 16
          %5708 = vsyncadd %s5700, %s5707
          %s5709 = smul.addr %s19, 16
          %s5710 = scalar_lea.hbm %s5, %s5709
          %s5712 = sshll.u32 %s5702, 4
          %s5713 = int_to_ptr.vmem [resolvable:$true] %s5712
          %5715 = dma.vmem_to_hbm [thread:$0]  %s5713, 16, %s5710, %s5700
        $region44: #{_lambda_.1} parent=39 // pred_fallthru
          _
      $region40: #{_lambda_.1} parent=5 // pred_fallthru
        _
      %p5716 = scmp.le.s32.totalorder 2, %s14
      // Predicated region
      $region45: #{_lambda_.1} parent=5 // pred_check
        %p5717 = pneg %p5716
      $region46: #{_lambda_.1} parent=5 // pred_check_branch
        %5719 = sbr.rel (%p5717) target = $region48
      $region47: #{_lambda_.1} parent=5 // pred_region
        %s5720 = ssub.s32 %s14, 2
        // Predicated region
        $region49: #{_lambda_.1} parent=47 // pred_check
          %p5721 = pneg %p153
        $region50: #{_lambda_.1} parent=47 // pred_check_branch
          %5723 = sbr.rel (%p5721) target = $region52
        $region51: #{_lambda_.1} parent=47 // pred_region
          %s5724 = sand.u32 %s138, 1
          %s5725 = scalar_lea.sflag [#allocation3], %s5724
          %s5726 = sand.u32 %s138, 1
          %s5727 = scalar_lea.vmem [#allocation2], %s5726
          %5728 = dma.done %s5725, 16
        $region52: #{_lambda_.1} parent=47 // pred_fallthru
          _
      $region48: #{_lambda_.1} parent=5 // pred_fallthru
        _
    $region6: #{_lambda_.1} parent=1 // loop_footer
      %s18 = sadd.s32 1, %s14
    $region7: #{_lambda_.1} parent=1 // loop_footer_branch
      %13 = sbr.rel target = $region3
    $region8: #{_lambda_.1} parent=1 // loop_exit
      _
    %5729 = vsyncpa [#allocation3], 1
    %s5730 = scalar_lea.sflag [#allocation3], 1
    %5731 = vsyncpa %s5730, 1

</llo_original>
